<compile_context>
chip_gen: v5e
topology: v5e:2x2
jax: 0.10.0
libtpu: 0.0.40
codegen_flags: <defaults>
</compile_context>

<pallas_src>
import functools

import jax
import jax.numpy as jnp
from jax.experimental import pallas as pl
from jax.experimental.pallas import tpu as pltpu


_VMEM = pl.BlockSpec(memory_space=pltpu.MemorySpace.VMEM)

N_ENC_LAYERS = 3    # int(log2(16)) - 2, clamped to [3, 5]
INITIAL_SIZE = 2    # max(2, 16 // 2**3)
BN_EPS = 1e-5
LRELU_SLOPE = 0.2


# ----------------------- fused layer math (shared) --------------------------
# Shared by the Pallas kernel and the pure-JAX reference path, so the in-script
# self-check only exercises the Pallas execution itself.

def _fused_math(w, p, b, gamma, beta, eps, *, bn, act, z_dim):
    """[C_out,K] @ [K,M] + bias, optional BatchNorm (batch stats over M),
    optional LeakyReLU/Tanh, optional reparametrization mu + eps*exp(.5*lv)."""
    acc = jnp.dot(w, p, preferred_element_type=jnp.float32) + b
    if bn:
        mean = jnp.mean(acc, axis=1, keepdims=True)
        var = jnp.mean(jnp.square(acc - mean), axis=1, keepdims=True)
        acc = (acc - mean) * jax.lax.rsqrt(var + BN_EPS)
        acc = acc * gamma + beta
    if act == "leaky_relu":
        acc = jnp.where(acc > 0, acc, LRELU_SLOPE * acc)
    elif act == "tanh":
        acc = jnp.tanh(acc)
    if z_dim is not None:                       # fused reparametrization
        mu, log_var = acc[:z_dim, :], acc[z_dim:, :]
        acc = mu + eps * jnp.exp(0.5 * log_var)
    return acc


def _fused_kernel(*refs, bn, act, z_dim):
    # refs: w [C_out,K], patches [K,M], bias [C_out,1],
    #       (gamma [C_out,1], beta [C_out,1])?, (eps [z_dim,M])?, out
    w, p, b = refs[0][...], refs[1][...], refs[2][...]
    i = 3
    gamma = beta = eps = None
    if bn:
        gamma, beta = refs[3][...], refs[4][...]
        i = 5
    if z_dim is not None:
        eps = refs[i][...]
        i += 1
    o_ref = refs[i]
    o_ref[...] = _fused_math(w, p, b, gamma, beta, eps,
                             bn=bn, act=act, z_dim=z_dim)


def fused_layer(w_t, patches_t, bias, gamma=None, beta=None, eps=None,
                bn=False, act="none", reparam_z=None, use_pallas=True):
    """One conv layer as a transposed GEMM with a fused epilogue.

    w_t:       [C_out, K]   (K = KH*KW*C_in, channels-last tap order)
    patches_t: [K, M]       (M = N*OH*OW on the lane axis -> lane-dense store)
    returns    [C_out, M]   (or [z_dim, M] when reparam_z is set)
    """
    C_out, _ = w_t.shape
    _, M = patches_t.shape
    f32 = lambda a: a.astype(jnp.float32)
    args = [f32(w_t), f32(patches_t), f32(bias).reshape(C_out, 1)]
    if bn:
        args += [f32(gamma).reshape(C_out, 1), f32(beta).reshape(C_out, 1)]
    if reparam_z is not None:
        args.append(f32(eps))                    # [z_dim, M]
    out_rows = C_out if reparam_z is None else reparam_z

    if not use_pallas:                           # pure-JAX reference path
        g = args[3] if bn else None
        be = args[4] if bn else None
        ep = args[-1] if reparam_z is not None else None
        return _fused_math(args[0], args[1], args[2], g, be, ep,
                           bn=bn, act=act, z_dim=reparam_z)

    kern = functools.partial(_fused_kernel, bn=bn, act=act, z_dim=reparam_z)
    # Entire layer (<1 MiB) fits in VMEM, so one un-gridded call is optimal.
    # TODO(synk): when scaling batch, add a grid over M with >=512-wide blocks
    # marked "parallel" (v7x megacore / 64 MiB VMEM budget) and switch matmul
    # operands to bf16 (keep the BN/LReLU/tanh epilogue in f32 for v5e).
    return pl.pallas_call(
        kern,
        out_shape=jax.ShapeDtypeStruct((out_rows, M), jnp.float32),
        in_specs=[_VMEM] * len(args),
        out_specs=_VMEM,
    )(*args)


# ------------------------------ JAX glue ops --------------------------------

def _im2col_nhwc(x, kh, kw, stride, padding):
    """x: [N,H,W,C] -> patches^T [KH*KW*C, N*OH*OW] (tap order KH, KW, C)."""
    N, H, W, C = x.shape
    xp = jnp.pad(x, ((0, 0), (padding, padding), (padding, padding), (0, 0)))
    OH = (H + 2 * padding - kh) // stride + 1
    OW = (W + 2 * padding - kw) // stride + 1
    taps = []
    for ki in range(kh):
        for kj in range(kw):
            taps.append(xp[:, ki:ki + stride * (OH - 1) + 1:stride,
                              kj:kj + stride * (OW - 1) + 1:stride, :])  # [N,OH,OW,C]
    p = jnp.stack(taps, axis=0).reshape(kh, kw, N, OH, OW, C)
    p = p.transpose(2, 3, 4, 0, 1, 5).reshape(N * OH * OW, kh * kw * C)
    return p.T, OH, OW


def conv2d(x, w, bias, stride, padding, **fused_kwargs):
    """PyTorch-style Conv2d on NHWC input. w: [C_out, C_in, KH, KW]."""
    C_out, C_in, kh, kw = w.shape
    pt, OH, OW = _im2col_nhwc(x, kh, kw, stride, padding)
    w_t = w.transpose(0, 2, 3, 1).reshape(C_out, kh * kw * C_in)  # (KH,KW,C) order
    b = bias if bias is not None else jnp.zeros((C_out,), jnp.float32)
    out_cm = fused_layer(w_t, pt, b, **fused_kwargs)    # [rows, N*OH*OW]
    N = x.shape[0]
    rows = out_cm.shape[0]
    return out_cm.T.reshape(N, OH, OW, rows)            # NHWC


def conv_transpose2d(x, w, bias, stride, padding, **fused_kwargs):
    """PyTorch-style ConvTranspose2d on NHWC input. w: [C_in, C_out, KH, KW]."""
    C_in, C_out, kh, kw = w.shape
    N, H, W, _ = x.shape
    if stride > 1:  # zero-dilate the input
        # TODO(synk): switch to the 4-phase subpixel decomposition for the
        # stride-2 k=4 layers once feature maps are large (avoids 75% zero MACs).
        Hd, Wd = (H - 1) * stride + 1, (W - 1) * stride + 1
        xd = jnp.zeros((N, Hd, Wd, C_in), x.dtype)
        xd = xd.at[:, ::stride, ::stride, :].set(x)
    else:
        xd = x
    w_eq = jnp.flip(w, axis=(2, 3)).transpose(1, 0, 2, 3)  # [C_out, C_in, KH, KW]
    pad = kh - 1 - padding
    return conv2d(xd, w_eq, bias, stride=1, padding=pad, **fused_kwargs)


# ------------------------------ model setup ---------------------------------

def init_params(key, z_dim, in_ch, fm):
    ks = iter(jax.random.split(key, 32))

    def w(shape, scale=0.05):
        return scale * jax.random.normal(next(ks), shape, jnp.float32)

    p = {}
    c = in_ch
    for i in range(N_ENC_LAYERS):
        oc = fm * 2 ** i
        p[f"e{i}_w"] = w((oc, c, 4, 4))
        if i > 0:  # BatchNorm init: gamma=1, beta=0 (PyTorch default)
            p[f"e{i}_g"] = jnp.ones((oc,), jnp.float32)
            p[f"e{i}_b"] = jnp.zeros((oc,), jnp.float32)
        c = oc
    p["e3_w"] = w((512, c, 3, 3))
    p["e3_g"] = jnp.ones((512,), jnp.float32)
    p["e3_b"] = jnp.zeros((512,), jnp.float32)
    p["e4_w"] = w((2 * z_dim, 512, INITIAL_SIZE, INITIAL_SIZE))
    p["e4_bias"] = w((2 * z_dim,), 0.01)

    oc = fm * 2 ** (N_ENC_LAYERS - 1)
    p["d0_w"] = w((z_dim, oc, INITIAL_SIZE, INITIAL_SIZE))  # ConvT weight [in,out,k,k]
    p["d0_g"] = jnp.ones((oc,), jnp.float32)
    p["d0_b"] = jnp.zeros((oc,), jnp.float32)
    idx = 1
    for i in range(N_ENC_LAYERS - 1, 0, -1):
        ic, oc = fm * 2 ** i, fm * 2 ** (i - 1)
        p[f"d{idx}_w"] = w((ic, oc, 4, 4))
        p[f"d{idx}_g"] = jnp.ones((oc,), jnp.float32)
        p[f"d{idx}_b"] = jnp.zeros((oc,), jnp.float32)
        idx += 1
    p[f"d{idx}_w"] = w((fm, in_ch, 4, 4))
    p[f"d{idx}_bias"] = w((in_ch,), 0.01)
    return p


@functools.partial(jax.jit, static_argnames=("z_dim", "use_pallas"))
def generator_forward(params, x_nchw, eps, z_dim, use_pallas=True):
    up = dict(use_pallas=use_pallas)
    x = x_nchw.transpose(0, 2, 3, 1)       # NHWC once, at the host boundary
    N = x.shape[0]

    # ----- encoder (x -> z) -----
    h = conv2d(x, params["e0_w"], None, 2, 1, act="leaky_relu", **up)  # Identity+LReLU
    for i in range(1, N_ENC_LAYERS):
        h = conv2d(h, params[f"e{i}_w"], None, 2, 1, bn=True, act="leaky_relu",
                   gamma=params[f"e{i}_g"], beta=params[f"e{i}_b"], **up)
    h = conv2d(h, params["e3_w"], None, 1, 1, bn=True, act="leaky_relu",
               gamma=params["e3_g"], beta=params["e3_b"], **up)
    # final encoder conv (bias) + reparametrization fused into one kernel
    z_nhwc = conv2d(h, params["e4_w"], params["e4_bias"], 1, 0,
                    eps=eps.T, reparam_z=z_dim, **up)          # [N, 1, 1, z_dim]

    # ----- decoder (z -> x) -----
    d = conv_transpose2d(z_nhwc, params["d0_w"], None, 1, 0, bn=True,
                         act="leaky_relu", gamma=params["d0_g"],
                         beta=params["d0_b"], **up)
    d = conv_transpose2d(d, params["d1_w"], None, 2, 1, bn=True,
                         act="leaky_relu", gamma=params["d1_g"],
                         beta=params["d1_b"], **up)
    d = conv_transpose2d(d, params["d2_w"], None, 2, 1, bn=True,
                         act="leaky_relu", gamma=params["d2_g"],
                         beta=params["d2_b"], **up)
    x_rec = conv_transpose2d(d, params["d3_w"], params["d3_bias"], 2, 1,
                             act="tanh", **up)

    x_rec = x_rec.transpose(0, 3, 1, 2)                        # back to NCHW
    z = z_nhwc.transpose(0, 3, 1, 2)                           # [N, z_dim, 1, 1]
    return x_rec, z


# --------------------------------- main --------------------------------------

if __name__ == "__main__":
    Z_DIM, IN_CH, IMG, FM = 8, 1, 16, 4
    BATCH = 2

    key = jax.random.PRNGKey(0)
    kx, keps, kp = jax.random.split(key, 3)

    x = jax.random.normal(kx, (BATCH, IN_CH, IMG, IMG), jnp.float32)
    # epsilon for the reparametrization trick (torch.randn_like equivalent)
    eps = jax.random.normal(keps, (BATCH, Z_DIM), jnp.float32)
    params = init_params(kp, Z_DIM, IN_CH, FM)

    x_rec, z = generator_forward(params, x, eps, z_dim=Z_DIM, use_pallas=True)
    (x_rec, z) = jax.block_until_ready((x_rec, z))

    assert x_rec.shape == (BATCH, IN_CH, IMG, IMG), x_rec.shape
    assert z.shape == (BATCH, Z_DIM, 1, 1), z.shape
    assert bool(jnp.all(jnp.isfinite(x_rec))) and bool(jnp.all(jnp.isfinite(z)))
    assert bool(jnp.all(jnp.abs(x_rec) <= 1.0))   # tanh output range

    # Self-check: identical math through plain XLA (same glue + _fused_math);
    # only the Pallas execution of the fused GEMM/epilogue differs.
    x_ref, z_ref = generator_forward(params, x, eps, z_dim=Z_DIM, use_pallas=False)
    (x_ref, z_ref) = jax.block_until_ready((x_ref, z_ref))
    assert bool(jnp.allclose(x_rec, x_ref, atol=0.1, rtol=0.0)), \
        float(jnp.max(jnp.abs(x_rec - x_ref)))
    assert bool(jnp.allclose(z, z_ref, atol=0.1, rtol=0.0)), \
        float(jnp.max(jnp.abs(z - z_ref)))

    print("KERNEL_OK")
</pallas_src>

<mosaic_0001>
module attributes {stable_mosaic.version = 11 : i64} {
  func.func @_fused_kernel(%arg0: memref<4x16xf32, #tpu.memory_space<vmem>>, %arg1: memref<16x128xf32, #tpu.memory_space<vmem>>, %arg2: memref<4x1xf32, #tpu.memory_space<vmem>>, %arg3: memref<4x128xf32, #tpu.memory_space<vmem>>) attributes {dimension_semantics = [], scalar_prefetch = 0 : i64, scratch_operands = 0 : i64, tpu.core_type = #tpu.core_type<tc>} {
    %c0 = arith.constant 0 : index
    %c0_0 = arith.constant 0 : index
    %0 = vector.load %arg0[%c0, %c0_0] : memref<4x16xf32, #tpu.memory_space<vmem>>, vector<4x16xf32>
    %c0_1 = arith.constant 0 : index
    %c0_2 = arith.constant 0 : index
    %1 = vector.load %arg1[%c0_1, %c0_2] : memref<16x128xf32, #tpu.memory_space<vmem>>, vector<16x128xf32>
    %c0_3 = arith.constant 0 : index
    %c0_4 = arith.constant 0 : index
    %2 = vector.load %arg2[%c0_3, %c0_4] : memref<4x1xf32, #tpu.memory_space<vmem>>, vector<4x1xf32>
    %cst = arith.constant dense<0.000000e+00> : vector<4x128xf32>
    %3 = tpu.matmul %0, %1, %cst {dimension_numbers = #tpu.dot_dimension_numbers<[1], [0], [0], [1], [0, 0, 1, 1], [], []>} : vector<4x16xf32>, vector<16x128xf32>, vector<4x128xf32> -> vector<4x128xf32>
    %4 = vector.broadcast %2 : vector<4x1xf32> to vector<4x128xf32>
    %5 = arith.addf %3, %4 : vector<4x128xf32>
    %cst_5 = arith.constant 0.000000e+00 : f32
    %6 = vector.broadcast %cst_5 : f32 to vector<4x128xf32>
    %7 = arith.cmpf ogt, %5, %6 : vector<4x128xf32>
    %cst_6 = arith.constant 2.000000e-01 : f32
    %8 = vector.broadcast %cst_6 : f32 to vector<4x128xf32>
    %9 = arith.mulf %8, %5 : vector<4x128xf32>
    %10 = arith.select %7, %5, %9 : vector<4x128xi1>, vector<4x128xf32>
    %c0_7 = arith.constant 0 : index
    %c0_8 = arith.constant 0 : index
    %11 = vector.load %arg3[%c0_7, %c0_8] : memref<4x128xf32, #tpu.memory_space<vmem>>, vector<4x128xf32>
    tpu.vector_store %arg3[%c0_7, %c0_8], %10 {strides = array<i32>} : memref<4x128xf32, #tpu.memory_space<vmem>>, vector<4x128xf32>,
    return
  }
}

module attributes {stable_mosaic.version = 11 : i64} {
  func.func @_fused_kernel(%arg0: memref<8x64xf32, #tpu.memory_space<vmem>>, %arg1: memref<64x32xf32, #tpu.memory_space<vmem>>, %arg2: memref<8x1xf32, #tpu.memory_space<vmem>>, %arg3: memref<8x1xf32, #tpu.memory_space<vmem>>, %arg4: memref<8x1xf32, #tpu.memory_space<vmem>>, %arg5: memref<8x32xf32, #tpu.memory_space<vmem>>) attributes {dimension_semantics = [], scalar_prefetch = 0 : i64, scratch_operands = 0 : i64, tpu.core_type = #tpu.core_type<tc>} {
    %c0 = arith.constant 0 : index
    %c0_0 = arith.constant 0 : index
    %0 = vector.load %arg0[%c0, %c0_0] : memref<8x64xf32, #tpu.memory_space<vmem>>, vector<8x64xf32>
    %c0_1 = arith.constant 0 : index
    %c0_2 = arith.constant 0 : index
    %1 = vector.load %arg1[%c0_1, %c0_2] : memref<64x32xf32, #tpu.memory_space<vmem>>, vector<64x32xf32>
    %c0_3 = arith.constant 0 : index
    %c0_4 = arith.constant 0 : index
    %2 = vector.load %arg2[%c0_3, %c0_4] : memref<8x1xf32, #tpu.memory_space<vmem>>, vector<8x1xf32>
    %c0_5 = arith.constant 0 : index
    %c0_6 = arith.constant 0 : index
    %3 = vector.load %arg3[%c0_5, %c0_6] : memref<8x1xf32, #tpu.memory_space<vmem>>, vector<8x1xf32>
    %c0_7 = arith.constant 0 : index
    %c0_8 = arith.constant 0 : index
    %4 = vector.load %arg4[%c0_7, %c0_8] : memref<8x1xf32, #tpu.memory_space<vmem>>, vector<8x1xf32>
    %cst = arith.constant dense<0.000000e+00> : vector<8x32xf32>
    %5 = tpu.matmul %0, %1, %cst {dimension_numbers = #tpu.dot_dimension_numbers<[1], [0], [0], [1], [0, 0, 1, 1], [], []>} : vector<8x64xf32>, vector<64x32xf32>, vector<8x32xf32> -> vector<8x32xf32>
    %6 = vector.broadcast %2 : vector<8x1xf32> to vector<8x32xf32>
    %7 = arith.addf %5, %6 : vector<8x32xf32>
    %cst_9 = arith.constant dense<0.000000e+00> : vector<8xf32>
    %8 = vector.multi_reduction <add>, %7, %cst_9 [1] : vector<8x32xf32> to vector<8xf32>
    %9 = vector.shape_cast %8 : vector<8xf32> to vector<8x1xf32>
    %cst_10 = arith.constant 3.200000e+01 : f32
    %10 = vector.broadcast %cst_10 : f32 to vector<8x1xf32>
    %11 = arith.divf %9, %10 : vector<8x1xf32>
    %12 = vector.broadcast %11 : vector<8x1xf32> to vector<8x32xf32>
    %13 = arith.subf %7, %12 : vector<8x32xf32>
    %14 = arith.mulf %13, %13 : vector<8x32xf32>
    %cst_11 = arith.constant dense<0.000000e+00> : vector<8xf32>
    %15 = vector.multi_reduction <add>, %14, %cst_11 [1] : vector<8x32xf32> to vector<8xf32>
    %16 = vector.shape_cast %15 : vector<8xf32> to vector<8x1xf32>
    %cst_12 = arith.constant 3.200000e+01 : f32
    %17 = vector.broadcast %cst_12 : f32 to vector<8x1xf32>
    %18 = arith.divf %16, %17 : vector<8x1xf32>
    %19 = vector.broadcast %11 : vector<8x1xf32> to vector<8x32xf32>
    %20 = arith.subf %7, %19 : vector<8x32xf32>
    %cst_13 = arith.constant 9.99999974E-6 : f32
    %21 = vector.broadcast %cst_13 : f32 to vector<8x1xf32>
    %22 = arith.addf %18, %21 : vector<8x1xf32>
    %23 = math.rsqrt %22 : vector<8x1xf32>
    %24 = vector.broadcast %23 : vector<8x1xf32> to vector<8x32xf32>
    %25 = arith.mulf %20, %24 : vector<8x32xf32>
    %26 = vector.broadcast %3 : vector<8x1xf32> to vector<8x32xf32>
    %27 = arith.mulf %25, %26 : vector<8x32xf32>
    %28 = vector.broadcast %4 : vector<8x1xf32> to vector<8x32xf32>
    %29 = arith.addf %27, %28 : vector<8x32xf32>
    %cst_14 = arith.constant 0.000000e+00 : f32
    %30 = vector.broadcast %cst_14 : f32 to vector<8x32xf32>
    %31 = arith.cmpf ogt, %29, %30 : vector<8x32xf32>
    %cst_15 = arith.constant 2.000000e-01 : f32
    %32 = vector.broadcast %cst_15 : f32 to vector<8x32xf32>
    %33 = arith.mulf %32, %29 : vector<8x32xf32>
    %34 = arith.select %31, %29, %33 : vector<8x32xi1>, vector<8x32xf32>
    %c0_16 = arith.constant 0 : index
    %c0_17 = arith.constant 0 : index
    %35 = vector.load %arg5[%c0_16, %c0_17] : memref<8x32xf32, #tpu.memory_space<vmem>>, vector<8x32xf32>
    tpu.vector_store %arg5[%c0_16, %c0_17], %34 {strides = array<i32>} : memref<8x32xf32, #tpu.memory_space<vmem>>, vector<8x32xf32>,
    return
  }
}

module attributes {stable_mosaic.version = 11 : i64} {
  func.func @_fused_kernel(%arg0: memref<16x128xf32, #tpu.memory_space<vmem>>, %arg1: memref<128x8xf32, #tpu.memory_space<vmem>>, %arg2: memref<16x1xf32, #tpu.memory_space<vmem>>, %arg3: memref<16x1xf32, #tpu.memory_space<vmem>>, %arg4: memref<16x1xf32, #tpu.memory_space<vmem>>, %arg5: memref<16x8xf32, #tpu.memory_space<vmem>>) attributes {dimension_semantics = [], scalar_prefetch = 0 : i64, scratch_operands = 0 : i64, tpu.core_type = #tpu.core_type<tc>} {
    %c0 = arith.constant 0 : index
    %c0_0 = arith.constant 0 : index
    %0 = vector.load %arg0[%c0, %c0_0] : memref<16x128xf32, #tpu.memory_space<vmem>>, vector<16x128xf32>
    %c0_1 = arith.constant 0 : index
    %c0_2 = arith.constant 0 : index
    %1 = vector.load %arg1[%c0_1, %c0_2] : memref<128x8xf32, #tpu.memory_space<vmem>>, vector<128x8xf32>
    %c0_3 = arith.constant 0 : index
    %c0_4 = arith.constant 0 : index
    %2 = vector.load %arg2[%c0_3, %c0_4] : memref<16x1xf32, #tpu.memory_space<vmem>>, vector<16x1xf32>
    %c0_5 = arith.constant 0 : index
    %c0_6 = arith.constant 0 : index
    %3 = vector.load %arg3[%c0_5, %c0_6] : memref<16x1xf32, #tpu.memory_space<vmem>>, vector<16x1xf32>
    %c0_7 = arith.constant 0 : index
    %c0_8 = arith.constant 0 : index
    %4 = vector.load %arg4[%c0_7, %c0_8] : memref<16x1xf32, #tpu.memory_space<vmem>>, vector<16x1xf32>
    %cst = arith.constant dense<0.000000e+00> : vector<16x8xf32>
    %5 = tpu.matmul %0, %1, %cst {dimension_numbers = #tpu.dot_dimension_numbers<[1], [0], [0], [1], [0, 0, 1, 1], [], []>} : vector<16x128xf32>, vector<128x8xf32>, vector<16x8xf32> -> vector<16x8xf32>
    %6 = vector.broadcast %2 : vector<16x1xf32> to vector<16x8xf32>
    %7 = arith.addf %5, %6 : vector<16x8xf32>
    %cst_9 = arith.constant dense<0.000000e+00> : vector<16xf32>
    %8 = vector.multi_reduction <add>, %7, %cst_9 [1] : vector<16x8xf32> to vector<16xf32>
    %9 = vector.shape_cast %8 : vector<16xf32> to vector<16x1xf32>
    %cst_10 = arith.constant 8.000000e+00 : f32
    %10 = vector.broadcast %cst_10 : f32 to vector<16x1xf32>
    %11 = arith.divf %9, %10 : vector<16x1xf32>
    %12 = vector.broadcast %11 : vector<16x1xf32> to vector<16x8xf32>
    %13 = arith.subf %7, %12 : vector<16x8xf32>
    %14 = arith.mulf %13, %13 : vector<16x8xf32>
    %cst_11 = arith.constant dense<0.000000e+00> : vector<16xf32>
    %15 = vector.multi_reduction <add>, %14, %cst_11 [1] : vector<16x8xf32> to vector<16xf32>
    %16 = vector.shape_cast %15 : vector<16xf32> to vector<16x1xf32>
    %cst_12 = arith.constant 8.000000e+00 : f32
    %17 = vector.broadcast %cst_12 : f32 to vector<16x1xf32>
    %18 = arith.divf %16, %17 : vector<16x1xf32>
    %19 = vector.broadcast %11 : vector<16x1xf32> to vector<16x8xf32>
    %20 = arith.subf %7, %19 : vector<16x8xf32>
    %cst_13 = arith.constant 9.99999974E-6 : f32
    %21 = vector.broadcast %cst_13 : f32 to vector<16x1xf32>
    %22 = arith.addf %18, %21 : vector<16x1xf32>
    %23 = math.rsqrt %22 : vector<16x1xf32>
    %24 = vector.broadcast %23 : vector<16x1xf32> to vector<16x8xf32>
    %25 = arith.mulf %20, %24 : vector<16x8xf32>
    %26 = vector.broadcast %3 : vector<16x1xf32> to vector<16x8xf32>
    %27 = arith.mulf %25, %26 : vector<16x8xf32>
    %28 = vector.broadcast %4 : vector<16x1xf32> to vector<16x8xf32>
    %29 = arith.addf %27, %28 : vector<16x8xf32>
    %cst_14 = arith.constant 0.000000e+00 : f32
    %30 = vector.broadcast %cst_14 : f32 to vector<16x8xf32>
    %31 = arith.cmpf ogt, %29, %30 : vector<16x8xf32>
    %cst_15 = arith.constant 2.000000e-01 : f32
    %32 = vector.broadcast %cst_15 : f32 to vector<16x8xf32>
    %33 = arith.mulf %32, %29 : vector<16x8xf32>
    %34 = arith.select %31, %29, %33 : vector<16x8xi1>, vector<16x8xf32>
    %c0_16 = arith.constant 0 : index
    %c0_17 = arith.constant 0 : index
    %35 = vector.load %arg5[%c0_16, %c0_17] : memref<16x8xf32, #tpu.memory_space<vmem>>, vector<16x8xf32>
    tpu.vector_store %arg5[%c0_16, %c0_17], %34 {strides = array<i32>} : memref<16x8xf32, #tpu.memory_space<vmem>>, vector<16x8xf32>,
    return
  }
}

module attributes {stable_mosaic.version = 11 : i64} {
  func.func @_fused_kernel(%arg0: memref<512x144xf32, #tpu.memory_space<vmem>>, %arg1: memref<144x8xf32, #tpu.memory_space<vmem>>, %arg2: memref<512x1xf32, #tpu.memory_space<vmem>>, %arg3: memref<512x1xf32, #tpu.memory_space<vmem>>, %arg4: memref<512x1xf32, #tpu.memory_space<vmem>>, %arg5: memref<512x8xf32, #tpu.memory_space<vmem>>) attributes {dimension_semantics = [], scalar_prefetch = 0 : i64, scratch_operands = 0 : i64, tpu.core_type = #tpu.core_type<tc>} {
    %c0 = arith.constant 0 : index
    %c0_0 = arith.constant 0 : index
    %0 = vector.load %arg0[%c0, %c0_0] : memref<512x144xf32, #tpu.memory_space<vmem>>, vector<512x144xf32>
    %c0_1 = arith.constant 0 : index
    %c0_2 = arith.constant 0 : index
    %1 = vector.load %arg1[%c0_1, %c0_2] : memref<144x8xf32, #tpu.memory_space<vmem>>, vector<144x8xf32>
    %c0_3 = arith.constant 0 : index
    %c0_4 = arith.constant 0 : index
    %2 = vector.load %arg2[%c0_3, %c0_4] : memref<512x1xf32, #tpu.memory_space<vmem>>, vector<512x1xf32>
    %c0_5 = arith.constant 0 : index
    %c0_6 = arith.constant 0 : index
    %3 = vector.load %arg3[%c0_5, %c0_6] : memref<512x1xf32, #tpu.memory_space<vmem>>, vector<512x1xf32>
    %c0_7 = arith.constant 0 : index
    %c0_8 = arith.constant 0 : index
    %4 = vector.load %arg4[%c0_7, %c0_8] : memref<512x1xf32, #tpu.memory_space<vmem>>, vector<512x1xf32>
    %cst = arith.constant dense<0.000000e+00> : vector<512x8xf32>
    %5 = tpu.matmul %0, %1, %cst {dimension_numbers = #tpu.dot_dimension_numbers<[1], [0], [0], [1], [0, 0, 1, 1], [], []>} : vector<512x144xf32>, vector<144x8xf32>, vector<512x8xf32> -> vector<512x8xf32>
    %6 = vector.broadcast %2 : vector<512x1xf32> to vector<512x8xf32>
    %7 = arith.addf %5, %6 : vector<512x8xf32>
    %cst_9 = arith.constant dense<0.000000e+00> : vector<512xf32>
    %8 = vector.multi_reduction <add>, %7, %cst_9 [1] : vector<512x8xf32> to vector<512xf32>
    %9 = vector.shape_cast %8 : vector<512xf32> to vector<512x1xf32>
    %cst_10 = arith.constant 8.000000e+00 : f32
    %10 = vector.broadcast %cst_10 : f32 to vector<512x1xf32>
    %11 = arith.divf %9, %10 : vector<512x1xf32>
    %12 = vector.broadcast %11 : vector<512x1xf32> to vector<512x8xf32>
    %13 = arith.subf %7, %12 : vector<512x8xf32>
    %14 = arith.mulf %13, %13 : vector<512x8xf32>
    %cst_11 = arith.constant dense<0.000000e+00> : vector<512xf32>
    %15 = vector.multi_reduction <add>, %14, %cst_11 [1] : vector<512x8xf32> to vector<512xf32>
    %16 = vector.shape_cast %15 : vector<512xf32> to vector<512x1xf32>
    %cst_12 = arith.constant 8.000000e+00 : f32
    %17 = vector.broadcast %cst_12 : f32 to vector<512x1xf32>
    %18 = arith.divf %16, %17 : vector<512x1xf32>
    %19 = vector.broadcast %11 : vector<512x1xf32> to vector<512x8xf32>
    %20 = arith.subf %7, %19 : vector<512x8xf32>
    %cst_13 = arith.constant 9.99999974E-6 : f32
    %21 = vector.broadcast %cst_13 : f32 to vector<512x1xf32>
    %22 = arith.addf %18, %21 : vector<512x1xf32>
    %23 = math.rsqrt %22 : vector<512x1xf32>
    %24 = vector.broadcast %23 : vector<512x1xf32> to vector<512x8xf32>
    %25 = arith.mulf %20, %24 : vector<512x8xf32>
    %26 = vector.broadcast %3 : vector<512x1xf32> to vector<512x8xf32>
    %27 = arith.mulf %25, %26 : vector<512x8xf32>
    %28 = vector.broadcast %4 : vector<512x1xf32> to vector<512x8xf32>
    %29 = arith.addf %27, %28 : vector<512x8xf32>
    %cst_14 = arith.constant 0.000000e+00 : f32
    %30 = vector.broadcast %cst_14 : f32 to vector<512x8xf32>
    %31 = arith.cmpf ogt, %29, %30 : vector<512x8xf32>
    %cst_15 = arith.constant 2.000000e-01 : f32
    %32 = vector.broadcast %cst_15 : f32 to vector<512x8xf32>
    %33 = arith.mulf %32, %29 : vector<512x8xf32>
    %34 = arith.select %31, %29, %33 : vector<512x8xi1>, vector<512x8xf32>
    %c0_16 = arith.constant 0 : index
    %c0_17 = arith.constant 0 : index
    %35 = vector.load %arg5[%c0_16, %c0_17] : memref<512x8xf32, #tpu.memory_space<vmem>>, vector<512x8xf32>
    tpu.vector_store %arg5[%c0_16, %c0_17], %34 {strides = array<i32>} : memref<512x8xf32, #tpu.memory_space<vmem>>, vector<512x8xf32>,
    return
  }
}

module attributes {stable_mosaic.version = 11 : i64} {
  func.func @_fused_kernel(%arg0: memref<16x2048xf32, #tpu.memory_space<vmem>>, %arg1: memref<2048x2xf32, #tpu.memory_space<vmem>>, %arg2: memref<16x1xf32, #tpu.memory_space<vmem>>, %arg3: memref<8x2xf32, #tpu.memory_space<vmem>>, %arg4: memref<8x2xf32, #tpu.memory_space<vmem>>) attributes {dimension_semantics = [], scalar_prefetch = 0 : i64, scratch_operands = 0 : i64, tpu.core_type = #tpu.core_type<tc>} {
    %c0 = arith.constant 0 : index
    %c0_0 = arith.constant 0 : index
    %0 = vector.load %arg0[%c0, %c0_0] : memref<16x2048xf32, #tpu.memory_space<vmem>>, vector<16x2048xf32>
    %c0_1 = arith.constant 0 : index
    %c0_2 = arith.constant 0 : index
    %1 = vector.load %arg1[%c0_1, %c0_2] : memref<2048x2xf32, #tpu.memory_space<vmem>>, vector<2048x2xf32>
    %c0_3 = arith.constant 0 : index
    %c0_4 = arith.constant 0 : index
    %2 = vector.load %arg2[%c0_3, %c0_4] : memref<16x1xf32, #tpu.memory_space<vmem>>, vector<16x1xf32>
    %c0_5 = arith.constant 0 : index
    %c0_6 = arith.constant 0 : index
    %3 = vector.load %arg3[%c0_5, %c0_6] : memref<8x2xf32, #tpu.memory_space<vmem>>, vector<8x2xf32>
    %cst = arith.constant dense<0.000000e+00> : vector<16x2xf32>
    %4 = tpu.matmul %0, %1, %cst {dimension_numbers = #tpu.dot_dimension_numbers<[1], [0], [0], [1], [0, 0, 1, 1], [], []>} : vector<16x2048xf32>, vector<2048x2xf32>, vector<16x2xf32> -> vector<16x2xf32>
    %5 = vector.broadcast %2 : vector<16x1xf32> to vector<16x2xf32>
    %6 = arith.addf %4, %5 : vector<16x2xf32>
    %7 = vector.extract_strided_slice %6 {offsets = [0, 0], sizes = [8, 2], strides = [1, 1]} : vector<16x2xf32> to vector<8x2xf32>
    %8 = vector.extract_strided_slice %6 {offsets = [8, 0], sizes = [8, 2], strides = [1, 1]} : vector<16x2xf32> to vector<8x2xf32>
    %cst_7 = arith.constant 5.000000e-01 : f32
    %9 = vector.broadcast %cst_7 : f32 to vector<8x2xf32>
    %10 = arith.mulf %9, %8 : vector<8x2xf32>
    %11 = math.exp %10 : vector<8x2xf32>
    %12 = arith.mulf %3, %11 : vector<8x2xf32>
    %13 = arith.addf %7, %12 : vector<8x2xf32>
    %c0_8 = arith.constant 0 : index
    %c0_9 = arith.constant 0 : index
    %14 = vector.load %arg4[%c0_8, %c0_9] : memref<8x2xf32, #tpu.memory_space<vmem>>, vector<8x2xf32>
    tpu.vector_store %arg4[%c0_8, %c0_9], %13 {strides = array<i32>} : memref<8x2xf32, #tpu.memory_space<vmem>>, vector<8x2xf32>,
    return
  }
}

module attributes {stable_mosaic.version = 11 : i64} {
  func.func @_fused_kernel(%arg0: memref<16x32xf32, #tpu.memory_space<vmem>>, %arg1: memref<32x8xf32, #tpu.memory_space<vmem>>, %arg2: memref<16x1xf32, #tpu.memory_space<vmem>>, %arg3: memref<16x1xf32, #tpu.memory_space<vmem>>, %arg4: memref<16x1xf32, #tpu.memory_space<vmem>>, %arg5: memref<16x8xf32, #tpu.memory_space<vmem>>) attributes {dimension_semantics = [], scalar_prefetch = 0 : i64, scratch_operands = 0 : i64, tpu.core_type = #tpu.core_type<tc>} {
    %c0 = arith.constant 0 : index
    %c0_0 = arith.constant 0 : index
    %0 = vector.load %arg0[%c0, %c0_0] : memref<16x32xf32, #tpu.memory_space<vmem>>, vector<16x32xf32>
    %c0_1 = arith.constant 0 : index
    %c0_2 = arith.constant 0 : index
    %1 = vector.load %arg1[%c0_1, %c0_2] : memref<32x8xf32, #tpu.memory_space<vmem>>, vector<32x8xf32>
    %c0_3 = arith.constant 0 : index
    %c0_4 = arith.constant 0 : index
    %2 = vector.load %arg2[%c0_3, %c0_4] : memref<16x1xf32, #tpu.memory_space<vmem>>, vector<16x1xf32>
    %c0_5 = arith.constant 0 : index
    %c0_6 = arith.constant 0 : index
    %3 = vector.load %arg3[%c0_5, %c0_6] : memref<16x1xf32, #tpu.memory_space<vmem>>, vector<16x1xf32>
    %c0_7 = arith.constant 0 : index
    %c0_8 = arith.constant 0 : index
    %4 = vector.load %arg4[%c0_7, %c0_8] : memref<16x1xf32, #tpu.memory_space<vmem>>, vector<16x1xf32>
    %cst = arith.constant dense<0.000000e+00> : vector<16x8xf32>
    %5 = tpu.matmul %0, %1, %cst {dimension_numbers = #tpu.dot_dimension_numbers<[1], [0], [0], [1], [0, 0, 1, 1], [], []>} : vector<16x32xf32>, vector<32x8xf32>, vector<16x8xf32> -> vector<16x8xf32>
    %6 = vector.broadcast %2 : vector<16x1xf32> to vector<16x8xf32>
    %7 = arith.addf %5, %6 : vector<16x8xf32>
    %cst_9 = arith.constant dense<0.000000e+00> : vector<16xf32>
    %8 = vector.multi_reduction <add>, %7, %cst_9 [1] : vector<16x8xf32> to vector<16xf32>
    %9 = vector.shape_cast %8 : vector<16xf32> to vector<16x1xf32>
    %cst_10 = arith.constant 8.000000e+00 : f32
    %10 = vector.broadcast %cst_10 : f32 to vector<16x1xf32>
    %11 = arith.divf %9, %10 : vector<16x1xf32>
    %12 = vector.broadcast %11 : vector<16x1xf32> to vector<16x8xf32>
    %13 = arith.subf %7, %12 : vector<16x8xf32>
    %14 = arith.mulf %13, %13 : vector<16x8xf32>
    %cst_11 = arith.constant dense<0.000000e+00> : vector<16xf32>
    %15 = vector.multi_reduction <add>, %14, %cst_11 [1] : vector<16x8xf32> to vector<16xf32>
    %16 = vector.shape_cast %15 : vector<16xf32> to vector<16x1xf32>
    %cst_12 = arith.constant 8.000000e+00 : f32
    %17 = vector.broadcast %cst_12 : f32 to vector<16x1xf32>
    %18 = arith.divf %16, %17 : vector<16x1xf32>
    %19 = vector.broadcast %11 : vector<16x1xf32> to vector<16x8xf32>
    %20 = arith.subf %7, %19 : vector<16x8xf32>
    %cst_13 = arith.constant 9.99999974E-6 : f32
    %21 = vector.broadcast %cst_13 : f32 to vector<16x1xf32>
    %22 = arith.addf %18, %21 : vector<16x1xf32>
    %23 = math.rsqrt %22 : vector<16x1xf32>
    %24 = vector.broadcast %23 : vector<16x1xf32> to vector<16x8xf32>
    %25 = arith.mulf %20, %24 : vector<16x8xf32>
    %26 = vector.broadcast %3 : vector<16x1xf32> to vector<16x8xf32>
    %27 = arith.mulf %25, %26 : vector<16x8xf32>
    %28 = vector.broadcast %4 : vector<16x1xf32> to vector<16x8xf32>
    %29 = arith.addf %27, %28 : vector<16x8xf32>
    %cst_14 = arith.constant 0.000000e+00 : f32
    %30 = vector.broadcast %cst_14 : f32 to vector<16x8xf32>
    %31 = arith.cmpf ogt, %29, %30 : vector<16x8xf32>
    %cst_15 = arith.constant 2.000000e-01 : f32
    %32 = vector.broadcast %cst_15 : f32 to vector<16x8xf32>
    %33 = arith.mulf %32, %29 : vector<16x8xf32>
    %34 = arith.select %31, %29, %33 : vector<16x8xi1>, vector<16x8xf32>
    %c0_16 = arith.constant 0 : index
    %c0_17 = arith.constant 0 : index
    %35 = vector.load %arg5[%c0_16, %c0_17] : memref<16x8xf32, #tpu.memory_space<vmem>>, vector<16x8xf32>
    tpu.vector_store %arg5[%c0_16, %c0_17], %34 {strides = array<i32>} : memref<16x8xf32, #tpu.memory_space<vmem>>, vector<16x8xf32>,
    return
  }
}

module attributes {stable_mosaic.version = 11 : i64} {
  func.func @_fused_kernel(%arg0: memref<8x256xf32, #tpu.memory_space<vmem>>, %arg1: memref<256x32xf32, #tpu.memory_space<vmem>>, %arg2: memref<8x1xf32, #tpu.memory_space<vmem>>, %arg3: memref<8x1xf32, #tpu.memory_space<vmem>>, %arg4: memref<8x1xf32, #tpu.memory_space<vmem>>, %arg5: memref<8x32xf32, #tpu.memory_space<vmem>>) attributes {dimension_semantics = [], scalar_prefetch = 0 : i64, scratch_operands = 0 : i64, tpu.core_type = #tpu.core_type<tc>} {
    %c0 = arith.constant 0 : index
    %c0_0 = arith.constant 0 : index
    %0 = vector.load %arg0[%c0, %c0_0] : memref<8x256xf32, #tpu.memory_space<vmem>>, vector<8x256xf32>
    %c0_1 = arith.constant 0 : index
    %c0_2 = arith.constant 0 : index
    %1 = vector.load %arg1[%c0_1, %c0_2] : memref<256x32xf32, #tpu.memory_space<vmem>>, vector<256x32xf32>
    %c0_3 = arith.constant 0 : index
    %c0_4 = arith.constant 0 : index
    %2 = vector.load %arg2[%c0_3, %c0_4] : memref<8x1xf32, #tpu.memory_space<vmem>>, vector<8x1xf32>
    %c0_5 = arith.constant 0 : index
    %c0_6 = arith.constant 0 : index
    %3 = vector.load %arg3[%c0_5, %c0_6] : memref<8x1xf32, #tpu.memory_space<vmem>>, vector<8x1xf32>
    %c0_7 = arith.constant 0 : index
    %c0_8 = arith.constant 0 : index
    %4 = vector.load %arg4[%c0_7, %c0_8] : memref<8x1xf32, #tpu.memory_space<vmem>>, vector<8x1xf32>
    %cst = arith.constant dense<0.000000e+00> : vector<8x32xf32>
    %5 = tpu.matmul %0, %1, %cst {dimension_numbers = #tpu.dot_dimension_numbers<[1], [0], [0], [1], [0, 0, 1, 1], [], []>} : vector<8x256xf32>, vector<256x32xf32>, vector<8x32xf32> -> vector<8x32xf32>
    %6 = vector.broadcast %2 : vector<8x1xf32> to vector<8x32xf32>
    %7 = arith.addf %5, %6 : vector<8x32xf32>
    %cst_9 = arith.constant dense<0.000000e+00> : vector<8xf32>
    %8 = vector.multi_reduction <add>, %7, %cst_9 [1] : vector<8x32xf32> to vector<8xf32>
    %9 = vector.shape_cast %8 : vector<8xf32> to vector<8x1xf32>
    %cst_10 = arith.constant 3.200000e+01 : f32
    %10 = vector.broadcast %cst_10 : f32 to vector<8x1xf32>
    %11 = arith.divf %9, %10 : vector<8x1xf32>
    %12 = vector.broadcast %11 : vector<8x1xf32> to vector<8x32xf32>
    %13 = arith.subf %7, %12 : vector<8x32xf32>
    %14 = arith.mulf %13, %13 : vector<8x32xf32>
    %cst_11 = arith.constant dense<0.000000e+00> : vector<8xf32>
    %15 = vector.multi_reduction <add>, %14, %cst_11 [1] : vector<8x32xf32> to vector<8xf32>
    %16 = vector.shape_cast %15 : vector<8xf32> to vector<8x1xf32>
    %cst_12 = arith.constant 3.200000e+01 : f32
    %17 = vector.broadcast %cst_12 : f32 to vector<8x1xf32>
    %18 = arith.divf %16, %17 : vector<8x1xf32>
    %19 = vector.broadcast %11 : vector<8x1xf32> to vector<8x32xf32>
    %20 = arith.subf %7, %19 : vector<8x32xf32>
    %cst_13 = arith.constant 9.99999974E-6 : f32
    %21 = vector.broadcast %cst_13 : f32 to vector<8x1xf32>
    %22 = arith.addf %18, %21 : vector<8x1xf32>
    %23 = math.rsqrt %22 : vector<8x1xf32>
    %24 = vector.broadcast %23 : vector<8x1xf32> to vector<8x32xf32>
    %25 = arith.mulf %20, %24 : vector<8x32xf32>
    %26 = vector.broadcast %3 : vector<8x1xf32> to vector<8x32xf32>
    %27 = arith.mulf %25, %26 : vector<8x32xf32>
    %28 = vector.broadcast %4 : vector<8x1xf32> to vector<8x32xf32>
    %29 = arith.addf %27, %28 : vector<8x32xf32>
    %cst_14 = arith.constant 0.000000e+00 : f32
    %30 = vector.broadcast %cst_14 : f32 to vector<8x32xf32>
    %31 = arith.cmpf ogt, %29, %30 : vector<8x32xf32>
    %cst_15 = arith.constant 2.000000e-01 : f32
    %32 = vector.broadcast %cst_15 : f32 to vector<8x32xf32>
    %33 = arith.mulf %32, %29 : vector<8x32xf32>
    %34 = arith.select %31, %29, %33 : vector<8x32xi1>, vector<8x32xf32>
    %c0_16 = arith.constant 0 : index
    %c0_17 = arith.constant 0 : index
    %35 = vector.load %arg5[%c0_16, %c0_17] : memref<8x32xf32, #tpu.memory_space<vmem>>, vector<8x32xf32>
    tpu.vector_store %arg5[%c0_16, %c0_17], %34 {strides = array<i32>} : memref<8x32xf32, #tpu.memory_space<vmem>>, vector<8x32xf32>,
    return
  }
}

module attributes {stable_mosaic.version = 11 : i64} {
  func.func @_fused_kernel(%arg0: memref<4x128xf32, #tpu.memory_space<vmem>>, %arg1: memref<128x128xf32, #tpu.memory_space<vmem>>, %arg2: memref<4x1xf32, #tpu.memory_space<vmem>>, %arg3: memref<4x1xf32, #tpu.memory_space<vmem>>, %arg4: memref<4x1xf32, #tpu.memory_space<vmem>>, %arg5: memref<4x128xf32, #tpu.memory_space<vmem>>) attributes {dimension_semantics = [], scalar_prefetch = 0 : i64, scratch_operands = 0 : i64, tpu.core_type = #tpu.core_type<tc>} {
    %c0 = arith.constant 0 : index
    %c0_0 = arith.constant 0 : index
    %0 = vector.load %arg0[%c0, %c0_0] : memref<4x128xf32, #tpu.memory_space<vmem>>, vector<4x128xf32>
    %c0_1 = arith.constant 0 : index
    %c0_2 = arith.constant 0 : index
    %1 = vector.load %arg1[%c0_1, %c0_2] : memref<128x128xf32, #tpu.memory_space<vmem>>, vector<128x128xf32>
    %c0_3 = arith.constant 0 : index
    %c0_4 = arith.constant 0 : index
    %2 = vector.load %arg2[%c0_3, %c0_4] : memref<4x1xf32, #tpu.memory_space<vmem>>, vector<4x1xf32>
    %c0_5 = arith.constant 0 : index
    %c0_6 = arith.constant 0 : index
    %3 = vector.load %arg3[%c0_5, %c0_6] : memref<4x1xf32, #tpu.memory_space<vmem>>, vector<4x1xf32>
    %c0_7 = arith.constant 0 : index
    %c0_8 = arith.constant 0 : index
    %4 = vector.load %arg4[%c0_7, %c0_8] : memref<4x1xf32, #tpu.memory_space<vmem>>, vector<4x1xf32>
    %cst = arith.constant dense<0.000000e+00> : vector<4x128xf32>
    %5 = tpu.matmul %0, %1, %cst {dimension_numbers = #tpu.dot_dimension_numbers<[1], [0], [0], [1], [0, 0, 1, 1], [], []>} : vector<4x128xf32>, vector<128x128xf32>, vector<4x128xf32> -> vector<4x128xf32>
    %6 = vector.broadcast %2 : vector<4x1xf32> to vector<4x128xf32>
    %7 = arith.addf %5, %6 : vector<4x128xf32>
    %cst_9 = arith.constant dense<0.000000e+00> : vector<4xf32>
    %8 = vector.multi_reduction <add>, %7, %cst_9 [1] : vector<4x128xf32> to vector<4xf32>
    %9 = vector.shape_cast %8 : vector<4xf32> to vector<4x1xf32>
    %cst_10 = arith.constant 1.280000e+02 : f32
    %10 = vector.broadcast %cst_10 : f32 to vector<4x1xf32>
    %11 = arith.divf %9, %10 : vector<4x1xf32>
    %12 = vector.broadcast %11 : vector<4x1xf32> to vector<4x128xf32>
    %13 = arith.subf %7, %12 : vector<4x128xf32>
    %14 = arith.mulf %13, %13 : vector<4x128xf32>
    %cst_11 = arith.constant dense<0.000000e+00> : vector<4xf32>
    %15 = vector.multi_reduction <add>, %14, %cst_11 [1] : vector<4x128xf32> to vector<4xf32>
    %16 = vector.shape_cast %15 : vector<4xf32> to vector<4x1xf32>
    %cst_12 = arith.constant 1.280000e+02 : f32
    %17 = vector.broadcast %cst_12 : f32 to vector<4x1xf32>
    %18 = arith.divf %16, %17 : vector<4x1xf32>
    %19 = vector.broadcast %11 : vector<4x1xf32> to vector<4x128xf32>
    %20 = arith.subf %7, %19 : vector<4x128xf32>
    %cst_13 = arith.constant 9.99999974E-6 : f32
    %21 = vector.broadcast %cst_13 : f32 to vector<4x1xf32>
    %22 = arith.addf %18, %21 : vector<4x1xf32>
    %23 = math.rsqrt %22 : vector<4x1xf32>
    %24 = vector.broadcast %23 : vector<4x1xf32> to vector<4x128xf32>
    %25 = arith.mulf %20, %24 : vector<4x128xf32>
    %26 = vector.broadcast %3 : vector<4x1xf32> to vector<4x128xf32>
    %27 = arith.mulf %25, %26 : vector<4x128xf32>
    %28 = vector.broadcast %4 : vector<4x1xf32> to vector<4x128xf32>
    %29 = arith.addf %27, %28 : vector<4x128xf32>
    %cst_14 = arith.constant 0.000000e+00 : f32
    %30 = vector.broadcast %cst_14 : f32 to vector<4x128xf32>
    %31 = arith.cmpf ogt, %29, %30 : vector<4x128xf32>
    %cst_15 = arith.constant 2.000000e-01 : f32
    %32 = vector.broadcast %cst_15 : f32 to vector<4x128xf32>
    %33 = arith.mulf %32, %29 : vector<4x128xf32>
    %34 = arith.select %31, %29, %33 : vector<4x128xi1>, vector<4x128xf32>
    %c0_16 = arith.constant 0 : index
    %c0_17 = arith.constant 0 : index
    %35 = vector.load %arg5[%c0_16, %c0_17] : memref<4x128xf32, #tpu.memory_space<vmem>>, vector<4x128xf32>
    tpu.vector_store %arg5[%c0_16, %c0_17], %34 {strides = array<i32>} : memref<4x128xf32, #tpu.memory_space<vmem>>, vector<4x128xf32>,
    return
  }
}

module attributes {stable_mosaic.version = 11 : i64} {
  func.func @_fused_kernel(%arg0: memref<1x64xf32, #tpu.memory_space<vmem>>, %arg1: memref<64x512xf32, #tpu.memory_space<vmem>>, %arg2: memref<1x1xf32, #tpu.memory_space<vmem>>, %arg3: memref<1x512xf32, #tpu.memory_space<vmem>>) attributes {dimension_semantics = [], scalar_prefetch = 0 : i64, scratch_operands = 0 : i64, tpu.core_type = #tpu.core_type<tc>} {
    %c0 = arith.constant 0 : index
    %c0_0 = arith.constant 0 : index
    %0 = vector.load %arg0[%c0, %c0_0] : memref<1x64xf32, #tpu.memory_space<vmem>>, vector<1x64xf32>
    %c0_1 = arith.constant 0 : index
    %c0_2 = arith.constant 0 : index
    %1 = vector.load %arg1[%c0_1, %c0_2] : memref<64x512xf32, #tpu.memory_space<vmem>>, vector<64x512xf32>
    %c0_3 = arith.constant 0 : index
    %c0_4 = arith.constant 0 : index
    %2 = vector.load %arg2[%c0_3, %c0_4] : memref<1x1xf32, #tpu.memory_space<vmem>>, vector<1x1xf32>
    %cst = arith.constant dense<0.000000e+00> : vector<1x512xf32>
    %3 = tpu.matmul %0, %1, %cst {dimension_numbers = #tpu.dot_dimension_numbers<[1], [0], [0], [1], [0, 0, 1, 1], [], []>} : vector<1x64xf32>, vector<64x512xf32>, vector<1x512xf32> -> vector<1x512xf32>
    %4 = vector.broadcast %2 : vector<1x1xf32> to vector<1x512xf32>
    %5 = arith.addf %3, %4 : vector<1x512xf32>
    %6 = math.tanh %5 : vector<1x512xf32>
    %c0_5 = arith.constant 0 : index
    %c0_6 = arith.constant 0 : index
    %7 = vector.load %arg3[%c0_5, %c0_6] : memref<1x512xf32, #tpu.memory_space<vmem>>, vector<1x512xf32>
    tpu.vector_store %arg3[%c0_5, %c0_6], %6 {strides = array<i32>} : memref<1x512xf32, #tpu.memory_space<vmem>>, vector<1x512xf32>,
    return
  }
}

</mosaic_0001>

<llo_original>
// kernel: generator_forward.9
$region0: #{generator_forward.9}
  #allocation0 [shape = 'u32[]', space=smem, size = 0x4, offset = 0x4, fixed_abs, tag = 'smem constant byte address 0x4 - core index']
  #allocation1 [shape = 'u32[72,128]{1,0:T(1,128)}', space=vmem, size = 0x9000, scoped, tag = 'internal scratch']
  %s0 = inlined_call_operand.vmem [shape: f32[4,16], index: 0, kind: input, shape index: {}]
  %s1 = inlined_call_operand.vmem [shape: f32[16,128], index: 1, kind: input, shape index: {}]
  %s2 = inlined_call_operand.vmem [shape: f32[4,1], index: 2, kind: input, shape index: {}]
  %s3 = inlined_call_operand.vmem [shape: f32[4,128], index: 3, kind: output, shape index: {}]
  %s4 = sld [smem:[#allocation0]]
  $region22: #{generator_forward.9} parent=0
    _
  %s6 = ssub.s32 1, %s4
  %s7 = scalar_select 0, %s6, %s4
  // Predicated region
  $region2: #{generator_forward.9} parent=0 // pred_check
    _
  $region3: #{generator_forward.9} parent=0 // pred_check_branch
    %9 = sbr.rel (0) target = $region5
  $region4: #{generator_forward.9} parent=0 // pred_region
    _
  $region5: #{generator_forward.9} parent=0 // pred_fallthru
    _
  // Predicated region
  $region6: #{generator_forward.9} parent=0 // pred_check
    _
  $region7: #{generator_forward.9} parent=0 // pred_check_branch
    %11 = sbr.rel (0) target = $region9
  $region8: #{generator_forward.9} parent=0 // pred_region
    _
  $region9: #{generator_forward.9} parent=0 // pred_fallthru
    _
  // Predicated region
  $region10: #{generator_forward.9} parent=0 // pred_check
    _
  $region11: #{generator_forward.9} parent=0 // pred_check_branch
    %13 = sbr.rel (0) target = $region13
  $region12: #{generator_forward.9} parent=0 // pred_region
    _
  $region13: #{generator_forward.9} parent=0 // pred_fallthru
    _
  %v14 = vld [vmem:[%s0] sm:$0xf]
  %v15 = vld [vmem:[%s1] sm:$0xff]
  %v16 = vld [vmem:[%s1 + $0x8] sm:$0xff]
  %v17 = vld [vmem:[%s2] sm:$0xf]
  %19 = vset.pattern.permute.xlu0 0
  %20 = vperm.xlu0 %19, %v17
  %v21 = vpop.permute.xlu0 %20
  %vm23 = vcmask 130048
  %v25 = vsel %vm23, %v14, 0
  %27 = vmatpush.msra.mxu0 0.0
  %28 = vmatpush.msra.mxu0 0.0
  %29 = vmatpush.msra.mxu0 0.0
  %30 = vmatpush.msra.mxu0 0.0
  %31 = vmatpush.msra.mxu0 0.0
  %32 = vmatpush.msra.mxu0 0.0
  %33 = vmatpush.msra.mxu0 0.0
  %34 = vmatpush.msra.mxu0 0.0
  %35 = vmatpush.msra.mxu0 0.0
  %36 = vmatpush.msra.mxu0 0.0
  %37 = vmatpush.msra.mxu0 0.0
  %38 = vmatpush.msra.mxu0 0.0
  %39 = vmatpush.msra.mxu0 0.0
  %40 = vmatpush.msra.mxu0 0.0
  %41 = vmatpush.msra.mxu0 %v16
  %42 = vmatpush.msra.mxu0 %v15
  %43 = vmatmul.f32.gmra.mxu0 %v25
  %v44 = vpop.f32.mrf.mxu0
  %v45 = vadd.f32 %v21, %v44
  %46 = vdwg.mxu0
  %vm47 = vcmp.gt.f32.partialorder %v45, 0.0
  %v48 = vmul.f32 %v45, 0.2
  %v49 = vsel %vm47, %v45, %v48
  %50 = vst [vmem:[%s3] sm:$0xf] %v49
  // Predicated region
  $region14: #{generator_forward.9} parent=0 // pred_check
    _
  $region15: #{generator_forward.9} parent=0 // pred_check_branch
    %52 = sbr.rel (0) target = $region17
  $region16: #{generator_forward.9} parent=0 // pred_region
    _
  $region17: #{generator_forward.9} parent=0 // pred_fallthru
    _
  // Predicated region
  $region18: #{generator_forward.9} parent=0 // pred_check
    _
  $region19: #{generator_forward.9} parent=0 // pred_check_branch
    %54 = sbr.rel (0) target = $region21
  $region20: #{generator_forward.9} parent=0 // pred_region
    _
  $region21: #{generator_forward.9} parent=0 // pred_fallthru
    _

// kernel: generator_forward.10
$region0: #{generator_forward.10}
  #allocation0 [shape = 'u32[]', space=smem, size = 0x4, offset = 0x4, fixed_abs, tag = 'smem constant byte address 0x4 - core index']
  #allocation1 [shape = 'u32[72,128]{1,0:T(1,128)}', space=vmem, size = 0x9000, scoped, tag = 'internal scratch']
  %s0 = inlined_call_operand.vmem [shape: f32[8,64], index: 0, kind: input, shape index: {}]
  %s1 = inlined_call_operand.vmem [shape: f32[64,32], index: 1, kind: input, shape index: {}]
  %s2 = inlined_call_operand.vmem [shape: f32[8,1], index: 2, kind: input, shape index: {}]
  %s3 = inlined_call_operand.vmem [shape: f32[8,1], index: 3, kind: input, shape index: {}]
  %s4 = inlined_call_operand.vmem [shape: f32[8,1], index: 4, kind: input, shape index: {}]
  %s5 = inlined_call_operand.vmem [shape: f32[8,32], index: 5, kind: output, shape index: {}]
  %s6 = sld [smem:[#allocation0]]
  $region30: #{generator_forward.10} parent=0
    _
  %s8 = ssub.s32 1, %s6
  %s9 = scalar_select 0, %s8, %s6
  // Predicated region
  $region2: #{generator_forward.10} parent=0 // pred_check
    _
  $region3: #{generator_forward.10} parent=0 // pred_check_branch
    %11 = sbr.rel (0) target = $region5
  $region4: #{generator_forward.10} parent=0 // pred_region
    _
  $region5: #{generator_forward.10} parent=0 // pred_fallthru
    _
  // Predicated region
  $region6: #{generator_forward.10} parent=0 // pred_check
    _
  $region7: #{generator_forward.10} parent=0 // pred_check_branch
    %13 = sbr.rel (0) target = $region9
  $region8: #{generator_forward.10} parent=0 // pred_region
    _
  $region9: #{generator_forward.10} parent=0 // pred_fallthru
    _
  // Predicated region
  $region10: #{generator_forward.10} parent=0 // pred_check
    _
  $region11: #{generator_forward.10} parent=0 // pred_check_branch
    %15 = sbr.rel (0) target = $region13
  $region12: #{generator_forward.10} parent=0 // pred_region
    _
  $region13: #{generator_forward.10} parent=0 // pred_fallthru
    _
  // Predicated region
  $region14: #{generator_forward.10} parent=0 // pred_check
    _
  $region15: #{generator_forward.10} parent=0 // pred_check_branch
    %17 = sbr.rel (0) target = $region17
  $region16: #{generator_forward.10} parent=0 // pred_region
    _
  $region17: #{generator_forward.10} parent=0 // pred_fallthru
    _
  // Predicated region
  $region18: #{generator_forward.10} parent=0 // pred_check
    _
  $region19: #{generator_forward.10} parent=0 // pred_check_branch
    %19 = sbr.rel (0) target = $region21
  $region20: #{generator_forward.10} parent=0 // pred_region
    _
  $region21: #{generator_forward.10} parent=0 // pred_fallthru
    _
  %v20 = vld [vmem:[%s0] sm:$0xff]
  %v21 = vld [vmem:[%s1] sm:$0xff]
  %v22 = vld [vmem:[%s1 + $0x8] sm:$0xff]
  %v23 = vld [vmem:[%s1 + $0x10] sm:$0xff]
  %v24 = vld [vmem:[%s1 + $0x18] sm:$0xff]
  %v25 = vld [vmem:[%s1 + $0x20] sm:$0xff]
  %v26 = vld [vmem:[%s1 + $0x28] sm:$0xff]
  %v27 = vld [vmem:[%s1 + $0x30] sm:$0xff]
  %v28 = vld [vmem:[%s1 + $0x38] sm:$0xff]
  %v29 = vld [vmem:[%s2] sm:$0xff]
  %v30 = vld [vmem:[%s3] sm:$0xff]
  %v31 = vld [vmem:[%s4] sm:$0xff]
  %33 = vset.pattern.permute.xlu0 0
  %34 = vperm.xlu0 %33, %v29
  %v35 = vpop.permute.xlu0 %34
  %vm37 = vcmask 523264
  %v39 = vsel %vm37, %v20, 0
  %41 = vmatpush.msra.mxu0 0.0
  %42 = vmatpush.msra.mxu0 0.0
  %43 = vmatpush.msra.mxu0 0.0
  %44 = vmatpush.msra.mxu0 0.0
  %45 = vmatpush.msra.mxu0 0.0
  %46 = vmatpush.msra.mxu0 0.0
  %47 = vmatpush.msra.mxu0 0.0
  %48 = vmatpush.msra.mxu0 0.0
  %49 = vmatpush.msra.mxu0 %v28
  %50 = vmatpush.msra.mxu0 %v27
  %51 = vmatpush.msra.mxu0 %v26
  %52 = vmatpush.msra.mxu0 %v25
  %53 = vmatpush.msra.mxu0 %v24
  %54 = vmatpush.msra.mxu0 %v23
  %55 = vmatpush.msra.mxu0 %v22
  %56 = vmatpush.msra.mxu0 %v21
  %57 = vmatmul.f32.gmra.mxu0 %v39
  %v58 = vpop.f32.mrf.mxu0
  %v59 = vadd.f32 %v35, %v58
  %60 = vdwg.mxu0
  %vm61 = vcmask 261120
  %v62 = vsel %vm61, %v59, 0.0
  %63 = vadd.xlane.f32.xlu0 %v62
  %v64 = vpop.xlane.xlu0 %63
  %v65 = vrcp.pop 32.0
  %v66 = vmul.f32 32.0, %v65
  %v67 = vsub.f32 1.0, %v66
  %v68 = vmul.f32 %v65, %v67
  %v69 = vadd.f32 %v65, %v68
  %vm70 = vweird.f32 %v65
  %v71 = vsel %vm70, %v65, %v69
  %v72 = vmul.f32 %v64, %v71
  %v73 = vsub.f32 %v59, %v72
  %v74 = vmul.f32 %v73, %v73
  %v75 = vsel %vm61, %v74, 0.0
  %76 = vadd.xlane.f32.xlu0 %v75
  %v77 = vpop.xlane.xlu0 %76
  %v78 = vmul.f32 %v77, %v71
  %v79 = vadd.f32 %v78, 1e-05
  %v80 = vrsqrt.pop %v79
  %v81 = vmul.f32 %v80, %v79
  %v82 = vmul.f32 %v81, %v80
  %v83 = vmul.f32 0.5, %v82
  %v84 = vsub.f32 1.5, %v83
  %v85 = vmul.f32 %v80, %v84
  %vm86 = vweird.f32 %v79
  %vm87 = vweird.f32 %v80
  %vm88 = vmor %vm86, %vm87
  %v89 = vsel %vm88, %v80, %v85
  %v90 = vmul.f32 %v73, %v89
  %92 = vset.pattern.permute.xlu0 0
  %93 = vperm.xlu0 %92, %v30
  %v94 = vpop.permute.xlu0 %93
  %v96 = vmul.f32 %v90, %v94
  %98 = vset.pattern.permute.xlu0 0
  %99 = vperm.xlu0 %98, %v31
  %v100 = vpop.permute.xlu0 %99
  %v102 = vadd.f32 %v96, %v100
  %vm103 = vcmp.gt.f32.partialorder %v102, 0.0
  %v104 = vmul.f32 %v102, 0.2
  %v105 = vsel %vm103, %v102, %v104
  %106 = vst.msk [vmem:[%s5] sm:$0xff] %vm61, %v105
  // Predicated region
  $region22: #{generator_forward.10} parent=0 // pred_check
    _
  $region23: #{generator_forward.10} parent=0 // pred_check_branch
    %108 = sbr.rel (0) target = $region25
  $region24: #{generator_forward.10} parent=0 // pred_region
    _
  $region25: #{generator_forward.10} parent=0 // pred_fallthru
    _
  // Predicated region
  $region26: #{generator_forward.10} parent=0 // pred_check
    _
  $region27: #{generator_forward.10} parent=0 // pred_check_branch
    %110 = sbr.rel (0) target = $region29
  $region28: #{generator_forward.10} parent=0 // pred_region
    _
  $region29: #{generator_forward.10} parent=0 // pred_fallthru
    _

// kernel: generator_forward.11
$region0: #{generator_forward.11}
  #allocation0 [shape = 'u32[]', space=smem, size = 0x4, offset = 0x4, fixed_abs, tag = 'smem constant byte address 0x4 - core index']
  #allocation1 [shape = 'u32[72,128]{1,0:T(1,128)}', space=vmem, size = 0x9000, scoped, tag = 'internal scratch']
  %s0 = inlined_call_operand.vmem [shape: f32[16,128], index: 0, kind: input, shape index: {}]
  %s1 = inlined_call_operand.vmem [shape: f32[128,8], index: 1, kind: input, shape index: {}]
  %s2 = inlined_call_operand.vmem [shape: f32[16,1], index: 2, kind: input, shape index: {}]
  %s3 = inlined_call_operand.vmem [shape: f32[16,1], index: 3, kind: input, shape index: {}]
  %s4 = inlined_call_operand.vmem [shape: f32[16,1], index: 4, kind: input, shape index: {}]
  %s5 = inlined_call_operand.vmem [shape: f32[16,8], index: 5, kind: output, shape index: {}]
  %s6 = sld [smem:[#allocation0]]
  $region30: #{generator_forward.11} parent=0
    _
  %s8 = ssub.s32 1, %s6
  %s9 = scalar_select 0, %s8, %s6
  // Predicated region
  $region2: #{generator_forward.11} parent=0 // pred_check
    _
  $region3: #{generator_forward.11} parent=0 // pred_check_branch
    %11 = sbr.rel (0) target = $region5
  $region4: #{generator_forward.11} parent=0 // pred_region
    _
  $region5: #{generator_forward.11} parent=0 // pred_fallthru
    _
  // Predicated region
  $region6: #{generator_forward.11} parent=0 // pred_check
    _
  $region7: #{generator_forward.11} parent=0 // pred_check_branch
    %13 = sbr.rel (0) target = $region9
  $region8: #{generator_forward.11} parent=0 // pred_region
    _
  $region9: #{generator_forward.11} parent=0 // pred_fallthru
    _
  // Predicated region
  $region10: #{generator_forward.11} parent=0 // pred_check
    _
  $region11: #{generator_forward.11} parent=0 // pred_check_branch
    %15 = sbr.rel (0) target = $region13
  $region12: #{generator_forward.11} parent=0 // pred_region
    _
  $region13: #{generator_forward.11} parent=0 // pred_fallthru
    _
  // Predicated region
  $region14: #{generator_forward.11} parent=0 // pred_check
    _
  $region15: #{generator_forward.11} parent=0 // pred_check_branch
    %17 = sbr.rel (0) target = $region17
  $region16: #{generator_forward.11} parent=0 // pred_region
    _
  $region17: #{generator_forward.11} parent=0 // pred_fallthru
    _
  // Predicated region
  $region18: #{generator_forward.11} parent=0 // pred_check
    _
  $region19: #{generator_forward.11} parent=0 // pred_check_branch
    %19 = sbr.rel (0) target = $region21
  $region20: #{generator_forward.11} parent=0 // pred_region
    _
  $region21: #{generator_forward.11} parent=0 // pred_fallthru
    _
  %v20 = vld [vmem:[%s0] sm:$0xff]
  %v21 = vld [vmem:[%s0 + $0x8] sm:$0xff]
  %v22 = vld [vmem:[%s1] sm:$0xff]
  %v23 = vld [vmem:[%s1 + $0x8] sm:$0xff]
  %v24 = vld [vmem:[%s1 + $0x10] sm:$0xff]
  %v25 = vld [vmem:[%s1 + $0x18] sm:$0xff]
  %v26 = vld [vmem:[%s1 + $0x20] sm:$0xff]
  %v27 = vld [vmem:[%s1 + $0x28] sm:$0xff]
  %v28 = vld [vmem:[%s1 + $0x30] sm:$0xff]
  %v29 = vld [vmem:[%s1 + $0x38] sm:$0xff]
  %v30 = vld [vmem:[%s1 + $0x40] sm:$0xff]
  %v31 = vld [vmem:[%s1 + $0x48] sm:$0xff]
  %v32 = vld [vmem:[%s1 + $0x50] sm:$0xff]
  %v33 = vld [vmem:[%s1 + $0x58] sm:$0xff]
  %v34 = vld [vmem:[%s1 + $0x60] sm:$0xff]
  %v35 = vld [vmem:[%s1 + $0x68] sm:$0xff]
  %v36 = vld [vmem:[%s1 + $0x70] sm:$0xff]
  %v37 = vld [vmem:[%s1 + $0x78] sm:$0xff]
  %v38 = vld [vmem:[%s2] sm:$0xff]
  %v39 = vld [vmem:[%s2 + $0x8] sm:$0xff]
  %v40 = vld [vmem:[%s3] sm:$0xff]
  %v41 = vld [vmem:[%s3 + $0x8] sm:$0xff]
  %v42 = vld [vmem:[%s4] sm:$0xff]
  %v43 = vld [vmem:[%s4 + $0x8] sm:$0xff]
  %45 = vset.pattern.permute.xlu0 0
  %46 = vperm.xlu0 %45, %v38
  %v47 = vpop.permute.xlu0 %46
  %50 = vset.pattern.permute.xlu0 0
  %51 = vperm.xlu0 %50, %v39
  %v52 = vpop.permute.xlu0 %51
  %54 = vmatpush.msra.mxu0 %v37
  %55 = vmatpush.msra.mxu0 %v36
  %56 = vmatpush.msra.mxu0 %v35
  %57 = vmatpush.msra.mxu0 %v34
  %58 = vmatpush.msra.mxu0 %v33
  %59 = vmatpush.msra.mxu0 %v32
  %60 = vmatpush.msra.mxu0 %v31
  %61 = vmatpush.msra.mxu0 %v30
  %62 = vmatpush.msra.mxu0 %v29
  %63 = vmatpush.msra.mxu0 %v28
  %64 = vmatpush.msra.mxu0 %v27
  %65 = vmatpush.msra.mxu0 %v26
  %66 = vmatpush.msra.mxu0 %v25
  %67 = vmatpush.msra.mxu0 %v24
  %68 = vmatpush.msra.mxu0 %v23
  %69 = vmatpush.msra.mxu0 %v22
  %70 = vmatmul.f32.gmra.mxu0 %v20
  %v71 = vpop.f32.mrf.mxu0
  %v72 = vadd.f32 %v47, %v71
  %73 = vmatmul.f32.gmra.mxu0 %v21
  %v74 = vpop.f32.mrf.mxu0
  %v75 = vadd.f32 %v52, %v74
  %76 = vdwg.mxu0
  %vm77 = vcmask 64512
  %v78 = vsel %vm77, %v72, 0.0
  %79 = vadd.xlane.f32.xlu0 %v78
  %v80 = vpop.xlane.xlu0 %79
  %v81 = vsel %vm77, %v75, 0.0
  %82 = vadd.xlane.f32.xlu0 %v81
  %v83 = vpop.xlane.xlu0 %82
  %v84 = vrcp.pop 8.0
  %v85 = vmul.f32 8.0, %v84
  %v86 = vsub.f32 1.0, %v85
  %v87 = vmul.f32 %v84, %v86
  %v88 = vadd.f32 %v84, %v87
  %vm89 = vweird.f32 %v84
  %v90 = vsel %vm89, %v84, %v88
  %v91 = vmul.f32 %v80, %v90
  %v92 = vmul.f32 %v83, %v90
  %v93 = vsub.f32 %v72, %v91
  %v94 = vsub.f32 %v75, %v92
  %v95 = vmul.f32 %v93, %v93
  %v96 = vmul.f32 %v94, %v94
  %v97 = vsel %vm77, %v95, 0.0
  %98 = vadd.xlane.f32.xlu0 %v97
  %v99 = vpop.xlane.xlu0 %98
  %v100 = vsel %vm77, %v96, 0.0
  %101 = vadd.xlane.f32.xlu0 %v100
  %v102 = vpop.xlane.xlu0 %101
  %v103 = vmul.f32 %v99, %v90
  %v104 = vmul.f32 %v102, %v90
  %v105 = vadd.f32 %v103, 1e-05
  %v106 = vadd.f32 %v104, 1e-05
  %v107 = vrsqrt.pop %v105
  %v108 = vmul.f32 %v107, %v105
  %v109 = vmul.f32 %v108, %v107
  %v110 = vmul.f32 0.5, %v109
  %v111 = vsub.f32 1.5, %v110
  %v112 = vmul.f32 %v107, %v111
  %vm113 = vweird.f32 %v105
  %vm114 = vweird.f32 %v107
  %vm115 = vmor %vm113, %vm114
  %v116 = vsel %vm115, %v107, %v112
  %v117 = vrsqrt.pop %v106
  %v118 = vmul.f32 %v117, %v106
  %v119 = vmul.f32 %v118, %v117
  %v120 = vmul.f32 0.5, %v119
  %v121 = vsub.f32 1.5, %v120
  %v122 = vmul.f32 %v117, %v121
  %vm123 = vweird.f32 %v106
  %vm124 = vweird.f32 %v117
  %vm125 = vmor %vm123, %vm124
  %v126 = vsel %vm125, %v117, %v122
  %v127 = vmul.f32 %v93, %v116
  %v128 = vmul.f32 %v94, %v126
  %130 = vset.pattern.permute.xlu0 0
  %131 = vperm.xlu0 %130, %v40
  %v132 = vpop.permute.xlu0 %131
  %135 = vset.pattern.permute.xlu0 0
  %136 = vperm.xlu0 %135, %v41
  %v137 = vpop.permute.xlu0 %136
  %v139 = vmul.f32 %v127, %v132
  %v140 = vmul.f32 %v128, %v137
  %142 = vset.pattern.permute.xlu0 0
  %143 = vperm.xlu0 %142, %v42
  %v144 = vpop.permute.xlu0 %143
  %147 = vset.pattern.permute.xlu0 0
  %148 = vperm.xlu0 %147, %v43
  %v149 = vpop.permute.xlu0 %148
  %v151 = vadd.f32 %v139, %v144
  %v152 = vadd.f32 %v140, %v149
  %vm153 = vcmp.gt.f32.partialorder %v151, 0.0
  %vm154 = vcmp.gt.f32.partialorder %v152, 0.0
  %v155 = vmul.f32 %v151, 0.2
  %v156 = vmul.f32 %v152, 0.2
  %v157 = vsel %vm153, %v151, %v155
  %v158 = vsel %vm154, %v152, %v156
  %159 = vst.msk [vmem:[%s5] sm:$0xff] %vm77, %v157
  %160 = vst.msk [vmem:[%s5 + $0x8] sm:$0xff] %vm77, %v158
  // Predicated region
  $region22: #{generator_forward.11} parent=0 // pred_check
    _
  $region23: #{generator_forward.11} parent=0 // pred_check_branch
    %162 = sbr.rel (0) target = $region25
  $region24: #{generator_forward.11} parent=0 // pred_region
    _
  $region25: #{generator_forward.11} parent=0 // pred_fallthru
    _
  // Predicated region
  $region26: #{generator_forward.11} parent=0 // pred_check
    _
  $region27: #{generator_forward.11} parent=0 // pred_check_branch
    %164 = sbr.rel (0) target = $region29
  $region28: #{generator_forward.11} parent=0 // pred_region
    _
  $region29: #{generator_forward.11} parent=0 // pred_fallthru
    _

// kernel: generator_forward.13
$region0: #{generator_forward.13}
  #allocation0 [shape = 'u32[]', space=smem, size = 0x4, offset = 0x4, fixed_abs, tag = 'smem constant byte address 0x4 - core index']
  #allocation1 [shape = 'u32[72,128]{1,0:T(1,128)}', space=vmem, size = 0x9000, scoped, tag = 'internal scratch']
  %s0 = inlined_call_operand.vmem [shape: f32[16,2048], index: 0, kind: input, shape index: {}]
  %s1 = inlined_call_operand.vmem [shape: f32[2048,2], index: 1, kind: input, shape index: {}]
  %s2 = inlined_call_operand.vmem [shape: f32[16,1], index: 2, kind: input, shape index: {}]
  %s3 = inlined_call_operand.vmem [shape: f32[8,2], index: 3, kind: input, shape index: {}]
  %s4 = inlined_call_operand.vmem [shape: f32[8,2], index: 4, kind: output, shape index: {}]
  %s5 = sld [smem:[#allocation0]]
  $region26: #{generator_forward.13} parent=0
    _
  %s7 = ssub.s32 1, %s5
  %s8 = scalar_select 0, %s7, %s5
  // Predicated region
  $region2: #{generator_forward.13} parent=0 // pred_check
    _
  $region3: #{generator_forward.13} parent=0 // pred_check_branch
    %10 = sbr.rel (0) target = $region5
  $region4: #{generator_forward.13} parent=0 // pred_region
    _
  $region5: #{generator_forward.13} parent=0 // pred_fallthru
    _
  // Predicated region
  $region6: #{generator_forward.13} parent=0 // pred_check
    _
  $region7: #{generator_forward.13} parent=0 // pred_check_branch
    %12 = sbr.rel (0) target = $region9
  $region8: #{generator_forward.13} parent=0 // pred_region
    _
  $region9: #{generator_forward.13} parent=0 // pred_fallthru
    _
  // Predicated region
  $region10: #{generator_forward.13} parent=0 // pred_check
    _
  $region11: #{generator_forward.13} parent=0 // pred_check_branch
    %14 = sbr.rel (0) target = $region13
  $region12: #{generator_forward.13} parent=0 // pred_region
    _
  $region13: #{generator_forward.13} parent=0 // pred_fallthru
    _
  // Predicated region
  $region14: #{generator_forward.13} parent=0 // pred_check
    _
  $region15: #{generator_forward.13} parent=0 // pred_check_branch
    %16 = sbr.rel (0) target = $region17
  $region16: #{generator_forward.13} parent=0 // pred_region
    _
  $region17: #{generator_forward.13} parent=0 // pred_fallthru
    _
  %v17 = vld [vmem:[%s0] sm:$0xff]
  %v18 = vld [vmem:[%s0 + $0x8] sm:$0xff]
  %v19 = vld [vmem:[%s0 + $0x10] sm:$0xff]
  %v20 = vld [vmem:[%s0 + $0x18] sm:$0xff]
  %v21 = vld [vmem:[%s0 + $0x20] sm:$0xff]
  %v22 = vld [vmem:[%s0 + $0x28] sm:$0xff]
  %v23 = vld [vmem:[%s0 + $0x30] sm:$0xff]
  %v24 = vld [vmem:[%s0 + $0x38] sm:$0xff]
  %v25 = vld [vmem:[%s0 + $0x40] sm:$0xff]
  %v26 = vld [vmem:[%s0 + $0x48] sm:$0xff]
  %v27 = vld [vmem:[%s0 + $0x50] sm:$0xff]
  %v28 = vld [vmem:[%s0 + $0x58] sm:$0xff]
  %v29 = vld [vmem:[%s0 + $0x60] sm:$0xff]
  %v30 = vld [vmem:[%s0 + $0x68] sm:$0xff]
  %v31 = vld [vmem:[%s0 + $0x70] sm:$0xff]
  %v32 = vld [vmem:[%s0 + $0x78] sm:$0xff]
  %v33 = vld [vmem:[%s0 + $0x80] sm:$0xff]
  %v34 = vld [vmem:[%s0 + $0x88] sm:$0xff]
  %v35 = vld [vmem:[%s0 + $0x90] sm:$0xff]
  %v36 = vld [vmem:[%s0 + $0x98] sm:$0xff]
  %v37 = vld [vmem:[%s0 + $0xa0] sm:$0xff]
  %v38 = vld [vmem:[%s0 + $0xa8] sm:$0xff]
  %v39 = vld [vmem:[%s0 + $0xb0] sm:$0xff]
  %v40 = vld [vmem:[%s0 + $0xb8] sm:$0xff]
  %v41 = vld [vmem:[%s0 + $0xc0] sm:$0xff]
  %v42 = vld [vmem:[%s0 + $0xc8] sm:$0xff]
  %v43 = vld [vmem:[%s0 + $0xd0] sm:$0xff]
  %v44 = vld [vmem:[%s0 + $0xd8] sm:$0xff]
  %v45 = vld [vmem:[%s0 + $0xe0] sm:$0xff]
  %v46 = vld [vmem:[%s0 + $0xe8] sm:$0xff]
  %v47 = vld [vmem:[%s0 + $0xf0] sm:$0xff]
  %v48 = vld [vmem:[%s0 + $0xf8] sm:$0xff]
  %v49 = vld [vmem:[%s1] sm:$0xff]
  %v50 = vld [vmem:[%s1 + $0x8] sm:$0xff]
  %v51 = vld [vmem:[%s1 + $0x10] sm:$0xff]
  %v52 = vld [vmem:[%s1 + $0x18] sm:$0xff]
  %v53 = vld [vmem:[%s1 + $0x20] sm:$0xff]
  %v54 = vld [vmem:[%s1 + $0x28] sm:$0xff]
  %v55 = vld [vmem:[%s1 + $0x30] sm:$0xff]
  %v56 = vld [vmem:[%s1 + $0x38] sm:$0xff]
  %v57 = vld [vmem:[%s1 + $0x40] sm:$0xff]
  %v58 = vld [vmem:[%s1 + $0x48] sm:$0xff]
  %v59 = vld [vmem:[%s1 + $0x50] sm:$0xff]
  %v60 = vld [vmem:[%s1 + $0x58] sm:$0xff]
  %v61 = vld [vmem:[%s1 + $0x60] sm:$0xff]
  %v62 = vld [vmem:[%s1 + $0x68] sm:$0xff]
  %v63 = vld [vmem:[%s1 + $0x70] sm:$0xff]
  %v64 = vld [vmem:[%s1 + $0x78] sm:$0xff]
  %v65 = vld [vmem:[%s1 + $0x80] sm:$0xff]
  %v66 = vld [vmem:[%s1 + $0x88] sm:$0xff]
  %v67 = vld [vmem:[%s1 + $0x90] sm:$0xff]
  %v68 = vld [vmem:[%s1 + $0x98] sm:$0xff]
  %v69 = vld [vmem:[%s1 + $0xa0] sm:$0xff]
  %v70 = vld [vmem:[%s1 + $0xa8] sm:$0xff]
  %v71 = vld [vmem:[%s1 + $0xb0] sm:$0xff]
  %v72 = vld [vmem:[%s1 + $0xb8] sm:$0xff]
  %v73 = vld [vmem:[%s1 + $0xc0] sm:$0xff]
  %v74 = vld [vmem:[%s1 + $0xc8] sm:$0xff]
  %v75 = vld [vmem:[%s1 + $0xd0] sm:$0xff]
  %v76 = vld [vmem:[%s1 + $0xd8] sm:$0xff]
  %v77 = vld [vmem:[%s1 + $0xe0] sm:$0xff]
  %v78 = vld [vmem:[%s1 + $0xe8] sm:$0xff]
  %v79 = vld [vmem:[%s1 + $0xf0] sm:$0xff]
  %v80 = vld [vmem:[%s1 + $0xf8] sm:$0xff]
  %v81 = vld [vmem:[%s1 + $0x100] sm:$0xff]
  %v82 = vld [vmem:[%s1 + $0x108] sm:$0xff]
  %v83 = vld [vmem:[%s1 + $0x110] sm:$0xff]
  %v84 = vld [vmem:[%s1 + $0x118] sm:$0xff]
  %v85 = vld [vmem:[%s1 + $0x120] sm:$0xff]
  %v86 = vld [vmem:[%s1 + $0x128] sm:$0xff]
  %v87 = vld [vmem:[%s1 + $0x130] sm:$0xff]
  %v88 = vld [vmem:[%s1 + $0x138] sm:$0xff]
  %v89 = vld [vmem:[%s1 + $0x140] sm:$0xff]
  %v90 = vld [vmem:[%s1 + $0x148] sm:$0xff]
  %v91 = vld [vmem:[%s1 + $0x150] sm:$0xff]
  %v92 = vld [vmem:[%s1 + $0x158] sm:$0xff]
  %v93 = vld [vmem:[%s1 + $0x160] sm:$0xff]
  %v94 = vld [vmem:[%s1 + $0x168] sm:$0xff]
  %v95 = vld [vmem:[%s1 + $0x170] sm:$0xff]
  %v96 = vld [vmem:[%s1 + $0x178] sm:$0xff]
  %v97 = vld [vmem:[%s1 + $0x180] sm:$0xff]
  %v98 = vld [vmem:[%s1 + $0x188] sm:$0xff]
  %v99 = vld [vmem:[%s1 + $0x190] sm:$0xff]
  %v100 = vld [vmem:[%s1 + $0x198] sm:$0xff]
  %v101 = vld [vmem:[%s1 + $0x1a0] sm:$0xff]
  %v102 = vld [vmem:[%s1 + $0x1a8] sm:$0xff]
  %v103 = vld [vmem:[%s1 + $0x1b0] sm:$0xff]
  %v104 = vld [vmem:[%s1 + $0x1b8] sm:$0xff]
  %v105 = vld [vmem:[%s1 + $0x1c0] sm:$0xff]
  %v106 = vld [vmem:[%s1 + $0x1c8] sm:$0xff]
  %v107 = vld [vmem:[%s1 + $0x1d0] sm:$0xff]
  %v108 = vld [vmem:[%s1 + $0x1d8] sm:$0xff]
  %v109 = vld [vmem:[%s1 + $0x1e0] sm:$0xff]
  %v110 = vld [vmem:[%s1 + $0x1e8] sm:$0xff]
  %v111 = vld [vmem:[%s1 + $0x1f0] sm:$0xff]
  %v112 = vld [vmem:[%s1 + $0x1f8] sm:$0xff]
  %v113 = vld [vmem:[%s1 + $0x200] sm:$0xff]
  %v114 = vld [vmem:[%s1 + $0x208] sm:$0xff]
  %v115 = vld [vmem:[%s1 + $0x210] sm:$0xff]
  %v116 = vld [vmem:[%s1 + $0x218] sm:$0xff]
  %v117 = vld [vmem:[%s1 + $0x220] sm:$0xff]
  %v118 = vld [vmem:[%s1 + $0x228] sm:$0xff]
  %v119 = vld [vmem:[%s1 + $0x230] sm:$0xff]
  %v120 = vld [vmem:[%s1 + $0x238] sm:$0xff]
  %v121 = vld [vmem:[%s1 + $0x240] sm:$0xff]
  %v122 = vld [vmem:[%s1 + $0x248] sm:$0xff]
  %v123 = vld [vmem:[%s1 + $0x250] sm:$0xff]
  %v124 = vld [vmem:[%s1 + $0x258] sm:$0xff]
  %v125 = vld [vmem:[%s1 + $0x260] sm:$0xff]
  %v126 = vld [vmem:[%s1 + $0x268] sm:$0xff]
  %v127 = vld [vmem:[%s1 + $0x270] sm:$0xff]
  %v128 = vld [vmem:[%s1 + $0x278] sm:$0xff]
  %v129 = vld [vmem:[%s1 + $0x280] sm:$0xff]
  %v130 = vld [vmem:[%s1 + $0x288] sm:$0xff]
  %v131 = vld [vmem:[%s1 + $0x290] sm:$0xff]
  %v132 = vld [vmem:[%s1 + $0x298] sm:$0xff]
  %v133 = vld [vmem:[%s1 + $0x2a0] sm:$0xff]
  %v134 = vld [vmem:[%s1 + $0x2a8] sm:$0xff]
  %v135 = vld [vmem:[%s1 + $0x2b0] sm:$0xff]
  %v136 = vld [vmem:[%s1 + $0x2b8] sm:$0xff]
  %v137 = vld [vmem:[%s1 + $0x2c0] sm:$0xff]
  %v138 = vld [vmem:[%s1 + $0x2c8] sm:$0xff]
  %v139 = vld [vmem:[%s1 + $0x2d0] sm:$0xff]
  %v140 = vld [vmem:[%s1 + $0x2d8] sm:$0xff]
  %v141 = vld [vmem:[%s1 + $0x2e0] sm:$0xff]
  %v142 = vld [vmem:[%s1 + $0x2e8] sm:$0xff]
  %v143 = vld [vmem:[%s1 + $0x2f0] sm:$0xff]
  %v144 = vld [vmem:[%s1 + $0x2f8] sm:$0xff]
  %v145 = vld [vmem:[%s1 + $0x300] sm:$0xff]
  %v146 = vld [vmem:[%s1 + $0x308] sm:$0xff]
  %v147 = vld [vmem:[%s1 + $0x310] sm:$0xff]
  %v148 = vld [vmem:[%s1 + $0x318] sm:$0xff]
  %v149 = vld [vmem:[%s1 + $0x320] sm:$0xff]
  %v150 = vld [vmem:[%s1 + $0x328] sm:$0xff]
  %v151 = vld [vmem:[%s1 + $0x330] sm:$0xff]
  %v152 = vld [vmem:[%s1 + $0x338] sm:$0xff]
  %v153 = vld [vmem:[%s1 + $0x340] sm:$0xff]
  %v154 = vld [vmem:[%s1 + $0x348] sm:$0xff]
  %v155 = vld [vmem:[%s1 + $0x350] sm:$0xff]
  %v156 = vld [vmem:[%s1 + $0x358] sm:$0xff]
  %v157 = vld [vmem:[%s1 + $0x360] sm:$0xff]
  %v158 = vld [vmem:[%s1 + $0x368] sm:$0xff]
  %v159 = vld [vmem:[%s1 + $0x370] sm:$0xff]
  %v160 = vld [vmem:[%s1 + $0x378] sm:$0xff]
  %v161 = vld [vmem:[%s1 + $0x380] sm:$0xff]
  %v162 = vld [vmem:[%s1 + $0x388] sm:$0xff]
  %v163 = vld [vmem:[%s1 + $0x390] sm:$0xff]
  %v164 = vld [vmem:[%s1 + $0x398] sm:$0xff]
  %v165 = vld [vmem:[%s1 + $0x3a0] sm:$0xff]
  %v166 = vld [vmem:[%s1 + $0x3a8] sm:$0xff]
  %v167 = vld [vmem:[%s1 + $0x3b0] sm:$0xff]
  %v168 = vld [vmem:[%s1 + $0x3b8] sm:$0xff]
  %v169 = vld [vmem:[%s1 + $0x3c0] sm:$0xff]
  %v170 = vld [vmem:[%s1 + $0x3c8] sm:$0xff]
  %v171 = vld [vmem:[%s1 + $0x3d0] sm:$0xff]
  %v172 = vld [vmem:[%s1 + $0x3d8] sm:$0xff]
  %v173 = vld [vmem:[%s1 + $0x3e0] sm:$0xff]
  %v174 = vld [vmem:[%s1 + $0x3e8] sm:$0xff]
  %v175 = vld [vmem:[%s1 + $0x3f0] sm:$0xff]
  %v176 = vld [vmem:[%s1 + $0x3f8] sm:$0xff]
  %v177 = vld [vmem:[%s1 + $0x400] sm:$0xff]
  %v178 = vld [vmem:[%s1 + $0x408] sm:$0xff]
  %v179 = vld [vmem:[%s1 + $0x410] sm:$0xff]
  %v180 = vld [vmem:[%s1 + $0x418] sm:$0xff]
  %v181 = vld [vmem:[%s1 + $0x420] sm:$0xff]
  %v182 = vld [vmem:[%s1 + $0x428] sm:$0xff]
  %v183 = vld [vmem:[%s1 + $0x430] sm:$0xff]
  %v184 = vld [vmem:[%s1 + $0x438] sm:$0xff]
  %v185 = vld [vmem:[%s1 + $0x440] sm:$0xff]
  %v186 = vld [vmem:[%s1 + $0x448] sm:$0xff]
  %v187 = vld [vmem:[%s1 + $0x450] sm:$0xff]
  %v188 = vld [vmem:[%s1 + $0x458] sm:$0xff]
  %v189 = vld [vmem:[%s1 + $0x460] sm:$0xff]
  %v190 = vld [vmem:[%s1 + $0x468] sm:$0xff]
  %v191 = vld [vmem:[%s1 + $0x470] sm:$0xff]
  %v192 = vld [vmem:[%s1 + $0x478] sm:$0xff]
  %v193 = vld [vmem:[%s1 + $0x480] sm:$0xff]
  %v194 = vld [vmem:[%s1 + $0x488] sm:$0xff]
  %v195 = vld [vmem:[%s1 + $0x490] sm:$0xff]
  %v196 = vld [vmem:[%s1 + $0x498] sm:$0xff]
  %v197 = vld [vmem:[%s1 + $0x4a0] sm:$0xff]
  %v198 = vld [vmem:[%s1 + $0x4a8] sm:$0xff]
  %v199 = vld [vmem:[%s1 + $0x4b0] sm:$0xff]
  %v200 = vld [vmem:[%s1 + $0x4b8] sm:$0xff]
  %v201 = vld [vmem:[%s1 + $0x4c0] sm:$0xff]
  %v202 = vld [vmem:[%s1 + $0x4c8] sm:$0xff]
  %v203 = vld [vmem:[%s1 + $0x4d0] sm:$0xff]
  %v204 = vld [vmem:[%s1 + $0x4d8] sm:$0xff]
  %v205 = vld [vmem:[%s1 + $0x4e0] sm:$0xff]
  %v206 = vld [vmem:[%s1 + $0x4e8] sm:$0xff]
  %v207 = vld [vmem:[%s1 + $0x4f0] sm:$0xff]
  %v208 = vld [vmem:[%s1 + $0x4f8] sm:$0xff]
  %v209 = vld [vmem:[%s1 + $0x500] sm:$0xff]
  %v210 = vld [vmem:[%s1 + $0x508] sm:$0xff]
  %v211 = vld [vmem:[%s1 + $0x510] sm:$0xff]
  %v212 = vld [vmem:[%s1 + $0x518] sm:$0xff]
  %v213 = vld [vmem:[%s1 + $0x520] sm:$0xff]
  %v214 = vld [vmem:[%s1 + $0x528] sm:$0xff]
  %v215 = vld [vmem:[%s1 + $0x530] sm:$0xff]
  %v216 = vld [vmem:[%s1 + $0x538] sm:$0xff]
  %v217 = vld [vmem:[%s1 + $0x540] sm:$0xff]
  %v218 = vld [vmem:[%s1 + $0x548] sm:$0xff]
  %v219 = vld [vmem:[%s1 + $0x550] sm:$0xff]
  %v220 = vld [vmem:[%s1 + $0x558] sm:$0xff]
  %v221 = vld [vmem:[%s1 + $0x560] sm:$0xff]
  %v222 = vld [vmem:[%s1 + $0x568] sm:$0xff]
  %v223 = vld [vmem:[%s1 + $0x570] sm:$0xff]
  %v224 = vld [vmem:[%s1 + $0x578] sm:$0xff]
  %v225 = vld [vmem:[%s1 + $0x580] sm:$0xff]
  %v226 = vld [vmem:[%s1 + $0x588] sm:$0xff]
  %v227 = vld [vmem:[%s1 + $0x590] sm:$0xff]
  %v228 = vld [vmem:[%s1 + $0x598] sm:$0xff]
  %v229 = vld [vmem:[%s1 + $0x5a0] sm:$0xff]
  %v230 = vld [vmem:[%s1 + $0x5a8] sm:$0xff]
  %v231 = vld [vmem:[%s1 + $0x5b0] sm:$0xff]
  %v232 = vld [vmem:[%s1 + $0x5b8] sm:$0xff]
  %v233 = vld [vmem:[%s1 + $0x5c0] sm:$0xff]
  %v234 = vld [vmem:[%s1 + $0x5c8] sm:$0xff]
  %v235 = vld [vmem:[%s1 + $0x5d0] sm:$0xff]
  %v236 = vld [vmem:[%s1 + $0x5d8] sm:$0xff]
  %v237 = vld [vmem:[%s1 + $0x5e0] sm:$0xff]
  %v238 = vld [vmem:[%s1 + $0x5e8] sm:$0xff]
  %v239 = vld [vmem:[%s1 + $0x5f0] sm:$0xff]
  %v240 = vld [vmem:[%s1 + $0x5f8] sm:$0xff]
  %v241 = vld [vmem:[%s1 + $0x600] sm:$0xff]
  %v242 = vld [vmem:[%s1 + $0x608] sm:$0xff]
  %v243 = vld [vmem:[%s1 + $0x610] sm:$0xff]
  %v244 = vld [vmem:[%s1 + $0x618] sm:$0xff]
  %v245 = vld [vmem:[%s1 + $0x620] sm:$0xff]
  %v246 = vld [vmem:[%s1 + $0x628] sm:$0xff]
  %v247 = vld [vmem:[%s1 + $0x630] sm:$0xff]
  %v248 = vld [vmem:[%s1 + $0x638] sm:$0xff]
  %v249 = vld [vmem:[%s1 + $0x640] sm:$0xff]
  %v250 = vld [vmem:[%s1 + $0x648] sm:$0xff]
  %v251 = vld [vmem:[%s1 + $0x650] sm:$0xff]
  %v252 = vld [vmem:[%s1 + $0x658] sm:$0xff]
  %v253 = vld [vmem:[%s1 + $0x660] sm:$0xff]
  %v254 = vld [vmem:[%s1 + $0x668] sm:$0xff]
  %v255 = vld [vmem:[%s1 + $0x670] sm:$0xff]
  %v256 = vld [vmem:[%s1 + $0x678] sm:$0xff]
  %v257 = vld [vmem:[%s1 + $0x680] sm:$0xff]
  %v258 = vld [vmem:[%s1 + $0x688] sm:$0xff]
  %v259 = vld [vmem:[%s1 + $0x690] sm:$0xff]
  %v260 = vld [vmem:[%s1 + $0x698] sm:$0xff]
  %v261 = vld [vmem:[%s1 + $0x6a0] sm:$0xff]
  %v262 = vld [vmem:[%s1 + $0x6a8] sm:$0xff]
  %v263 = vld [vmem:[%s1 + $0x6b0] sm:$0xff]
  %v264 = vld [vmem:[%s1 + $0x6b8] sm:$0xff]
  %v265 = vld [vmem:[%s1 + $0x6c0] sm:$0xff]
  %v266 = vld [vmem:[%s1 + $0x6c8] sm:$0xff]
  %v267 = vld [vmem:[%s1 + $0x6d0] sm:$0xff]
  %v268 = vld [vmem:[%s1 + $0x6d8] sm:$0xff]
  %v269 = vld [vmem:[%s1 + $0x6e0] sm:$0xff]
  %v270 = vld [vmem:[%s1 + $0x6e8] sm:$0xff]
  %v271 = vld [vmem:[%s1 + $0x6f0] sm:$0xff]
  %v272 = vld [vmem:[%s1 + $0x6f8] sm:$0xff]
  %v273 = vld [vmem:[%s1 + $0x700] sm:$0xff]
  %v274 = vld [vmem:[%s1 + $0x708] sm:$0xff]
  %v275 = vld [vmem:[%s1 + $0x710] sm:$0xff]
  %v276 = vld [vmem:[%s1 + $0x718] sm:$0xff]
  %v277 = vld [vmem:[%s1 + $0x720] sm:$0xff]
  %v278 = vld [vmem:[%s1 + $0x728] sm:$0xff]
  %v279 = vld [vmem:[%s1 + $0x730] sm:$0xff]
  %v280 = vld [vmem:[%s1 + $0x738] sm:$0xff]
  %v281 = vld [vmem:[%s1 + $0x740] sm:$0xff]
  %v282 = vld [vmem:[%s1 + $0x748] sm:$0xff]
  %v283 = vld [vmem:[%s1 + $0x750] sm:$0xff]
  %v284 = vld [vmem:[%s1 + $0x758] sm:$0xff]
  %v285 = vld [vmem:[%s1 + $0x760] sm:$0xff]
  %v286 = vld [vmem:[%s1 + $0x768] sm:$0xff]
  %v287 = vld [vmem:[%s1 + $0x770] sm:$0xff]
  %v288 = vld [vmem:[%s1 + $0x778] sm:$0xff]
  %v289 = vld [vmem:[%s1 + $0x780] sm:$0xff]
  %v290 = vld [vmem:[%s1 + $0x788] sm:$0xff]
  %v291 = vld [vmem:[%s1 + $0x790] sm:$0xff]
  %v292 = vld [vmem:[%s1 + $0x798] sm:$0xff]
  %v293 = vld [vmem:[%s1 + $0x7a0] sm:$0xff]
  %v294 = vld [vmem:[%s1 + $0x7a8] sm:$0xff]
  %v295 = vld [vmem:[%s1 + $0x7b0] sm:$0xff]
  %v296 = vld [vmem:[%s1 + $0x7b8] sm:$0xff]
  %v297 = vld [vmem:[%s1 + $0x7c0] sm:$0xff]
  %v298 = vld [vmem:[%s1 + $0x7c8] sm:$0xff]
  %v299 = vld [vmem:[%s1 + $0x7d0] sm:$0xff]
  %v300 = vld [vmem:[%s1 + $0x7d8] sm:$0xff]
  %v301 = vld [vmem:[%s1 + $0x7e0] sm:$0xff]
  %v302 = vld [vmem:[%s1 + $0x7e8] sm:$0xff]
  %v303 = vld [vmem:[%s1 + $0x7f0] sm:$0xff]
  %v304 = vld [vmem:[%s1 + $0x7f8] sm:$0xff]
  %v305 = vld [vmem:[%s2] sm:$0xff]
  %v306 = vld [vmem:[%s2 + $0x8] sm:$0xff]
  %v307 = vld [vmem:[%s3] sm:$0xff]
  %309 = vset.pattern.permute.xlu0 0
  %310 = vperm.xlu0 %309, %v305
  %v311 = vpop.permute.xlu0 %310
  %314 = vset.pattern.permute.xlu0 0
  %315 = vperm.xlu0 %314, %v306
  %v316 = vpop.permute.xlu0 %315
  %318 = vmatpush.msra.mxu0 %v64
  %319 = vmatpush.msra.mxu0 %v63
  %320 = vmatpush.msra.mxu0 %v62
  %321 = vmatpush.msra.mxu0 %v61
  %322 = vmatpush.msra.mxu0 %v60
  %323 = vmatpush.msra.mxu0 %v59
  %324 = vmatpush.msra.mxu0 %v58
  %325 = vmatpush.msra.mxu0 %v57
  %326 = vmatpush.msra.mxu0 %v56
  %327 = vmatpush.msra.mxu0 %v55
  %328 = vmatpush.msra.mxu0 %v54
  %329 = vmatpush.msra.mxu0 %v53
  %330 = vmatpush.msra.mxu0 %v52
  %331 = vmatpush.msra.mxu0 %v51
  %332 = vmatpush.msra.mxu0 %v50
  %333 = vmatpush.msra.mxu0 %v49
  %334 = vmatmul.f32.gmra.mxu0 %v17
  %v335 = vpop.f32.mrf.mxu0
  %v336 = vadd.f32 %v311, %v335
  %337 = vmatmul.f32.gmra.mxu0 %v33
  %v338 = vpop.f32.mrf.mxu0
  %v339 = vadd.f32 %v316, %v338
  %340 = vdwg.mxu0
  %341 = vmatpush.msra.mxu0 %v80
  %342 = vmatpush.msra.mxu0 %v79
  %343 = vmatpush.msra.mxu0 %v78
  %344 = vmatpush.msra.mxu0 %v77
  %345 = vmatpush.msra.mxu0 %v76
  %346 = vmatpush.msra.mxu0 %v75
  %347 = vmatpush.msra.mxu0 %v74
  %348 = vmatpush.msra.mxu0 %v73
  %349 = vmatpush.msra.mxu0 %v72
  %350 = vmatpush.msra.mxu0 %v71
  %351 = vmatpush.msra.mxu0 %v70
  %352 = vmatpush.msra.mxu0 %v69
  %353 = vmatpush.msra.mxu0 %v68
  %354 = vmatpush.msra.mxu0 %v67
  %355 = vmatpush.msra.mxu0 %v66
  %356 = vmatpush.msra.mxu0 %v65
  %357 = vmatmul.f32.gmra.mxu0 %v18
  %v358 = vpop.f32.mrf.mxu0
  %v359 = vadd.f32 %v336, %v358
  %360 = vmatmul.f32.gmra.mxu0 %v34
  %v361 = vpop.f32.mrf.mxu0
  %v362 = vadd.f32 %v339, %v361
  %363 = vdwg.mxu0
  %364 = vmatpush.msra.mxu0 %v96
  %365 = vmatpush.msra.mxu0 %v95
  %366 = vmatpush.msra.mxu0 %v94
  %367 = vmatpush.msra.mxu0 %v93
  %368 = vmatpush.msra.mxu0 %v92
  %369 = vmatpush.msra.mxu0 %v91
  %370 = vmatpush.msra.mxu0 %v90
  %371 = vmatpush.msra.mxu0 %v89
  %372 = vmatpush.msra.mxu0 %v88
  %373 = vmatpush.msra.mxu0 %v87
  %374 = vmatpush.msra.mxu0 %v86
  %375 = vmatpush.msra.mxu0 %v85
  %376 = vmatpush.msra.mxu0 %v84
  %377 = vmatpush.msra.mxu0 %v83
  %378 = vmatpush.msra.mxu0 %v82
  %379 = vmatpush.msra.mxu0 %v81
  %380 = vmatmul.f32.gmra.mxu0 %v19
  %v381 = vpop.f32.mrf.mxu0
  %v382 = vadd.f32 %v359, %v381
  %383 = vmatmul.f32.gmra.mxu0 %v35
  %v384 = vpop.f32.mrf.mxu0
  %v385 = vadd.f32 %v362, %v384
  %386 = vdwg.mxu0
  %387 = vmatpush.msra.mxu0 %v112
  %388 = vmatpush.msra.mxu0 %v111
  %389 = vmatpush.msra.mxu0 %v110
  %390 = vmatpush.msra.mxu0 %v109
  %391 = vmatpush.msra.mxu0 %v108
  %392 = vmatpush.msra.mxu0 %v107
  %393 = vmatpush.msra.mxu0 %v106
  %394 = vmatpush.msra.mxu0 %v105
  %395 = vmatpush.msra.mxu0 %v104
  %396 = vmatpush.msra.mxu0 %v103
  %397 = vmatpush.msra.mxu0 %v102
  %398 = vmatpush.msra.mxu0 %v101
  %399 = vmatpush.msra.mxu0 %v100
  %400 = vmatpush.msra.mxu0 %v99
  %401 = vmatpush.msra.mxu0 %v98
  %402 = vmatpush.msra.mxu0 %v97
  %403 = vmatmul.f32.gmra.mxu0 %v20
  %v404 = vpop.f32.mrf.mxu0
  %v405 = vadd.f32 %v382, %v404
  %406 = vmatmul.f32.gmra.mxu0 %v36
  %v407 = vpop.f32.mrf.mxu0
  %v408 = vadd.f32 %v385, %v407
  %409 = vdwg.mxu0
  %410 = vmatpush.msra.mxu0 %v128
  %411 = vmatpush.msra.mxu0 %v127
  %412 = vmatpush.msra.mxu0 %v126
  %413 = vmatpush.msra.mxu0 %v125
  %414 = vmatpush.msra.mxu0 %v124
  %415 = vmatpush.msra.mxu0 %v123
  %416 = vmatpush.msra.mxu0 %v122
  %417 = vmatpush.msra.mxu0 %v121
  %418 = vmatpush.msra.mxu0 %v120
  %419 = vmatpush.msra.mxu0 %v119
  %420 = vmatpush.msra.mxu0 %v118
  %421 = vmatpush.msra.mxu0 %v117
  %422 = vmatpush.msra.mxu0 %v116
  %423 = vmatpush.msra.mxu0 %v115
  %424 = vmatpush.msra.mxu0 %v114
  %425 = vmatpush.msra.mxu0 %v113
  %426 = vmatmul.f32.gmra.mxu0 %v21
  %v427 = vpop.f32.mrf.mxu0
  %v428 = vadd.f32 %v405, %v427
  %429 = vmatmul.f32.gmra.mxu0 %v37
  %v430 = vpop.f32.mrf.mxu0
  %v431 = vadd.f32 %v408, %v430
  %432 = vdwg.mxu0
  %433 = vmatpush.msra.mxu0 %v144
  %434 = vmatpush.msra.mxu0 %v143
  %435 = vmatpush.msra.mxu0 %v142
  %436 = vmatpush.msra.mxu0 %v141
  %437 = vmatpush.msra.mxu0 %v140
  %438 = vmatpush.msra.mxu0 %v139
  %439 = vmatpush.msra.mxu0 %v138
  %440 = vmatpush.msra.mxu0 %v137
  %441 = vmatpush.msra.mxu0 %v136
  %442 = vmatpush.msra.mxu0 %v135
  %443 = vmatpush.msra.mxu0 %v134
  %444 = vmatpush.msra.mxu0 %v133
  %445 = vmatpush.msra.mxu0 %v132
  %446 = vmatpush.msra.mxu0 %v131
  %447 = vmatpush.msra.mxu0 %v130
  %448 = vmatpush.msra.mxu0 %v129
  %449 = vmatmul.f32.gmra.mxu0 %v22
  %v450 = vpop.f32.mrf.mxu0
  %v451 = vadd.f32 %v428, %v450
  %452 = vmatmul.f32.gmra.mxu0 %v38
  %v453 = vpop.f32.mrf.mxu0
  %v454 = vadd.f32 %v431, %v453
  %455 = vdwg.mxu0
  %456 = vmatpush.msra.mxu0 %v160
  %457 = vmatpush.msra.mxu0 %v159
  %458 = vmatpush.msra.mxu0 %v158
  %459 = vmatpush.msra.mxu0 %v157
  %460 = vmatpush.msra.mxu0 %v156
  %461 = vmatpush.msra.mxu0 %v155
  %462 = vmatpush.msra.mxu0 %v154
  %463 = vmatpush.msra.mxu0 %v153
  %464 = vmatpush.msra.mxu0 %v152
  %465 = vmatpush.msra.mxu0 %v151
  %466 = vmatpush.msra.mxu0 %v150
  %467 = vmatpush.msra.mxu0 %v149
  %468 = vmatpush.msra.mxu0 %v148
  %469 = vmatpush.msra.mxu0 %v147
  %470 = vmatpush.msra.mxu0 %v146
  %471 = vmatpush.msra.mxu0 %v145
  %472 = vmatmul.f32.gmra.mxu0 %v23
  %v473 = vpop.f32.mrf.mxu0
  %v474 = vadd.f32 %v451, %v473
  %475 = vmatmul.f32.gmra.mxu0 %v39
  %v476 = vpop.f32.mrf.mxu0
  %v477 = vadd.f32 %v454, %v476
  %478 = vdwg.mxu0
  %479 = vmatpush.msra.mxu0 %v176
  %480 = vmatpush.msra.mxu0 %v175
  %481 = vmatpush.msra.mxu0 %v174
  %482 = vmatpush.msra.mxu0 %v173
  %483 = vmatpush.msra.mxu0 %v172
  %484 = vmatpush.msra.mxu0 %v171
  %485 = vmatpush.msra.mxu0 %v170
  %486 = vmatpush.msra.mxu0 %v169
  %487 = vmatpush.msra.mxu0 %v168
  %488 = vmatpush.msra.mxu0 %v167
  %489 = vmatpush.msra.mxu0 %v166
  %490 = vmatpush.msra.mxu0 %v165
  %491 = vmatpush.msra.mxu0 %v164
  %492 = vmatpush.msra.mxu0 %v163
  %493 = vmatpush.msra.mxu0 %v162
  %494 = vmatpush.msra.mxu0 %v161
  %495 = vmatmul.f32.gmra.mxu0 %v24
  %v496 = vpop.f32.mrf.mxu0
  %v497 = vadd.f32 %v474, %v496
  %498 = vmatmul.f32.gmra.mxu0 %v40
  %v499 = vpop.f32.mrf.mxu0
  %v500 = vadd.f32 %v477, %v499
  %501 = vdwg.mxu0
  %502 = vmatpush.msra.mxu0 %v192
  %503 = vmatpush.msra.mxu0 %v191
  %504 = vmatpush.msra.mxu0 %v190
  %505 = vmatpush.msra.mxu0 %v189
  %506 = vmatpush.msra.mxu0 %v188
  %507 = vmatpush.msra.mxu0 %v187
  %508 = vmatpush.msra.mxu0 %v186
  %509 = vmatpush.msra.mxu0 %v185
  %510 = vmatpush.msra.mxu0 %v184
  %511 = vmatpush.msra.mxu0 %v183
  %512 = vmatpush.msra.mxu0 %v182
  %513 = vmatpush.msra.mxu0 %v181
  %514 = vmatpush.msra.mxu0 %v180
  %515 = vmatpush.msra.mxu0 %v179
  %516 = vmatpush.msra.mxu0 %v178
  %517 = vmatpush.msra.mxu0 %v177
  %518 = vmatmul.f32.gmra.mxu0 %v25
  %v519 = vpop.f32.mrf.mxu0
  %v520 = vadd.f32 %v497, %v519
  %521 = vmatmul.f32.gmra.mxu0 %v41
  %v522 = vpop.f32.mrf.mxu0
  %v523 = vadd.f32 %v500, %v522
  %524 = vdwg.mxu0
  %525 = vmatpush.msra.mxu0 %v208
  %526 = vmatpush.msra.mxu0 %v207
  %527 = vmatpush.msra.mxu0 %v206
  %528 = vmatpush.msra.mxu0 %v205
  %529 = vmatpush.msra.mxu0 %v204
  %530 = vmatpush.msra.mxu0 %v203
  %531 = vmatpush.msra.mxu0 %v202
  %532 = vmatpush.msra.mxu0 %v201
  %533 = vmatpush.msra.mxu0 %v200
  %534 = vmatpush.msra.mxu0 %v199
  %535 = vmatpush.msra.mxu0 %v198
  %536 = vmatpush.msra.mxu0 %v197
  %537 = vmatpush.msra.mxu0 %v196
  %538 = vmatpush.msra.mxu0 %v195
  %539 = vmatpush.msra.mxu0 %v194
  %540 = vmatpush.msra.mxu0 %v193
  %541 = vmatmul.f32.gmra.mxu0 %v26
  %v542 = vpop.f32.mrf.mxu0
  %v543 = vadd.f32 %v520, %v542
  %544 = vmatmul.f32.gmra.mxu0 %v42
  %v545 = vpop.f32.mrf.mxu0
  %v546 = vadd.f32 %v523, %v545
  %547 = vdwg.mxu0
  %548 = vmatpush.msra.mxu0 %v224
  %549 = vmatpush.msra.mxu0 %v223
  %550 = vmatpush.msra.mxu0 %v222
  %551 = vmatpush.msra.mxu0 %v221
  %552 = vmatpush.msra.mxu0 %v220
  %553 = vmatpush.msra.mxu0 %v219
  %554 = vmatpush.msra.mxu0 %v218
  %555 = vmatpush.msra.mxu0 %v217
  %556 = vmatpush.msra.mxu0 %v216
  %557 = vmatpush.msra.mxu0 %v215
  %558 = vmatpush.msra.mxu0 %v214
  %559 = vmatpush.msra.mxu0 %v213
  %560 = vmatpush.msra.mxu0 %v212
  %561 = vmatpush.msra.mxu0 %v211
  %562 = vmatpush.msra.mxu0 %v210
  %563 = vmatpush.msra.mxu0 %v209
  %564 = vmatmul.f32.gmra.mxu0 %v27
  %v565 = vpop.f32.mrf.mxu0
  %v566 = vadd.f32 %v543, %v565
  %567 = vmatmul.f32.gmra.mxu0 %v43
  %v568 = vpop.f32.mrf.mxu0
  %v569 = vadd.f32 %v546, %v568
  %570 = vdwg.mxu0
  %571 = vmatpush.msra.mxu0 %v240
  %572 = vmatpush.msra.mxu0 %v239
  %573 = vmatpush.msra.mxu0 %v238
  %574 = vmatpush.msra.mxu0 %v237
  %575 = vmatpush.msra.mxu0 %v236
  %576 = vmatpush.msra.mxu0 %v235
  %577 = vmatpush.msra.mxu0 %v234
  %578 = vmatpush.msra.mxu0 %v233
  %579 = vmatpush.msra.mxu0 %v232
  %580 = vmatpush.msra.mxu0 %v231
  %581 = vmatpush.msra.mxu0 %v230
  %582 = vmatpush.msra.mxu0 %v229
  %583 = vmatpush.msra.mxu0 %v228
  %584 = vmatpush.msra.mxu0 %v227
  %585 = vmatpush.msra.mxu0 %v226
  %586 = vmatpush.msra.mxu0 %v225
  %587 = vmatmul.f32.gmra.mxu0 %v28
  %v588 = vpop.f32.mrf.mxu0
  %v589 = vadd.f32 %v566, %v588
  %590 = vmatmul.f32.gmra.mxu0 %v44
  %v591 = vpop.f32.mrf.mxu0
  %v592 = vadd.f32 %v569, %v591
  %593 = vdwg.mxu0
  %594 = vmatpush.msra.mxu0 %v256
  %595 = vmatpush.msra.mxu0 %v255
  %596 = vmatpush.msra.mxu0 %v254
  %597 = vmatpush.msra.mxu0 %v253
  %598 = vmatpush.msra.mxu0 %v252
  %599 = vmatpush.msra.mxu0 %v251
  %600 = vmatpush.msra.mxu0 %v250
  %601 = vmatpush.msra.mxu0 %v249
  %602 = vmatpush.msra.mxu0 %v248
  %603 = vmatpush.msra.mxu0 %v247
  %604 = vmatpush.msra.mxu0 %v246
  %605 = vmatpush.msra.mxu0 %v245
  %606 = vmatpush.msra.mxu0 %v244
  %607 = vmatpush.msra.mxu0 %v243
  %608 = vmatpush.msra.mxu0 %v242
  %609 = vmatpush.msra.mxu0 %v241
  %610 = vmatmul.f32.gmra.mxu0 %v29
  %v611 = vpop.f32.mrf.mxu0
  %v612 = vadd.f32 %v589, %v611
  %613 = vmatmul.f32.gmra.mxu0 %v45
  %v614 = vpop.f32.mrf.mxu0
  %v615 = vadd.f32 %v592, %v614
  %616 = vdwg.mxu0
  %617 = vmatpush.msra.mxu0 %v272
  %618 = vmatpush.msra.mxu0 %v271
  %619 = vmatpush.msra.mxu0 %v270
  %620 = vmatpush.msra.mxu0 %v269
  %621 = vmatpush.msra.mxu0 %v268
  %622 = vmatpush.msra.mxu0 %v267
  %623 = vmatpush.msra.mxu0 %v266
  %624 = vmatpush.msra.mxu0 %v265
  %625 = vmatpush.msra.mxu0 %v264
  %626 = vmatpush.msra.mxu0 %v263
  %627 = vmatpush.msra.mxu0 %v262
  %628 = vmatpush.msra.mxu0 %v261
  %629 = vmatpush.msra.mxu0 %v260
  %630 = vmatpush.msra.mxu0 %v259
  %631 = vmatpush.msra.mxu0 %v258
  %632 = vmatpush.msra.mxu0 %v257
  %633 = vmatmul.f32.gmra.mxu0 %v30
  %v634 = vpop.f32.mrf.mxu0
  %v635 = vadd.f32 %v612, %v634
  %636 = vmatmul.f32.gmra.mxu0 %v46
  %v637 = vpop.f32.mrf.mxu0
  %v638 = vadd.f32 %v615, %v637
  %639 = vdwg.mxu0
  %640 = vmatpush.msra.mxu0 %v288
  %641 = vmatpush.msra.mxu0 %v287
  %642 = vmatpush.msra.mxu0 %v286
  %643 = vmatpush.msra.mxu0 %v285
  %644 = vmatpush.msra.mxu0 %v284
  %645 = vmatpush.msra.mxu0 %v283
  %646 = vmatpush.msra.mxu0 %v282
  %647 = vmatpush.msra.mxu0 %v281
  %648 = vmatpush.msra.mxu0 %v280
  %649 = vmatpush.msra.mxu0 %v279
  %650 = vmatpush.msra.mxu0 %v278
  %651 = vmatpush.msra.mxu0 %v277
  %652 = vmatpush.msra.mxu0 %v276
  %653 = vmatpush.msra.mxu0 %v275
  %654 = vmatpush.msra.mxu0 %v274
  %655 = vmatpush.msra.mxu0 %v273
  %656 = vmatmul.f32.gmra.mxu0 %v31
  %v657 = vpop.f32.mrf.mxu0
  %v658 = vadd.f32 %v635, %v657
  %659 = vmatmul.f32.gmra.mxu0 %v47
  %v660 = vpop.f32.mrf.mxu0
  %v661 = vadd.f32 %v638, %v660
  %662 = vdwg.mxu0
  %663 = vmatpush.msra.mxu0 %v304
  %664 = vmatpush.msra.mxu0 %v303
  %665 = vmatpush.msra.mxu0 %v302
  %666 = vmatpush.msra.mxu0 %v301
  %667 = vmatpush.msra.mxu0 %v300
  %668 = vmatpush.msra.mxu0 %v299
  %669 = vmatpush.msra.mxu0 %v298
  %670 = vmatpush.msra.mxu0 %v297
  %671 = vmatpush.msra.mxu0 %v296
  %672 = vmatpush.msra.mxu0 %v295
  %673 = vmatpush.msra.mxu0 %v294
  %674 = vmatpush.msra.mxu0 %v293
  %675 = vmatpush.msra.mxu0 %v292
  %676 = vmatpush.msra.mxu0 %v291
  %677 = vmatpush.msra.mxu0 %v290
  %678 = vmatpush.msra.mxu0 %v289
  %679 = vmatmul.f32.gmra.mxu0 %v32
  %v680 = vpop.f32.mrf.mxu0
  %v681 = vadd.f32 %v658, %v680
  %682 = vmatmul.f32.gmra.mxu0 %v48
  %v683 = vpop.f32.mrf.mxu0
  %v684 = vadd.f32 %v661, %v683
  %685 = vdwg.mxu0
  %v686 = vmul.f32 %v684, 0.5
  %v687 = vmul.f32 %v686, 1.442695
  %v688 = vpow.pop %v687
  %v689 = vmul.f32 %v307, %v688
  %v690 = vadd.f32 %v681, %v689
  %vm691 = vcmask 15360
  %692 = vst.msk [vmem:[%s4] sm:$0xff] %vm691, %v690
  // Predicated region
  $region18: #{generator_forward.13} parent=0 // pred_check
    _
  $region19: #{generator_forward.13} parent=0 // pred_check_branch
    %694 = sbr.rel (0) target = $region21
  $region20: #{generator_forward.13} parent=0 // pred_region
    _
  $region21: #{generator_forward.13} parent=0 // pred_fallthru
    _
  // Predicated region
  $region22: #{generator_forward.13} parent=0 // pred_check
    _
  $region23: #{generator_forward.13} parent=0 // pred_check_branch
    %696 = sbr.rel (0) target = $region25
  $region24: #{generator_forward.13} parent=0 // pred_region
    _
  $region25: #{generator_forward.13} parent=0 // pred_fallthru
    _

// kernel: generator_forward.14
$region0: #{generator_forward.14}
  #allocation0 [shape = 'u32[]', space=smem, size = 0x4, offset = 0x4, fixed_abs, tag = 'smem constant byte address 0x4 - core index']
  #allocation1 [shape = 'u32[72,128]{1,0:T(1,128)}', space=vmem, size = 0x9000, scoped, tag = 'internal scratch']
  %s0 = inlined_call_operand.vmem [shape: f32[16,32], index: 0, kind: input, shape index: {}]
  %s1 = inlined_call_operand.vmem [shape: f32[32,8], index: 1, kind: input, shape index: {}]
  %s2 = inlined_call_operand.vmem [shape: f32[16,1], index: 2, kind: input, shape index: {}]
  %s3 = inlined_call_operand.vmem [shape: f32[16,1], index: 3, kind: input, shape index: {}]
  %s4 = inlined_call_operand.vmem [shape: f32[16,1], index: 4, kind: input, shape index: {}]
  %s5 = inlined_call_operand.vmem [shape: f32[16,8], index: 5, kind: output, shape index: {}]
  %s6 = sld [smem:[#allocation0]]
  $region30: #{generator_forward.14} parent=0
    _
  %s8 = ssub.s32 1, %s6
  %s9 = scalar_select 0, %s8, %s6
  // Predicated region
  $region2: #{generator_forward.14} parent=0 // pred_check
    _
  $region3: #{generator_forward.14} parent=0 // pred_check_branch
    %11 = sbr.rel (0) target = $region5
  $region4: #{generator_forward.14} parent=0 // pred_region
    _
  $region5: #{generator_forward.14} parent=0 // pred_fallthru
    _
  // Predicated region
  $region6: #{generator_forward.14} parent=0 // pred_check
    _
  $region7: #{generator_forward.14} parent=0 // pred_check_branch
    %13 = sbr.rel (0) target = $region9
  $region8: #{generator_forward.14} parent=0 // pred_region
    _
  $region9: #{generator_forward.14} parent=0 // pred_fallthru
    _
  // Predicated region
  $region10: #{generator_forward.14} parent=0 // pred_check
    _
  $region11: #{generator_forward.14} parent=0 // pred_check_branch
    %15 = sbr.rel (0) target = $region13
  $region12: #{generator_forward.14} parent=0 // pred_region
    _
  $region13: #{generator_forward.14} parent=0 // pred_fallthru
    _
  // Predicated region
  $region14: #{generator_forward.14} parent=0 // pred_check
    _
  $region15: #{generator_forward.14} parent=0 // pred_check_branch
    %17 = sbr.rel (0) target = $region17
  $region16: #{generator_forward.14} parent=0 // pred_region
    _
  $region17: #{generator_forward.14} parent=0 // pred_fallthru
    _
  // Predicated region
  $region18: #{generator_forward.14} parent=0 // pred_check
    _
  $region19: #{generator_forward.14} parent=0 // pred_check_branch
    %19 = sbr.rel (0) target = $region21
  $region20: #{generator_forward.14} parent=0 // pred_region
    _
  $region21: #{generator_forward.14} parent=0 // pred_fallthru
    _
  %v20 = vld [vmem:[%s0] sm:$0xff]
  %v21 = vld [vmem:[%s0 + $0x8] sm:$0xff]
  %v22 = vld [vmem:[%s1] sm:$0xff]
  %v23 = vld [vmem:[%s1 + $0x8] sm:$0xff]
  %v24 = vld [vmem:[%s1 + $0x10] sm:$0xff]
  %v25 = vld [vmem:[%s1 + $0x18] sm:$0xff]
  %v26 = vld [vmem:[%s2] sm:$0xff]
  %v27 = vld [vmem:[%s2 + $0x8] sm:$0xff]
  %v28 = vld [vmem:[%s3] sm:$0xff]
  %v29 = vld [vmem:[%s3 + $0x8] sm:$0xff]
  %v30 = vld [vmem:[%s4] sm:$0xff]
  %v31 = vld [vmem:[%s4 + $0x8] sm:$0xff]
  %33 = vset.pattern.permute.xlu0 0
  %34 = vperm.xlu0 %33, %v26
  %v35 = vpop.permute.xlu0 %34
  %38 = vset.pattern.permute.xlu0 0
  %39 = vperm.xlu0 %38, %v27
  %v40 = vpop.permute.xlu0 %39
  %vm42 = vcmask 261120
  %v44 = vsel %vm42, %v20, 0
  %v47 = vsel %vm42, %v21, 0
  %49 = vmatpush.msra.mxu0 0.0
  %50 = vmatpush.msra.mxu0 0.0
  %51 = vmatpush.msra.mxu0 0.0
  %52 = vmatpush.msra.mxu0 0.0
  %53 = vmatpush.msra.mxu0 0.0
  %54 = vmatpush.msra.mxu0 0.0
  %55 = vmatpush.msra.mxu0 0.0
  %56 = vmatpush.msra.mxu0 0.0
  %57 = vmatpush.msra.mxu0 0.0
  %58 = vmatpush.msra.mxu0 0.0
  %59 = vmatpush.msra.mxu0 0.0
  %60 = vmatpush.msra.mxu0 0.0
  %61 = vmatpush.msra.mxu0 %v25
  %62 = vmatpush.msra.mxu0 %v24
  %63 = vmatpush.msra.mxu0 %v23
  %64 = vmatpush.msra.mxu0 %v22
  %65 = vmatmul.f32.gmra.mxu0 %v44
  %v66 = vpop.f32.mrf.mxu0
  %v67 = vadd.f32 %v35, %v66
  %68 = vmatmul.f32.gmra.mxu0 %v47
  %v69 = vpop.f32.mrf.mxu0
  %v70 = vadd.f32 %v40, %v69
  %71 = vdwg.mxu0
  %vm72 = vcmask 64512
  %v73 = vsel %vm72, %v67, 0.0
  %74 = vadd.xlane.f32.xlu0 %v73
  %v75 = vpop.xlane.xlu0 %74
  %v76 = vsel %vm72, %v70, 0.0
  %77 = vadd.xlane.f32.xlu0 %v76
  %v78 = vpop.xlane.xlu0 %77
  %v79 = vrcp.pop 8.0
  %v80 = vmul.f32 8.0, %v79
  %v81 = vsub.f32 1.0, %v80
  %v82 = vmul.f32 %v79, %v81
  %v83 = vadd.f32 %v79, %v82
  %vm84 = vweird.f32 %v79
  %v85 = vsel %vm84, %v79, %v83
  %v86 = vmul.f32 %v75, %v85
  %v87 = vmul.f32 %v78, %v85
  %v88 = vsub.f32 %v67, %v86
  %v89 = vsub.f32 %v70, %v87
  %v90 = vmul.f32 %v88, %v88
  %v91 = vmul.f32 %v89, %v89
  %v92 = vsel %vm72, %v90, 0.0
  %93 = vadd.xlane.f32.xlu0 %v92
  %v94 = vpop.xlane.xlu0 %93
  %v95 = vsel %vm72, %v91, 0.0
  %96 = vadd.xlane.f32.xlu0 %v95
  %v97 = vpop.xlane.xlu0 %96
  %v98 = vmul.f32 %v94, %v85
  %v99 = vmul.f32 %v97, %v85
  %v100 = vadd.f32 %v98, 1e-05
  %v101 = vadd.f32 %v99, 1e-05
  %v102 = vrsqrt.pop %v100
  %v103 = vmul.f32 %v102, %v100
  %v104 = vmul.f32 %v103, %v102
  %v105 = vmul.f32 0.5, %v104
  %v106 = vsub.f32 1.5, %v105
  %v107 = vmul.f32 %v102, %v106
  %vm108 = vweird.f32 %v100
  %vm109 = vweird.f32 %v102
  %vm110 = vmor %vm108, %vm109
  %v111 = vsel %vm110, %v102, %v107
  %v112 = vrsqrt.pop %v101
  %v113 = vmul.f32 %v112, %v101
  %v114 = vmul.f32 %v113, %v112
  %v115 = vmul.f32 0.5, %v114
  %v116 = vsub.f32 1.5, %v115
  %v117 = vmul.f32 %v112, %v116
  %vm118 = vweird.f32 %v101
  %vm119 = vweird.f32 %v112
  %vm120 = vmor %vm118, %vm119
  %v121 = vsel %vm120, %v112, %v117
  %v122 = vmul.f32 %v88, %v111
  %v123 = vmul.f32 %v89, %v121
  %125 = vset.pattern.permute.xlu0 0
  %126 = vperm.xlu0 %125, %v28
  %v127 = vpop.permute.xlu0 %126
  %130 = vset.pattern.permute.xlu0 0
  %131 = vperm.xlu0 %130, %v29
  %v132 = vpop.permute.xlu0 %131
  %v134 = vmul.f32 %v122, %v127
  %v135 = vmul.f32 %v123, %v132
  %137 = vset.pattern.permute.xlu0 0
  %138 = vperm.xlu0 %137, %v30
  %v139 = vpop.permute.xlu0 %138
  %142 = vset.pattern.permute.xlu0 0
  %143 = vperm.xlu0 %142, %v31
  %v144 = vpop.permute.xlu0 %143
  %v146 = vadd.f32 %v134, %v139
  %v147 = vadd.f32 %v135, %v144
  %vm148 = vcmp.gt.f32.partialorder %v146, 0.0
  %vm149 = vcmp.gt.f32.partialorder %v147, 0.0
  %v150 = vmul.f32 %v146, 0.2
  %v151 = vmul.f32 %v147, 0.2
  %v152 = vsel %vm148, %v146, %v150
  %v153 = vsel %vm149, %v147, %v151
  %154 = vst.msk [vmem:[%s5] sm:$0xff] %vm72, %v152
  %155 = vst.msk [vmem:[%s5 + $0x8] sm:$0xff] %vm72, %v153
  // Predicated region
  $region22: #{generator_forward.14} parent=0 // pred_check
    _
  $region23: #{generator_forward.14} parent=0 // pred_check_branch
    %157 = sbr.rel (0) target = $region25
  $region24: #{generator_forward.14} parent=0 // pred_region
    _
  $region25: #{generator_forward.14} parent=0 // pred_fallthru
    _
  // Predicated region
  $region26: #{generator_forward.14} parent=0 // pred_check
    _
  $region27: #{generator_forward.14} parent=0 // pred_check_branch
    %159 = sbr.rel (0) target = $region29
  $region28: #{generator_forward.14} parent=0 // pred_region
    _
  $region29: #{generator_forward.14} parent=0 // pred_fallthru
    _

// kernel: generator_forward.12
$region0: #{generator_forward.12}
  #allocation0 [shape = 'u32[]', space=smem, size = 0x4, offset = 0x4, fixed_abs, tag = 'smem constant byte address 0x4 - core index']
  #allocation1 [shape = 'u32[72,128]{1,0:T(1,128)}', space=vmem, size = 0x9000, scoped, tag = 'internal scratch']
  %s0 = inlined_call_operand.vmem [shape: f32[512,144], index: 0, kind: input, shape index: {}]
  %s1 = inlined_call_operand.vmem [shape: f32[144,8], index: 1, kind: input, shape index: {}]
  %s2 = inlined_call_operand.vmem [shape: f32[512,1], index: 2, kind: input, shape index: {}]
  %s3 = inlined_call_operand.vmem [shape: f32[512,1], index: 3, kind: input, shape index: {}]
  %s4 = inlined_call_operand.vmem [shape: f32[512,1], index: 4, kind: input, shape index: {}]
  %s5 = inlined_call_operand.vmem [shape: f32[512,8], index: 5, kind: output, shape index: {}]
  %s6 = sld [smem:[#allocation0]]
  $region30: #{generator_forward.12} parent=0
    _
  %s8 = ssub.s32 1, %s6
  %s9 = scalar_select 0, %s8, %s6
  // Predicated region
  $region2: #{generator_forward.12} parent=0 // pred_check
    _
  $region3: #{generator_forward.12} parent=0 // pred_check_branch
    %11 = sbr.rel (0) target = $region5
  $region4: #{generator_forward.12} parent=0 // pred_region
    _
  $region5: #{generator_forward.12} parent=0 // pred_fallthru
    _
  // Predicated region
  $region6: #{generator_forward.12} parent=0 // pred_check
    _
  $region7: #{generator_forward.12} parent=0 // pred_check_branch
    %13 = sbr.rel (0) target = $region9
  $region8: #{generator_forward.12} parent=0 // pred_region
    _
  $region9: #{generator_forward.12} parent=0 // pred_fallthru
    _
  // Predicated region
  $region10: #{generator_forward.12} parent=0 // pred_check
    _
  $region11: #{generator_forward.12} parent=0 // pred_check_branch
    %15 = sbr.rel (0) target = $region13
  $region12: #{generator_forward.12} parent=0 // pred_region
    _
  $region13: #{generator_forward.12} parent=0 // pred_fallthru
    _
  // Predicated region
  $region14: #{generator_forward.12} parent=0 // pred_check
    _
  $region15: #{generator_forward.12} parent=0 // pred_check_branch
    %17 = sbr.rel (0) target = $region17
  $region16: #{generator_forward.12} parent=0 // pred_region
    _
  $region17: #{generator_forward.12} parent=0 // pred_fallthru
    _
  // Predicated region
  $region18: #{generator_forward.12} parent=0 // pred_check
    _
  $region19: #{generator_forward.12} parent=0 // pred_check_branch
    %19 = sbr.rel (0) target = $region21
  $region20: #{generator_forward.12} parent=0 // pred_region
    _
  $region21: #{generator_forward.12} parent=0 // pred_fallthru
    _
  %v20 = vld [vmem:[%s0] sm:$0xff]
  %v21 = vld [vmem:[%s0 + $0x8] sm:$0xff]
  %v22 = vld [vmem:[%s0 + $0x10] sm:$0xff]
  %v23 = vld [vmem:[%s0 + $0x18] sm:$0xff]
  %v24 = vld [vmem:[%s0 + $0x20] sm:$0xff]
  %v25 = vld [vmem:[%s0 + $0x28] sm:$0xff]
  %v26 = vld [vmem:[%s0 + $0x30] sm:$0xff]
  %v27 = vld [vmem:[%s0 + $0x38] sm:$0xff]
  %v28 = vld [vmem:[%s0 + $0x40] sm:$0xff]
  %v29 = vld [vmem:[%s0 + $0x48] sm:$0xff]
  %v30 = vld [vmem:[%s0 + $0x50] sm:$0xff]
  %v31 = vld [vmem:[%s0 + $0x58] sm:$0xff]
  %v32 = vld [vmem:[%s0 + $0x60] sm:$0xff]
  %v33 = vld [vmem:[%s0 + $0x68] sm:$0xff]
  %v34 = vld [vmem:[%s0 + $0x70] sm:$0xff]
  %v35 = vld [vmem:[%s0 + $0x78] sm:$0xff]
  %v36 = vld [vmem:[%s0 + $0x80] sm:$0xff]
  %v37 = vld [vmem:[%s0 + $0x88] sm:$0xff]
  %v38 = vld [vmem:[%s0 + $0x90] sm:$0xff]
  %v39 = vld [vmem:[%s0 + $0x98] sm:$0xff]
  %v40 = vld [vmem:[%s0 + $0xa0] sm:$0xff]
  %v41 = vld [vmem:[%s0 + $0xa8] sm:$0xff]
  %v42 = vld [vmem:[%s0 + $0xb0] sm:$0xff]
  %v43 = vld [vmem:[%s0 + $0xb8] sm:$0xff]
  %v44 = vld [vmem:[%s0 + $0xc0] sm:$0xff]
  %v45 = vld [vmem:[%s0 + $0xc8] sm:$0xff]
  %v46 = vld [vmem:[%s0 + $0xd0] sm:$0xff]
  %v47 = vld [vmem:[%s0 + $0xd8] sm:$0xff]
  %v48 = vld [vmem:[%s0 + $0xe0] sm:$0xff]
  %v49 = vld [vmem:[%s0 + $0xe8] sm:$0xff]
  %v50 = vld [vmem:[%s0 + $0xf0] sm:$0xff]
  %v51 = vld [vmem:[%s0 + $0xf8] sm:$0xff]
  %v52 = vld [vmem:[%s0 + $0x100] sm:$0xff]
  %v53 = vld [vmem:[%s0 + $0x108] sm:$0xff]
  %v54 = vld [vmem:[%s0 + $0x110] sm:$0xff]
  %v55 = vld [vmem:[%s0 + $0x118] sm:$0xff]
  %v56 = vld [vmem:[%s0 + $0x120] sm:$0xff]
  %v57 = vld [vmem:[%s0 + $0x128] sm:$0xff]
  %v58 = vld [vmem:[%s0 + $0x130] sm:$0xff]
  %v59 = vld [vmem:[%s0 + $0x138] sm:$0xff]
  %v60 = vld [vmem:[%s0 + $0x140] sm:$0xff]
  %v61 = vld [vmem:[%s0 + $0x148] sm:$0xff]
  %v62 = vld [vmem:[%s0 + $0x150] sm:$0xff]
  %v63 = vld [vmem:[%s0 + $0x158] sm:$0xff]
  %v64 = vld [vmem:[%s0 + $0x160] sm:$0xff]
  %v65 = vld [vmem:[%s0 + $0x168] sm:$0xff]
  %v66 = vld [vmem:[%s0 + $0x170] sm:$0xff]
  %v67 = vld [vmem:[%s0 + $0x178] sm:$0xff]
  %v68 = vld [vmem:[%s0 + $0x180] sm:$0xff]
  %v69 = vld [vmem:[%s0 + $0x188] sm:$0xff]
  %v70 = vld [vmem:[%s0 + $0x190] sm:$0xff]
  %v71 = vld [vmem:[%s0 + $0x198] sm:$0xff]
  %v72 = vld [vmem:[%s0 + $0x1a0] sm:$0xff]
  %v73 = vld [vmem:[%s0 + $0x1a8] sm:$0xff]
  %v74 = vld [vmem:[%s0 + $0x1b0] sm:$0xff]
  %v75 = vld [vmem:[%s0 + $0x1b8] sm:$0xff]
  %v76 = vld [vmem:[%s0 + $0x1c0] sm:$0xff]
  %v77 = vld [vmem:[%s0 + $0x1c8] sm:$0xff]
  %v78 = vld [vmem:[%s0 + $0x1d0] sm:$0xff]
  %v79 = vld [vmem:[%s0 + $0x1d8] sm:$0xff]
  %v80 = vld [vmem:[%s0 + $0x1e0] sm:$0xff]
  %v81 = vld [vmem:[%s0 + $0x1e8] sm:$0xff]
  %v82 = vld [vmem:[%s0 + $0x1f0] sm:$0xff]
  %v83 = vld [vmem:[%s0 + $0x1f8] sm:$0xff]
  %v84 = vld [vmem:[%s0 + $0x200] sm:$0xff]
  %v85 = vld [vmem:[%s0 + $0x208] sm:$0xff]
  %v86 = vld [vmem:[%s0 + $0x210] sm:$0xff]
  %v87 = vld [vmem:[%s0 + $0x218] sm:$0xff]
  %v88 = vld [vmem:[%s0 + $0x220] sm:$0xff]
  %v89 = vld [vmem:[%s0 + $0x228] sm:$0xff]
  %v90 = vld [vmem:[%s0 + $0x230] sm:$0xff]
  %v91 = vld [vmem:[%s0 + $0x238] sm:$0xff]
  %v92 = vld [vmem:[%s0 + $0x240] sm:$0xff]
  %v93 = vld [vmem:[%s0 + $0x248] sm:$0xff]
  %v94 = vld [vmem:[%s0 + $0x250] sm:$0xff]
  %v95 = vld [vmem:[%s0 + $0x258] sm:$0xff]
  %v96 = vld [vmem:[%s0 + $0x260] sm:$0xff]
  %v97 = vld [vmem:[%s0 + $0x268] sm:$0xff]
  %v98 = vld [vmem:[%s0 + $0x270] sm:$0xff]
  %v99 = vld [vmem:[%s0 + $0x278] sm:$0xff]
  %v100 = vld [vmem:[%s0 + $0x280] sm:$0xff]
  %v101 = vld [vmem:[%s0 + $0x288] sm:$0xff]
  %v102 = vld [vmem:[%s0 + $0x290] sm:$0xff]
  %v103 = vld [vmem:[%s0 + $0x298] sm:$0xff]
  %v104 = vld [vmem:[%s0 + $0x2a0] sm:$0xff]
  %v105 = vld [vmem:[%s0 + $0x2a8] sm:$0xff]
  %v106 = vld [vmem:[%s0 + $0x2b0] sm:$0xff]
  %v107 = vld [vmem:[%s0 + $0x2b8] sm:$0xff]
  %v108 = vld [vmem:[%s0 + $0x2c0] sm:$0xff]
  %v109 = vld [vmem:[%s0 + $0x2c8] sm:$0xff]
  %v110 = vld [vmem:[%s0 + $0x2d0] sm:$0xff]
  %v111 = vld [vmem:[%s0 + $0x2d8] sm:$0xff]
  %v112 = vld [vmem:[%s0 + $0x2e0] sm:$0xff]
  %v113 = vld [vmem:[%s0 + $0x2e8] sm:$0xff]
  %v114 = vld [vmem:[%s0 + $0x2f0] sm:$0xff]
  %v115 = vld [vmem:[%s0 + $0x2f8] sm:$0xff]
  %v116 = vld [vmem:[%s0 + $0x300] sm:$0xff]
  %v117 = vld [vmem:[%s0 + $0x308] sm:$0xff]
  %v118 = vld [vmem:[%s0 + $0x310] sm:$0xff]
  %v119 = vld [vmem:[%s0 + $0x318] sm:$0xff]
  %v120 = vld [vmem:[%s0 + $0x320] sm:$0xff]
  %v121 = vld [vmem:[%s0 + $0x328] sm:$0xff]
  %v122 = vld [vmem:[%s0 + $0x330] sm:$0xff]
  %v123 = vld [vmem:[%s0 + $0x338] sm:$0xff]
  %v124 = vld [vmem:[%s0 + $0x340] sm:$0xff]
  %v125 = vld [vmem:[%s0 + $0x348] sm:$0xff]
  %v126 = vld [vmem:[%s0 + $0x350] sm:$0xff]
  %v127 = vld [vmem:[%s0 + $0x358] sm:$0xff]
  %v128 = vld [vmem:[%s0 + $0x360] sm:$0xff]
  %v129 = vld [vmem:[%s0 + $0x368] sm:$0xff]
  %v130 = vld [vmem:[%s0 + $0x370] sm:$0xff]
  %v131 = vld [vmem:[%s0 + $0x378] sm:$0xff]
  %v132 = vld [vmem:[%s0 + $0x380] sm:$0xff]
  %v133 = vld [vmem:[%s0 + $0x388] sm:$0xff]
  %v134 = vld [vmem:[%s0 + $0x390] sm:$0xff]
  %v135 = vld [vmem:[%s0 + $0x398] sm:$0xff]
  %v136 = vld [vmem:[%s0 + $0x3a0] sm:$0xff]
  %v137 = vld [vmem:[%s0 + $0x3a8] sm:$0xff]
  %v138 = vld [vmem:[%s0 + $0x3b0] sm:$0xff]
  %v139 = vld [vmem:[%s0 + $0x3b8] sm:$0xff]
  %v140 = vld [vmem:[%s0 + $0x3c0] sm:$0xff]
  %v141 = vld [vmem:[%s0 + $0x3c8] sm:$0xff]
  %v142 = vld [vmem:[%s0 + $0x3d0] sm:$0xff]
  %v143 = vld [vmem:[%s0 + $0x3d8] sm:$0xff]
  %v144 = vld [vmem:[%s0 + $0x3e0] sm:$0xff]
  %v145 = vld [vmem:[%s0 + $0x3e8] sm:$0xff]
  %v146 = vld [vmem:[%s0 + $0x3f0] sm:$0xff]
  %v147 = vld [vmem:[%s0 + $0x3f8] sm:$0xff]
  %v148 = vld [vmem:[%s1] sm:$0xff]
  %v149 = vld [vmem:[%s1 + $0x8] sm:$0xff]
  %v150 = vld [vmem:[%s1 + $0x10] sm:$0xff]
  %v151 = vld [vmem:[%s1 + $0x18] sm:$0xff]
  %v152 = vld [vmem:[%s1 + $0x20] sm:$0xff]
  %v153 = vld [vmem:[%s1 + $0x28] sm:$0xff]
  %v154 = vld [vmem:[%s1 + $0x30] sm:$0xff]
  %v155 = vld [vmem:[%s1 + $0x38] sm:$0xff]
  %v156 = vld [vmem:[%s1 + $0x40] sm:$0xff]
  %v157 = vld [vmem:[%s1 + $0x48] sm:$0xff]
  %v158 = vld [vmem:[%s1 + $0x50] sm:$0xff]
  %v159 = vld [vmem:[%s1 + $0x58] sm:$0xff]
  %v160 = vld [vmem:[%s1 + $0x60] sm:$0xff]
  %v161 = vld [vmem:[%s1 + $0x68] sm:$0xff]
  %v162 = vld [vmem:[%s1 + $0x70] sm:$0xff]
  %v163 = vld [vmem:[%s1 + $0x78] sm:$0xff]
  %v164 = vld [vmem:[%s1 + $0x80] sm:$0xff]
  %v165 = vld [vmem:[%s1 + $0x88] sm:$0xff]
  %v166 = vld [vmem:[%s2] sm:$0xff]
  %v167 = vld [vmem:[%s2 + $0x8] sm:$0xff]
  %v168 = vld [vmem:[%s2 + $0x10] sm:$0xff]
  %v169 = vld [vmem:[%s2 + $0x18] sm:$0xff]
  %v170 = vld [vmem:[%s2 + $0x20] sm:$0xff]
  %v171 = vld [vmem:[%s2 + $0x28] sm:$0xff]
  %v172 = vld [vmem:[%s2 + $0x30] sm:$0xff]
  %v173 = vld [vmem:[%s2 + $0x38] sm:$0xff]
  %v174 = vld [vmem:[%s2 + $0x40] sm:$0xff]
  %v175 = vld [vmem:[%s2 + $0x48] sm:$0xff]
  %v176 = vld [vmem:[%s2 + $0x50] sm:$0xff]
  %v177 = vld [vmem:[%s2 + $0x58] sm:$0xff]
  %v178 = vld [vmem:[%s2 + $0x60] sm:$0xff]
  %v179 = vld [vmem:[%s2 + $0x68] sm:$0xff]
  %v180 = vld [vmem:[%s2 + $0x70] sm:$0xff]
  %v181 = vld [vmem:[%s2 + $0x78] sm:$0xff]
  %v182 = vld [vmem:[%s2 + $0x80] sm:$0xff]
  %v183 = vld [vmem:[%s2 + $0x88] sm:$0xff]
  %v184 = vld [vmem:[%s2 + $0x90] sm:$0xff]
  %v185 = vld [vmem:[%s2 + $0x98] sm:$0xff]
  %v186 = vld [vmem:[%s2 + $0xa0] sm:$0xff]
  %v187 = vld [vmem:[%s2 + $0xa8] sm:$0xff]
  %v188 = vld [vmem:[%s2 + $0xb0] sm:$0xff]
  %v189 = vld [vmem:[%s2 + $0xb8] sm:$0xff]
  %v190 = vld [vmem:[%s2 + $0xc0] sm:$0xff]
  %v191 = vld [vmem:[%s2 + $0xc8] sm:$0xff]
  %v192 = vld [vmem:[%s2 + $0xd0] sm:$0xff]
  %v193 = vld [vmem:[%s2 + $0xd8] sm:$0xff]
  %v194 = vld [vmem:[%s2 + $0xe0] sm:$0xff]
  %v195 = vld [vmem:[%s2 + $0xe8] sm:$0xff]
  %v196 = vld [vmem:[%s2 + $0xf0] sm:$0xff]
  %v197 = vld [vmem:[%s2 + $0xf8] sm:$0xff]
  %v198 = vld [vmem:[%s2 + $0x100] sm:$0xff]
  %v199 = vld [vmem:[%s2 + $0x108] sm:$0xff]
  %v200 = vld [vmem:[%s2 + $0x110] sm:$0xff]
  %v201 = vld [vmem:[%s2 + $0x118] sm:$0xff]
  %v202 = vld [vmem:[%s2 + $0x120] sm:$0xff]
  %v203 = vld [vmem:[%s2 + $0x128] sm:$0xff]
  %v204 = vld [vmem:[%s2 + $0x130] sm:$0xff]
  %v205 = vld [vmem:[%s2 + $0x138] sm:$0xff]
  %v206 = vld [vmem:[%s2 + $0x140] sm:$0xff]
  %v207 = vld [vmem:[%s2 + $0x148] sm:$0xff]
  %v208 = vld [vmem:[%s2 + $0x150] sm:$0xff]
  %v209 = vld [vmem:[%s2 + $0x158] sm:$0xff]
  %v210 = vld [vmem:[%s2 + $0x160] sm:$0xff]
  %v211 = vld [vmem:[%s2 + $0x168] sm:$0xff]
  %v212 = vld [vmem:[%s2 + $0x170] sm:$0xff]
  %v213 = vld [vmem:[%s2 + $0x178] sm:$0xff]
  %v214 = vld [vmem:[%s2 + $0x180] sm:$0xff]
  %v215 = vld [vmem:[%s2 + $0x188] sm:$0xff]
  %v216 = vld [vmem:[%s2 + $0x190] sm:$0xff]
  %v217 = vld [vmem:[%s2 + $0x198] sm:$0xff]
  %v218 = vld [vmem:[%s2 + $0x1a0] sm:$0xff]
  %v219 = vld [vmem:[%s2 + $0x1a8] sm:$0xff]
  %v220 = vld [vmem:[%s2 + $0x1b0] sm:$0xff]
  %v221 = vld [vmem:[%s2 + $0x1b8] sm:$0xff]
  %v222 = vld [vmem:[%s2 + $0x1c0] sm:$0xff]
  %v223 = vld [vmem:[%s2 + $0x1c8] sm:$0xff]
  %v224 = vld [vmem:[%s2 + $0x1d0] sm:$0xff]
  %v225 = vld [vmem:[%s2 + $0x1d8] sm:$0xff]
  %v226 = vld [vmem:[%s2 + $0x1e0] sm:$0xff]
  %v227 = vld [vmem:[%s2 + $0x1e8] sm:$0xff]
  %v228 = vld [vmem:[%s2 + $0x1f0] sm:$0xff]
  %v229 = vld [vmem:[%s2 + $0x1f8] sm:$0xff]
  %v230 = vld [vmem:[%s3] sm:$0xff]
  %v231 = vld [vmem:[%s3 + $0x8] sm:$0xff]
  %v232 = vld [vmem:[%s3 + $0x10] sm:$0xff]
  %v233 = vld [vmem:[%s3 + $0x18] sm:$0xff]
  %v234 = vld [vmem:[%s3 + $0x20] sm:$0xff]
  %v235 = vld [vmem:[%s3 + $0x28] sm:$0xff]
  %v236 = vld [vmem:[%s3 + $0x30] sm:$0xff]
  %v237 = vld [vmem:[%s3 + $0x38] sm:$0xff]
  %v238 = vld [vmem:[%s3 + $0x40] sm:$0xff]
  %v239 = vld [vmem:[%s3 + $0x48] sm:$0xff]
  %v240 = vld [vmem:[%s3 + $0x50] sm:$0xff]
  %v241 = vld [vmem:[%s3 + $0x58] sm:$0xff]
  %v242 = vld [vmem:[%s3 + $0x60] sm:$0xff]
  %v243 = vld [vmem:[%s3 + $0x68] sm:$0xff]
  %v244 = vld [vmem:[%s3 + $0x70] sm:$0xff]
  %v245 = vld [vmem:[%s3 + $0x78] sm:$0xff]
  %v246 = vld [vmem:[%s3 + $0x80] sm:$0xff]
  %v247 = vld [vmem:[%s3 + $0x88] sm:$0xff]
  %v248 = vld [vmem:[%s3 + $0x90] sm:$0xff]
  %v249 = vld [vmem:[%s3 + $0x98] sm:$0xff]
  %v250 = vld [vmem:[%s3 + $0xa0] sm:$0xff]
  %v251 = vld [vmem:[%s3 + $0xa8] sm:$0xff]
  %v252 = vld [vmem:[%s3 + $0xb0] sm:$0xff]
  %v253 = vld [vmem:[%s3 + $0xb8] sm:$0xff]
  %v254 = vld [vmem:[%s3 + $0xc0] sm:$0xff]
  %v255 = vld [vmem:[%s3 + $0xc8] sm:$0xff]
  %v256 = vld [vmem:[%s3 + $0xd0] sm:$0xff]
  %v257 = vld [vmem:[%s3 + $0xd8] sm:$0xff]
  %v258 = vld [vmem:[%s3 + $0xe0] sm:$0xff]
  %v259 = vld [vmem:[%s3 + $0xe8] sm:$0xff]
  %v260 = vld [vmem:[%s3 + $0xf0] sm:$0xff]
  %v261 = vld [vmem:[%s3 + $0xf8] sm:$0xff]
  %v262 = vld [vmem:[%s3 + $0x100] sm:$0xff]
  %v263 = vld [vmem:[%s3 + $0x108] sm:$0xff]
  %v264 = vld [vmem:[%s3 + $0x110] sm:$0xff]
  %v265 = vld [vmem:[%s3 + $0x118] sm:$0xff]
  %v266 = vld [vmem:[%s3 + $0x120] sm:$0xff]
  %v267 = vld [vmem:[%s3 + $0x128] sm:$0xff]
  %v268 = vld [vmem:[%s3 + $0x130] sm:$0xff]
  %v269 = vld [vmem:[%s3 + $0x138] sm:$0xff]
  %v270 = vld [vmem:[%s3 + $0x140] sm:$0xff]
  %v271 = vld [vmem:[%s3 + $0x148] sm:$0xff]
  %v272 = vld [vmem:[%s3 + $0x150] sm:$0xff]
  %v273 = vld [vmem:[%s3 + $0x158] sm:$0xff]
  %v274 = vld [vmem:[%s3 + $0x160] sm:$0xff]
  %v275 = vld [vmem:[%s3 + $0x168] sm:$0xff]
  %v276 = vld [vmem:[%s3 + $0x170] sm:$0xff]
  %v277 = vld [vmem:[%s3 + $0x178] sm:$0xff]
  %v278 = vld [vmem:[%s3 + $0x180] sm:$0xff]
  %v279 = vld [vmem:[%s3 + $0x188] sm:$0xff]
  %v280 = vld [vmem:[%s3 + $0x190] sm:$0xff]
  %v281 = vld [vmem:[%s3 + $0x198] sm:$0xff]
  %v282 = vld [vmem:[%s3 + $0x1a0] sm:$0xff]
  %v283 = vld [vmem:[%s3 + $0x1a8] sm:$0xff]
  %v284 = vld [vmem:[%s3 + $0x1b0] sm:$0xff]
  %v285 = vld [vmem:[%s3 + $0x1b8] sm:$0xff]
  %v286 = vld [vmem:[%s3 + $0x1c0] sm:$0xff]
  %v287 = vld [vmem:[%s3 + $0x1c8] sm:$0xff]
  %v288 = vld [vmem:[%s3 + $0x1d0] sm:$0xff]
  %v289 = vld [vmem:[%s3 + $0x1d8] sm:$0xff]
  %v290 = vld [vmem:[%s3 + $0x1e0] sm:$0xff]
  %v291 = vld [vmem:[%s3 + $0x1e8] sm:$0xff]
  %v292 = vld [vmem:[%s3 + $0x1f0] sm:$0xff]
  %v293 = vld [vmem:[%s3 + $0x1f8] sm:$0xff]
  %v294 = vld [vmem:[%s4] sm:$0xff]
  %v295 = vld [vmem:[%s4 + $0x8] sm:$0xff]
  %v296 = vld [vmem:[%s4 + $0x10] sm:$0xff]
  %v297 = vld [vmem:[%s4 + $0x18] sm:$0xff]
  %v298 = vld [vmem:[%s4 + $0x20] sm:$0xff]
  %v299 = vld [vmem:[%s4 + $0x28] sm:$0xff]
  %v300 = vld [vmem:[%s4 + $0x30] sm:$0xff]
  %v301 = vld [vmem:[%s4 + $0x38] sm:$0xff]
  %v302 = vld [vmem:[%s4 + $0x40] sm:$0xff]
  %v303 = vld [vmem:[%s4 + $0x48] sm:$0xff]
  %v304 = vld [vmem:[%s4 + $0x50] sm:$0xff]
  %v305 = vld [vmem:[%s4 + $0x58] sm:$0xff]
  %v306 = vld [vmem:[%s4 + $0x60] sm:$0xff]
  %v307 = vld [vmem:[%s4 + $0x68] sm:$0xff]
  %v308 = vld [vmem:[%s4 + $0x70] sm:$0xff]
  %v309 = vld [vmem:[%s4 + $0x78] sm:$0xff]
  %v310 = vld [vmem:[%s4 + $0x80] sm:$0xff]
  %v311 = vld [vmem:[%s4 + $0x88] sm:$0xff]
  %v312 = vld [vmem:[%s4 + $0x90] sm:$0xff]
  %v313 = vld [vmem:[%s4 + $0x98] sm:$0xff]
  %v314 = vld [vmem:[%s4 + $0xa0] sm:$0xff]
  %v315 = vld [vmem:[%s4 + $0xa8] sm:$0xff]
  %v316 = vld [vmem:[%s4 + $0xb0] sm:$0xff]
  %v317 = vld [vmem:[%s4 + $0xb8] sm:$0xff]
  %v318 = vld [vmem:[%s4 + $0xc0] sm:$0xff]
  %v319 = vld [vmem:[%s4 + $0xc8] sm:$0xff]
  %v320 = vld [vmem:[%s4 + $0xd0] sm:$0xff]
  %v321 = vld [vmem:[%s4 + $0xd8] sm:$0xff]
  %v322 = vld [vmem:[%s4 + $0xe0] sm:$0xff]
  %v323 = vld [vmem:[%s4 + $0xe8] sm:$0xff]
  %v324 = vld [vmem:[%s4 + $0xf0] sm:$0xff]
  %v325 = vld [vmem:[%s4 + $0xf8] sm:$0xff]
  %v326 = vld [vmem:[%s4 + $0x100] sm:$0xff]
  %v327 = vld [vmem:[%s4 + $0x108] sm:$0xff]
  %v328 = vld [vmem:[%s4 + $0x110] sm:$0xff]
  %v329 = vld [vmem:[%s4 + $0x118] sm:$0xff]
  %v330 = vld [vmem:[%s4 + $0x120] sm:$0xff]
  %v331 = vld [vmem:[%s4 + $0x128] sm:$0xff]
  %v332 = vld [vmem:[%s4 + $0x130] sm:$0xff]
  %v333 = vld [vmem:[%s4 + $0x138] sm:$0xff]
  %v334 = vld [vmem:[%s4 + $0x140] sm:$0xff]
  %v335 = vld [vmem:[%s4 + $0x148] sm:$0xff]
  %v336 = vld [vmem:[%s4 + $0x150] sm:$0xff]
  %v337 = vld [vmem:[%s4 + $0x158] sm:$0xff]
  %v338 = vld [vmem:[%s4 + $0x160] sm:$0xff]
  %v339 = vld [vmem:[%s4 + $0x168] sm:$0xff]
  %v340 = vld [vmem:[%s4 + $0x170] sm:$0xff]
  %v341 = vld [vmem:[%s4 + $0x178] sm:$0xff]
  %v342 = vld [vmem:[%s4 + $0x180] sm:$0xff]
  %v343 = vld [vmem:[%s4 + $0x188] sm:$0xff]
  %v344 = vld [vmem:[%s4 + $0x190] sm:$0xff]
  %v345 = vld [vmem:[%s4 + $0x198] sm:$0xff]
  %v346 = vld [vmem:[%s4 + $0x1a0] sm:$0xff]
  %v347 = vld [vmem:[%s4 + $0x1a8] sm:$0xff]
  %v348 = vld [vmem:[%s4 + $0x1b0] sm:$0xff]
  %v349 = vld [vmem:[%s4 + $0x1b8] sm:$0xff]
  %v350 = vld [vmem:[%s4 + $0x1c0] sm:$0xff]
  %v351 = vld [vmem:[%s4 + $0x1c8] sm:$0xff]
  %v352 = vld [vmem:[%s4 + $0x1d0] sm:$0xff]
  %v353 = vld [vmem:[%s4 + $0x1d8] sm:$0xff]
  %v354 = vld [vmem:[%s4 + $0x1e0] sm:$0xff]
  %v355 = vld [vmem:[%s4 + $0x1e8] sm:$0xff]
  %v356 = vld [vmem:[%s4 + $0x1f0] sm:$0xff]
  %v357 = vld [vmem:[%s4 + $0x1f8] sm:$0xff]
  %359 = vset.pattern.permute.xlu0 0
  %360 = vperm.xlu0 %359, %v166
  %v361 = vpop.permute.xlu0 %360
  %364 = vset.pattern.permute.xlu0 0
  %365 = vperm.xlu0 %364, %v167
  %v366 = vpop.permute.xlu0 %365
  %369 = vset.pattern.permute.xlu0 0
  %370 = vperm.xlu0 %369, %v168
  %v371 = vpop.permute.xlu0 %370
  %374 = vset.pattern.permute.xlu0 0
  %375 = vperm.xlu0 %374, %v169
  %v376 = vpop.permute.xlu0 %375
  %379 = vset.pattern.permute.xlu0 0
  %380 = vperm.xlu0 %379, %v170
  %v381 = vpop.permute.xlu0 %380
  %384 = vset.pattern.permute.xlu0 0
  %385 = vperm.xlu0 %384, %v171
  %v386 = vpop.permute.xlu0 %385
  %389 = vset.pattern.permute.xlu0 0
  %390 = vperm.xlu0 %389, %v172
  %v391 = vpop.permute.xlu0 %390
  %394 = vset.pattern.permute.xlu0 0
  %395 = vperm.xlu0 %394, %v173
  %v396 = vpop.permute.xlu0 %395
  %399 = vset.pattern.permute.xlu0 0
  %400 = vperm.xlu0 %399, %v174
  %v401 = vpop.permute.xlu0 %400
  %404 = vset.pattern.permute.xlu0 0
  %405 = vperm.xlu0 %404, %v175
  %v406 = vpop.permute.xlu0 %405
  %409 = vset.pattern.permute.xlu0 0
  %410 = vperm.xlu0 %409, %v176
  %v411 = vpop.permute.xlu0 %410
  %414 = vset.pattern.permute.xlu0 0
  %415 = vperm.xlu0 %414, %v177
  %v416 = vpop.permute.xlu0 %415
  %419 = vset.pattern.permute.xlu0 0
  %420 = vperm.xlu0 %419, %v178
  %v421 = vpop.permute.xlu0 %420
  %424 = vset.pattern.permute.xlu0 0
  %425 = vperm.xlu0 %424, %v179
  %v426 = vpop.permute.xlu0 %425
  %429 = vset.pattern.permute.xlu0 0
  %430 = vperm.xlu0 %429, %v180
  %v431 = vpop.permute.xlu0 %430
  %434 = vset.pattern.permute.xlu0 0
  %435 = vperm.xlu0 %434, %v181
  %v436 = vpop.permute.xlu0 %435
  %439 = vset.pattern.permute.xlu0 0
  %440 = vperm.xlu0 %439, %v182
  %v441 = vpop.permute.xlu0 %440
  %444 = vset.pattern.permute.xlu0 0
  %445 = vperm.xlu0 %444, %v183
  %v446 = vpop.permute.xlu0 %445
  %449 = vset.pattern.permute.xlu0 0
  %450 = vperm.xlu0 %449, %v184
  %v451 = vpop.permute.xlu0 %450
  %454 = vset.pattern.permute.xlu0 0
  %455 = vperm.xlu0 %454, %v185
  %v456 = vpop.permute.xlu0 %455
  %459 = vset.pattern.permute.xlu0 0
  %460 = vperm.xlu0 %459, %v186
  %v461 = vpop.permute.xlu0 %460
  %464 = vset.pattern.permute.xlu0 0
  %465 = vperm.xlu0 %464, %v187
  %v466 = vpop.permute.xlu0 %465
  %469 = vset.pattern.permute.xlu0 0
  %470 = vperm.xlu0 %469, %v188
  %v471 = vpop.permute.xlu0 %470
  %474 = vset.pattern.permute.xlu0 0
  %475 = vperm.xlu0 %474, %v189
  %v476 = vpop.permute.xlu0 %475
  %479 = vset.pattern.permute.xlu0 0
  %480 = vperm.xlu0 %479, %v190
  %v481 = vpop.permute.xlu0 %480
  %484 = vset.pattern.permute.xlu0 0
  %485 = vperm.xlu0 %484, %v191
  %v486 = vpop.permute.xlu0 %485
  %489 = vset.pattern.permute.xlu0 0
  %490 = vperm.xlu0 %489, %v192
  %v491 = vpop.permute.xlu0 %490
  %494 = vset.pattern.permute.xlu0 0
  %495 = vperm.xlu0 %494, %v193
  %v496 = vpop.permute.xlu0 %495
  %499 = vset.pattern.permute.xlu0 0
  %500 = vperm.xlu0 %499, %v194
  %v501 = vpop.permute.xlu0 %500
  %504 = vset.pattern.permute.xlu0 0
  %505 = vperm.xlu0 %504, %v195
  %v506 = vpop.permute.xlu0 %505
  %509 = vset.pattern.permute.xlu0 0
  %510 = vperm.xlu0 %509, %v196
  %v511 = vpop.permute.xlu0 %510
  %514 = vset.pattern.permute.xlu0 0
  %515 = vperm.xlu0 %514, %v197
  %v516 = vpop.permute.xlu0 %515
  %519 = vset.pattern.permute.xlu0 0
  %520 = vperm.xlu0 %519, %v198
  %v521 = vpop.permute.xlu0 %520
  %524 = vset.pattern.permute.xlu0 0
  %525 = vperm.xlu0 %524, %v199
  %v526 = vpop.permute.xlu0 %525
  %529 = vset.pattern.permute.xlu0 0
  %530 = vperm.xlu0 %529, %v200
  %v531 = vpop.permute.xlu0 %530
  %534 = vset.pattern.permute.xlu0 0
  %535 = vperm.xlu0 %534, %v201
  %v536 = vpop.permute.xlu0 %535
  %539 = vset.pattern.permute.xlu0 0
  %540 = vperm.xlu0 %539, %v202
  %v541 = vpop.permute.xlu0 %540
  %544 = vset.pattern.permute.xlu0 0
  %545 = vperm.xlu0 %544, %v203
  %v546 = vpop.permute.xlu0 %545
  %549 = vset.pattern.permute.xlu0 0
  %550 = vperm.xlu0 %549, %v204
  %v551 = vpop.permute.xlu0 %550
  %554 = vset.pattern.permute.xlu0 0
  %555 = vperm.xlu0 %554, %v205
  %v556 = vpop.permute.xlu0 %555
  %559 = vset.pattern.permute.xlu0 0
  %560 = vperm.xlu0 %559, %v206
  %v561 = vpop.permute.xlu0 %560
  %564 = vset.pattern.permute.xlu0 0
  %565 = vperm.xlu0 %564, %v207
  %v566 = vpop.permute.xlu0 %565
  %569 = vset.pattern.permute.xlu0 0
  %570 = vperm.xlu0 %569, %v208
  %v571 = vpop.permute.xlu0 %570
  %574 = vset.pattern.permute.xlu0 0
  %575 = vperm.xlu0 %574, %v209
  %v576 = vpop.permute.xlu0 %575
  %579 = vset.pattern.permute.xlu0 0
  %580 = vperm.xlu0 %579, %v210
  %v581 = vpop.permute.xlu0 %580
  %584 = vset.pattern.permute.xlu0 0
  %585 = vperm.xlu0 %584, %v211
  %v586 = vpop.permute.xlu0 %585
  %589 = vset.pattern.permute.xlu0 0
  %590 = vperm.xlu0 %589, %v212
  %v591 = vpop.permute.xlu0 %590
  %594 = vset.pattern.permute.xlu0 0
  %595 = vperm.xlu0 %594, %v213
  %v596 = vpop.permute.xlu0 %595
  %599 = vset.pattern.permute.xlu0 0
  %600 = vperm.xlu0 %599, %v214
  %v601 = vpop.permute.xlu0 %600
  %604 = vset.pattern.permute.xlu0 0
  %605 = vperm.xlu0 %604, %v215
  %v606 = vpop.permute.xlu0 %605
  %609 = vset.pattern.permute.xlu0 0
  %610 = vperm.xlu0 %609, %v216
  %v611 = vpop.permute.xlu0 %610
  %614 = vset.pattern.permute.xlu0 0
  %615 = vperm.xlu0 %614, %v217
  %v616 = vpop.permute.xlu0 %615
  %619 = vset.pattern.permute.xlu0 0
  %620 = vperm.xlu0 %619, %v218
  %v621 = vpop.permute.xlu0 %620
  %624 = vset.pattern.permute.xlu0 0
  %625 = vperm.xlu0 %624, %v219
  %v626 = vpop.permute.xlu0 %625
  %629 = vset.pattern.permute.xlu0 0
  %630 = vperm.xlu0 %629, %v220
  %v631 = vpop.permute.xlu0 %630
  %634 = vset.pattern.permute.xlu0 0
  %635 = vperm.xlu0 %634, %v221
  %v636 = vpop.permute.xlu0 %635
  %639 = vset.pattern.permute.xlu0 0
  %640 = vperm.xlu0 %639, %v222
  %v641 = vpop.permute.xlu0 %640
  %644 = vset.pattern.permute.xlu0 0
  %645 = vperm.xlu0 %644, %v223
  %v646 = vpop.permute.xlu0 %645
  %649 = vset.pattern.permute.xlu0 0
  %650 = vperm.xlu0 %649, %v224
  %v651 = vpop.permute.xlu0 %650
  %654 = vset.pattern.permute.xlu0 0
  %655 = vperm.xlu0 %654, %v225
  %v656 = vpop.permute.xlu0 %655
  %659 = vset.pattern.permute.xlu0 0
  %660 = vperm.xlu0 %659, %v226
  %v661 = vpop.permute.xlu0 %660
  %664 = vset.pattern.permute.xlu0 0
  %665 = vperm.xlu0 %664, %v227
  %v666 = vpop.permute.xlu0 %665
  %669 = vset.pattern.permute.xlu0 0
  %670 = vperm.xlu0 %669, %v228
  %v671 = vpop.permute.xlu0 %670
  %674 = vset.pattern.permute.xlu0 0
  %675 = vperm.xlu0 %674, %v229
  %v676 = vpop.permute.xlu0 %675
  %vm678 = vcmask 130048
  %v680 = vsel %vm678, %v21, 0
  %v683 = vsel %vm678, %v23, 0
  %v686 = vsel %vm678, %v25, 0
  %v689 = vsel %vm678, %v27, 0
  %v692 = vsel %vm678, %v29, 0
  %v695 = vsel %vm678, %v31, 0
  %v698 = vsel %vm678, %v33, 0
  %v701 = vsel %vm678, %v35, 0
  %v704 = vsel %vm678, %v37, 0
  %v707 = vsel %vm678, %v39, 0
  %v710 = vsel %vm678, %v41, 0
  %v713 = vsel %vm678, %v43, 0
  %v716 = vsel %vm678, %v45, 0
  %v719 = vsel %vm678, %v47, 0
  %v722 = vsel %vm678, %v49, 0
  %v725 = vsel %vm678, %v51, 0
  %v728 = vsel %vm678, %v53, 0
  %v731 = vsel %vm678, %v55, 0
  %v734 = vsel %vm678, %v57, 0
  %v737 = vsel %vm678, %v59, 0
  %v740 = vsel %vm678, %v61, 0
  %v743 = vsel %vm678, %v63, 0
  %v746 = vsel %vm678, %v65, 0
  %v749 = vsel %vm678, %v67, 0
  %v752 = vsel %vm678, %v69, 0
  %v755 = vsel %vm678, %v71, 0
  %v758 = vsel %vm678, %v73, 0
  %v761 = vsel %vm678, %v75, 0
  %v764 = vsel %vm678, %v77, 0
  %v767 = vsel %vm678, %v79, 0
  %v770 = vsel %vm678, %v81, 0
  %v773 = vsel %vm678, %v83, 0
  %v776 = vsel %vm678, %v85, 0
  %v779 = vsel %vm678, %v87, 0
  %v782 = vsel %vm678, %v89, 0
  %v785 = vsel %vm678, %v91, 0
  %v788 = vsel %vm678, %v93, 0
  %v791 = vsel %vm678, %v95, 0
  %v794 = vsel %vm678, %v97, 0
  %v797 = vsel %vm678, %v99, 0
  %v800 = vsel %vm678, %v101, 0
  %v803 = vsel %vm678, %v103, 0
  %v806 = vsel %vm678, %v105, 0
  %v809 = vsel %vm678, %v107, 0
  %v812 = vsel %vm678, %v109, 0
  %v815 = vsel %vm678, %v111, 0
  %v818 = vsel %vm678, %v113, 0
  %v821 = vsel %vm678, %v115, 0
  %v824 = vsel %vm678, %v117, 0
  %v827 = vsel %vm678, %v119, 0
  %v830 = vsel %vm678, %v121, 0
  %v833 = vsel %vm678, %v123, 0
  %v836 = vsel %vm678, %v125, 0
  %v839 = vsel %vm678, %v127, 0
  %v842 = vsel %vm678, %v129, 0
  %v845 = vsel %vm678, %v131, 0
  %v848 = vsel %vm678, %v133, 0
  %v851 = vsel %vm678, %v135, 0
  %v854 = vsel %vm678, %v137, 0
  %v857 = vsel %vm678, %v139, 0
  %v860 = vsel %vm678, %v141, 0
  %v863 = vsel %vm678, %v143, 0
  %v866 = vsel %vm678, %v145, 0
  %v869 = vsel %vm678, %v147, 0
  %871 = vmatpush.msra.mxu0 %v163
  %872 = vmatpush.msra.mxu0 %v162
  %873 = vmatpush.msra.mxu0 %v161
  %874 = vmatpush.msra.mxu0 %v160
  %875 = vmatpush.msra.mxu0 %v159
  %876 = vmatpush.msra.mxu0 %v158
  %877 = vmatpush.msra.mxu0 %v157
  %878 = vmatpush.msra.mxu0 %v156
  %879 = vmatpush.msra.mxu0 %v155
  %880 = vmatpush.msra.mxu0 %v154
  %881 = vmatpush.msra.mxu0 %v153
  %882 = vmatpush.msra.mxu0 %v152
  %883 = vmatpush.msra.mxu0 %v151
  %884 = vmatpush.msra.mxu0 %v150
  %885 = vmatpush.msra.mxu0 %v149
  %886 = vmatpush.msra.mxu0 %v148
  %887 = vmatmul.f32.gmra.mxu0 %v20
  %v888 = vpop.f32.mrf.mxu0
  %v889 = vadd.f32 %v361, %v888
  %890 = vmatmul.f32.gmra.mxu0 %v22
  %v891 = vpop.f32.mrf.mxu0
  %v892 = vadd.f32 %v366, %v891
  %893 = vmatmul.f32.gmra.mxu0 %v24
  %v894 = vpop.f32.mrf.mxu0
  %v895 = vadd.f32 %v371, %v894
  %896 = vmatmul.f32.gmra.mxu0 %v26
  %v897 = vpop.f32.mrf.mxu0
  %v898 = vadd.f32 %v376, %v897
  %899 = vmatmul.f32.gmra.mxu0 %v28
  %v900 = vpop.f32.mrf.mxu0
  %v901 = vadd.f32 %v381, %v900
  %902 = vmatmul.f32.gmra.mxu0 %v30
  %v903 = vpop.f32.mrf.mxu0
  %v904 = vadd.f32 %v386, %v903
  %905 = vmatmul.f32.gmra.mxu0 %v32
  %v906 = vpop.f32.mrf.mxu0
  %v907 = vadd.f32 %v391, %v906
  %908 = vmatmul.f32.gmra.mxu0 %v34
  %v909 = vpop.f32.mrf.mxu0
  %v910 = vadd.f32 %v396, %v909
  %911 = vmatmul.f32.gmra.mxu0 %v36
  %v912 = vpop.f32.mrf.mxu0
  %v913 = vadd.f32 %v401, %v912
  %914 = vmatmul.f32.gmra.mxu0 %v38
  %v915 = vpop.f32.mrf.mxu0
  %v916 = vadd.f32 %v406, %v915
  %917 = vmatmul.f32.gmra.mxu0 %v40
  %v918 = vpop.f32.mrf.mxu0
  %v919 = vadd.f32 %v411, %v918
  %920 = vmatmul.f32.gmra.mxu0 %v42
  %v921 = vpop.f32.mrf.mxu0
  %v922 = vadd.f32 %v416, %v921
  %923 = vmatmul.f32.gmra.mxu0 %v44
  %v924 = vpop.f32.mrf.mxu0
  %v925 = vadd.f32 %v421, %v924
  %926 = vmatmul.f32.gmra.mxu0 %v46
  %v927 = vpop.f32.mrf.mxu0
  %v928 = vadd.f32 %v426, %v927
  %929 = vmatmul.f32.gmra.mxu0 %v48
  %v930 = vpop.f32.mrf.mxu0
  %v931 = vadd.f32 %v431, %v930
  %932 = vmatmul.f32.gmra.mxu0 %v50
  %v933 = vpop.f32.mrf.mxu0
  %v934 = vadd.f32 %v436, %v933
  %935 = vmatmul.f32.gmra.mxu0 %v52
  %v936 = vpop.f32.mrf.mxu0
  %v937 = vadd.f32 %v441, %v936
  %938 = vmatmul.f32.gmra.mxu0 %v54
  %v939 = vpop.f32.mrf.mxu0
  %v940 = vadd.f32 %v446, %v939
  %941 = vmatmul.f32.gmra.mxu0 %v56
  %v942 = vpop.f32.mrf.mxu0
  %v943 = vadd.f32 %v451, %v942
  %944 = vmatmul.f32.gmra.mxu0 %v58
  %v945 = vpop.f32.mrf.mxu0
  %v946 = vadd.f32 %v456, %v945
  %947 = vmatmul.f32.gmra.mxu0 %v60
  %v948 = vpop.f32.mrf.mxu0
  %v949 = vadd.f32 %v461, %v948
  %950 = vmatmul.f32.gmra.mxu0 %v62
  %v951 = vpop.f32.mrf.mxu0
  %v952 = vadd.f32 %v466, %v951
  %953 = vmatmul.f32.gmra.mxu0 %v64
  %v954 = vpop.f32.mrf.mxu0
  %v955 = vadd.f32 %v471, %v954
  %956 = vmatmul.f32.gmra.mxu0 %v66
  %v957 = vpop.f32.mrf.mxu0
  %v958 = vadd.f32 %v476, %v957
  %959 = vmatmul.f32.gmra.mxu0 %v68
  %v960 = vpop.f32.mrf.mxu0
  %v961 = vadd.f32 %v481, %v960
  %962 = vmatmul.f32.gmra.mxu0 %v70
  %v963 = vpop.f32.mrf.mxu0
  %v964 = vadd.f32 %v486, %v963
  %965 = vmatmul.f32.gmra.mxu0 %v72
  %v966 = vpop.f32.mrf.mxu0
  %v967 = vadd.f32 %v491, %v966
  %968 = vmatmul.f32.gmra.mxu0 %v74
  %v969 = vpop.f32.mrf.mxu0
  %v970 = vadd.f32 %v496, %v969
  %971 = vmatmul.f32.gmra.mxu0 %v76
  %v972 = vpop.f32.mrf.mxu0
  %v973 = vadd.f32 %v501, %v972
  %974 = vmatmul.f32.gmra.mxu0 %v78
  %v975 = vpop.f32.mrf.mxu0
  %v976 = vadd.f32 %v506, %v975
  %977 = vmatmul.f32.gmra.mxu0 %v80
  %v978 = vpop.f32.mrf.mxu0
  %v979 = vadd.f32 %v511, %v978
  %980 = vmatmul.f32.gmra.mxu0 %v82
  %v981 = vpop.f32.mrf.mxu0
  %v982 = vadd.f32 %v516, %v981
  %983 = vmatmul.f32.gmra.mxu0 %v84
  %v984 = vpop.f32.mrf.mxu0
  %v985 = vadd.f32 %v521, %v984
  %986 = vmatmul.f32.gmra.mxu0 %v86
  %v987 = vpop.f32.mrf.mxu0
  %v988 = vadd.f32 %v526, %v987
  %989 = vmatmul.f32.gmra.mxu0 %v88
  %v990 = vpop.f32.mrf.mxu0
  %v991 = vadd.f32 %v531, %v990
  %992 = vmatmul.f32.gmra.mxu0 %v90
  %v993 = vpop.f32.mrf.mxu0
  %v994 = vadd.f32 %v536, %v993
  %995 = vmatmul.f32.gmra.mxu0 %v92
  %v996 = vpop.f32.mrf.mxu0
  %v997 = vadd.f32 %v541, %v996
  %998 = vmatmul.f32.gmra.mxu0 %v94
  %v999 = vpop.f32.mrf.mxu0
  %v1000 = vadd.f32 %v546, %v999
  %1001 = vmatmul.f32.gmra.mxu0 %v96
  %v1002 = vpop.f32.mrf.mxu0
  %v1003 = vadd.f32 %v551, %v1002
  %1004 = vmatmul.f32.gmra.mxu0 %v98
  %v1005 = vpop.f32.mrf.mxu0
  %v1006 = vadd.f32 %v556, %v1005
  %1007 = vmatmul.f32.gmra.mxu0 %v100
  %v1008 = vpop.f32.mrf.mxu0
  %v1009 = vadd.f32 %v561, %v1008
  %1010 = vmatmul.f32.gmra.mxu0 %v102
  %v1011 = vpop.f32.mrf.mxu0
  %v1012 = vadd.f32 %v566, %v1011
  %1013 = vmatmul.f32.gmra.mxu0 %v104
  %v1014 = vpop.f32.mrf.mxu0
  %v1015 = vadd.f32 %v571, %v1014
  %1016 = vmatmul.f32.gmra.mxu0 %v106
  %v1017 = vpop.f32.mrf.mxu0
  %v1018 = vadd.f32 %v576, %v1017
  %1019 = vmatmul.f32.gmra.mxu0 %v108
  %v1020 = vpop.f32.mrf.mxu0
  %v1021 = vadd.f32 %v581, %v1020
  %1022 = vmatmul.f32.gmra.mxu0 %v110
  %v1023 = vpop.f32.mrf.mxu0
  %v1024 = vadd.f32 %v586, %v1023
  %1025 = vmatmul.f32.gmra.mxu0 %v112
  %v1026 = vpop.f32.mrf.mxu0
  %v1027 = vadd.f32 %v591, %v1026
  %1028 = vmatmul.f32.gmra.mxu0 %v114
  %v1029 = vpop.f32.mrf.mxu0
  %v1030 = vadd.f32 %v596, %v1029
  %1031 = vmatmul.f32.gmra.mxu0 %v116
  %v1032 = vpop.f32.mrf.mxu0
  %v1033 = vadd.f32 %v601, %v1032
  %1034 = vmatmul.f32.gmra.mxu0 %v118
  %v1035 = vpop.f32.mrf.mxu0
  %v1036 = vadd.f32 %v606, %v1035
  %1037 = vmatmul.f32.gmra.mxu0 %v120
  %v1038 = vpop.f32.mrf.mxu0
  %v1039 = vadd.f32 %v611, %v1038
  %1040 = vmatmul.f32.gmra.mxu0 %v122
  %v1041 = vpop.f32.mrf.mxu0
  %v1042 = vadd.f32 %v616, %v1041
  %1043 = vmatmul.f32.gmra.mxu0 %v124
  %v1044 = vpop.f32.mrf.mxu0
  %v1045 = vadd.f32 %v621, %v1044
  %1046 = vmatmul.f32.gmra.mxu0 %v126
  %v1047 = vpop.f32.mrf.mxu0
  %v1048 = vadd.f32 %v626, %v1047
  %1049 = vmatmul.f32.gmra.mxu0 %v128
  %v1050 = vpop.f32.mrf.mxu0
  %v1051 = vadd.f32 %v631, %v1050
  %1052 = vmatmul.f32.gmra.mxu0 %v130
  %v1053 = vpop.f32.mrf.mxu0
  %v1054 = vadd.f32 %v636, %v1053
  %1055 = vmatmul.f32.gmra.mxu0 %v132
  %v1056 = vpop.f32.mrf.mxu0
  %v1057 = vadd.f32 %v641, %v1056
  %1058 = vmatmul.f32.gmra.mxu0 %v134
  %v1059 = vpop.f32.mrf.mxu0
  %v1060 = vadd.f32 %v646, %v1059
  %1061 = vmatmul.f32.gmra.mxu0 %v136
  %v1062 = vpop.f32.mrf.mxu0
  %v1063 = vadd.f32 %v651, %v1062
  %1064 = vmatmul.f32.gmra.mxu0 %v138
  %v1065 = vpop.f32.mrf.mxu0
  %v1066 = vadd.f32 %v656, %v1065
  %1067 = vmatmul.f32.gmra.mxu0 %v140
  %v1068 = vpop.f32.mrf.mxu0
  %v1069 = vadd.f32 %v661, %v1068
  %1070 = vmatmul.f32.gmra.mxu0 %v142
  %v1071 = vpop.f32.mrf.mxu0
  %v1072 = vadd.f32 %v666, %v1071
  %1073 = vmatmul.f32.gmra.mxu0 %v144
  %v1074 = vpop.f32.mrf.mxu0
  %v1075 = vadd.f32 %v671, %v1074
  %1076 = vmatmul.f32.gmra.mxu0 %v146
  %v1077 = vpop.f32.mrf.mxu0
  %v1078 = vadd.f32 %v676, %v1077
  %1079 = vdwg.mxu0
  %1080 = vmatpush.msra.mxu0 0.0
  %1081 = vmatpush.msra.mxu0 0.0
  %1082 = vmatpush.msra.mxu0 0.0
  %1083 = vmatpush.msra.mxu0 0.0
  %1084 = vmatpush.msra.mxu0 0.0
  %1085 = vmatpush.msra.mxu0 0.0
  %1086 = vmatpush.msra.mxu0 0.0
  %1087 = vmatpush.msra.mxu0 0.0
  %1088 = vmatpush.msra.mxu0 0.0
  %1089 = vmatpush.msra.mxu0 0.0
  %1090 = vmatpush.msra.mxu0 0.0
  %1091 = vmatpush.msra.mxu0 0.0
  %1092 = vmatpush.msra.mxu0 0.0
  %1093 = vmatpush.msra.mxu0 0.0
  %1094 = vmatpush.msra.mxu0 %v165
  %1095 = vmatpush.msra.mxu0 %v164
  %1096 = vmatmul.f32.gmra.mxu0 %v680
  %v1097 = vpop.f32.mrf.mxu0
  %v1098 = vadd.f32 %v889, %v1097
  %1099 = vmatmul.f32.gmra.mxu0 %v683
  %v1100 = vpop.f32.mrf.mxu0
  %v1101 = vadd.f32 %v892, %v1100
  %1102 = vmatmul.f32.gmra.mxu0 %v686
  %v1103 = vpop.f32.mrf.mxu0
  %v1104 = vadd.f32 %v895, %v1103
  %1105 = vmatmul.f32.gmra.mxu0 %v689
  %v1106 = vpop.f32.mrf.mxu0
  %v1107 = vadd.f32 %v898, %v1106
  %1108 = vmatmul.f32.gmra.mxu0 %v692
  %v1109 = vpop.f32.mrf.mxu0
  %v1110 = vadd.f32 %v901, %v1109
  %1111 = vmatmul.f32.gmra.mxu0 %v695
  %v1112 = vpop.f32.mrf.mxu0
  %v1113 = vadd.f32 %v904, %v1112
  %1114 = vmatmul.f32.gmra.mxu0 %v698
  %v1115 = vpop.f32.mrf.mxu0
  %v1116 = vadd.f32 %v907, %v1115
  %1117 = vmatmul.f32.gmra.mxu0 %v701
  %v1118 = vpop.f32.mrf.mxu0
  %v1119 = vadd.f32 %v910, %v1118
  %1120 = vmatmul.f32.gmra.mxu0 %v704
  %v1121 = vpop.f32.mrf.mxu0
  %v1122 = vadd.f32 %v913, %v1121
  %1123 = vmatmul.f32.gmra.mxu0 %v707
  %v1124 = vpop.f32.mrf.mxu0
  %v1125 = vadd.f32 %v916, %v1124
  %1126 = vmatmul.f32.gmra.mxu0 %v710
  %v1127 = vpop.f32.mrf.mxu0
  %v1128 = vadd.f32 %v919, %v1127
  %1129 = vmatmul.f32.gmra.mxu0 %v713
  %v1130 = vpop.f32.mrf.mxu0
  %v1131 = vadd.f32 %v922, %v1130
  %1132 = vmatmul.f32.gmra.mxu0 %v716
  %v1133 = vpop.f32.mrf.mxu0
  %v1134 = vadd.f32 %v925, %v1133
  %1135 = vmatmul.f32.gmra.mxu0 %v719
  %v1136 = vpop.f32.mrf.mxu0
  %v1137 = vadd.f32 %v928, %v1136
  %1138 = vmatmul.f32.gmra.mxu0 %v722
  %v1139 = vpop.f32.mrf.mxu0
  %v1140 = vadd.f32 %v931, %v1139
  %1141 = vmatmul.f32.gmra.mxu0 %v725
  %v1142 = vpop.f32.mrf.mxu0
  %v1143 = vadd.f32 %v934, %v1142
  %1144 = vmatmul.f32.gmra.mxu0 %v728
  %v1145 = vpop.f32.mrf.mxu0
  %v1146 = vadd.f32 %v937, %v1145
  %1147 = vmatmul.f32.gmra.mxu0 %v731
  %v1148 = vpop.f32.mrf.mxu0
  %v1149 = vadd.f32 %v940, %v1148
  %1150 = vmatmul.f32.gmra.mxu0 %v734
  %v1151 = vpop.f32.mrf.mxu0
  %v1152 = vadd.f32 %v943, %v1151
  %1153 = vmatmul.f32.gmra.mxu0 %v737
  %v1154 = vpop.f32.mrf.mxu0
  %v1155 = vadd.f32 %v946, %v1154
  %1156 = vmatmul.f32.gmra.mxu0 %v740
  %v1157 = vpop.f32.mrf.mxu0
  %v1158 = vadd.f32 %v949, %v1157
  %1159 = vmatmul.f32.gmra.mxu0 %v743
  %v1160 = vpop.f32.mrf.mxu0
  %v1161 = vadd.f32 %v952, %v1160
  %1162 = vmatmul.f32.gmra.mxu0 %v746
  %v1163 = vpop.f32.mrf.mxu0
  %v1164 = vadd.f32 %v955, %v1163
  %1165 = vmatmul.f32.gmra.mxu0 %v749
  %v1166 = vpop.f32.mrf.mxu0
  %v1167 = vadd.f32 %v958, %v1166
  %1168 = vmatmul.f32.gmra.mxu0 %v752
  %v1169 = vpop.f32.mrf.mxu0
  %v1170 = vadd.f32 %v961, %v1169
  %1171 = vmatmul.f32.gmra.mxu0 %v755
  %v1172 = vpop.f32.mrf.mxu0
  %v1173 = vadd.f32 %v964, %v1172
  %1174 = vmatmul.f32.gmra.mxu0 %v758
  %v1175 = vpop.f32.mrf.mxu0
  %v1176 = vadd.f32 %v967, %v1175
  %1177 = vmatmul.f32.gmra.mxu0 %v761
  %v1178 = vpop.f32.mrf.mxu0
  %v1179 = vadd.f32 %v970, %v1178
  %1180 = vmatmul.f32.gmra.mxu0 %v764
  %v1181 = vpop.f32.mrf.mxu0
  %v1182 = vadd.f32 %v973, %v1181
  %1183 = vmatmul.f32.gmra.mxu0 %v767
  %v1184 = vpop.f32.mrf.mxu0
  %v1185 = vadd.f32 %v976, %v1184
  %1186 = vmatmul.f32.gmra.mxu0 %v770
  %v1187 = vpop.f32.mrf.mxu0
  %v1188 = vadd.f32 %v979, %v1187
  %1189 = vmatmul.f32.gmra.mxu0 %v773
  %v1190 = vpop.f32.mrf.mxu0
  %v1191 = vadd.f32 %v982, %v1190
  %1192 = vmatmul.f32.gmra.mxu0 %v776
  %v1193 = vpop.f32.mrf.mxu0
  %v1194 = vadd.f32 %v985, %v1193
  %1195 = vmatmul.f32.gmra.mxu0 %v779
  %v1196 = vpop.f32.mrf.mxu0
  %v1197 = vadd.f32 %v988, %v1196
  %1198 = vmatmul.f32.gmra.mxu0 %v782
  %v1199 = vpop.f32.mrf.mxu0
  %v1200 = vadd.f32 %v991, %v1199
  %1201 = vmatmul.f32.gmra.mxu0 %v785
  %v1202 = vpop.f32.mrf.mxu0
  %v1203 = vadd.f32 %v994, %v1202
  %1204 = vmatmul.f32.gmra.mxu0 %v788
  %v1205 = vpop.f32.mrf.mxu0
  %v1206 = vadd.f32 %v997, %v1205
  %1207 = vmatmul.f32.gmra.mxu0 %v791
  %v1208 = vpop.f32.mrf.mxu0
  %v1209 = vadd.f32 %v1000, %v1208
  %1210 = vmatmul.f32.gmra.mxu0 %v794
  %v1211 = vpop.f32.mrf.mxu0
  %v1212 = vadd.f32 %v1003, %v1211
  %1213 = vmatmul.f32.gmra.mxu0 %v797
  %v1214 = vpop.f32.mrf.mxu0
  %v1215 = vadd.f32 %v1006, %v1214
  %1216 = vmatmul.f32.gmra.mxu0 %v800
  %v1217 = vpop.f32.mrf.mxu0
  %v1218 = vadd.f32 %v1009, %v1217
  %1219 = vmatmul.f32.gmra.mxu0 %v803
  %v1220 = vpop.f32.mrf.mxu0
  %v1221 = vadd.f32 %v1012, %v1220
  %1222 = vmatmul.f32.gmra.mxu0 %v806
  %v1223 = vpop.f32.mrf.mxu0
  %v1224 = vadd.f32 %v1015, %v1223
  %1225 = vmatmul.f32.gmra.mxu0 %v809
  %v1226 = vpop.f32.mrf.mxu0
  %v1227 = vadd.f32 %v1018, %v1226
  %1228 = vmatmul.f32.gmra.mxu0 %v812
  %v1229 = vpop.f32.mrf.mxu0
  %v1230 = vadd.f32 %v1021, %v1229
  %1231 = vmatmul.f32.gmra.mxu0 %v815
  %v1232 = vpop.f32.mrf.mxu0
  %v1233 = vadd.f32 %v1024, %v1232
  %1234 = vmatmul.f32.gmra.mxu0 %v818
  %v1235 = vpop.f32.mrf.mxu0
  %v1236 = vadd.f32 %v1027, %v1235
  %1237 = vmatmul.f32.gmra.mxu0 %v821
  %v1238 = vpop.f32.mrf.mxu0
  %v1239 = vadd.f32 %v1030, %v1238
  %1240 = vmatmul.f32.gmra.mxu0 %v824
  %v1241 = vpop.f32.mrf.mxu0
  %v1242 = vadd.f32 %v1033, %v1241
  %1243 = vmatmul.f32.gmra.mxu0 %v827
  %v1244 = vpop.f32.mrf.mxu0
  %v1245 = vadd.f32 %v1036, %v1244
  %1246 = vmatmul.f32.gmra.mxu0 %v830
  %v1247 = vpop.f32.mrf.mxu0
  %v1248 = vadd.f32 %v1039, %v1247
  %1249 = vmatmul.f32.gmra.mxu0 %v833
  %v1250 = vpop.f32.mrf.mxu0
  %v1251 = vadd.f32 %v1042, %v1250
  %1252 = vmatmul.f32.gmra.mxu0 %v836
  %v1253 = vpop.f32.mrf.mxu0
  %v1254 = vadd.f32 %v1045, %v1253
  %1255 = vmatmul.f32.gmra.mxu0 %v839
  %v1256 = vpop.f32.mrf.mxu0
  %v1257 = vadd.f32 %v1048, %v1256
  %1258 = vmatmul.f32.gmra.mxu0 %v842
  %v1259 = vpop.f32.mrf.mxu0
  %v1260 = vadd.f32 %v1051, %v1259
  %1261 = vmatmul.f32.gmra.mxu0 %v845
  %v1262 = vpop.f32.mrf.mxu0
  %v1263 = vadd.f32 %v1054, %v1262
  %1264 = vmatmul.f32.gmra.mxu0 %v848
  %v1265 = vpop.f32.mrf.mxu0
  %v1266 = vadd.f32 %v1057, %v1265
  %1267 = vmatmul.f32.gmra.mxu0 %v851
  %v1268 = vpop.f32.mrf.mxu0
  %v1269 = vadd.f32 %v1060, %v1268
  %1270 = vmatmul.f32.gmra.mxu0 %v854
  %v1271 = vpop.f32.mrf.mxu0
  %v1272 = vadd.f32 %v1063, %v1271
  %1273 = vmatmul.f32.gmra.mxu0 %v857
  %v1274 = vpop.f32.mrf.mxu0
  %v1275 = vadd.f32 %v1066, %v1274
  %1276 = vmatmul.f32.gmra.mxu0 %v860
  %v1277 = vpop.f32.mrf.mxu0
  %v1278 = vadd.f32 %v1069, %v1277
  %1279 = vmatmul.f32.gmra.mxu0 %v863
  %v1280 = vpop.f32.mrf.mxu0
  %v1281 = vadd.f32 %v1072, %v1280
  %1282 = vmatmul.f32.gmra.mxu0 %v866
  %v1283 = vpop.f32.mrf.mxu0
  %v1284 = vadd.f32 %v1075, %v1283
  %1285 = vmatmul.f32.gmra.mxu0 %v869
  %v1286 = vpop.f32.mrf.mxu0
  %v1287 = vadd.f32 %v1078, %v1286
  %1288 = vdwg.mxu0
  %vm1289 = vcmask 64512
  %v1290 = vsel %vm1289, %v1098, 0.0
  %1291 = vadd.xlane.f32.xlu0 %v1290
  %v1292 = vpop.xlane.xlu0 %1291
  %v1293 = vsel %vm1289, %v1101, 0.0
  %1294 = vadd.xlane.f32.xlu0 %v1293
  %v1295 = vpop.xlane.xlu0 %1294
  %v1296 = vsel %vm1289, %v1104, 0.0
  %1297 = vadd.xlane.f32.xlu0 %v1296
  %v1298 = vpop.xlane.xlu0 %1297
  %v1299 = vsel %vm1289, %v1107, 0.0
  %1300 = vadd.xlane.f32.xlu0 %v1299
  %v1301 = vpop.xlane.xlu0 %1300
  %v1302 = vsel %vm1289, %v1110, 0.0
  %1303 = vadd.xlane.f32.xlu0 %v1302
  %v1304 = vpop.xlane.xlu0 %1303
  %v1305 = vsel %vm1289, %v1113, 0.0
  %1306 = vadd.xlane.f32.xlu0 %v1305
  %v1307 = vpop.xlane.xlu0 %1306
  %v1308 = vsel %vm1289, %v1116, 0.0
  %1309 = vadd.xlane.f32.xlu0 %v1308
  %v1310 = vpop.xlane.xlu0 %1309
  %v1311 = vsel %vm1289, %v1119, 0.0
  %1312 = vadd.xlane.f32.xlu0 %v1311
  %v1313 = vpop.xlane.xlu0 %1312
  %v1314 = vsel %vm1289, %v1122, 0.0
  %1315 = vadd.xlane.f32.xlu0 %v1314
  %v1316 = vpop.xlane.xlu0 %1315
  %v1317 = vsel %vm1289, %v1125, 0.0
  %1318 = vadd.xlane.f32.xlu0 %v1317
  %v1319 = vpop.xlane.xlu0 %1318
  %v1320 = vsel %vm1289, %v1128, 0.0
  %1321 = vadd.xlane.f32.xlu0 %v1320
  %v1322 = vpop.xlane.xlu0 %1321
  %v1323 = vsel %vm1289, %v1131, 0.0
  %1324 = vadd.xlane.f32.xlu0 %v1323
  %v1325 = vpop.xlane.xlu0 %1324
  %v1326 = vsel %vm1289, %v1134, 0.0
  %1327 = vadd.xlane.f32.xlu0 %v1326
  %v1328 = vpop.xlane.xlu0 %1327
  %v1329 = vsel %vm1289, %v1137, 0.0
  %1330 = vadd.xlane.f32.xlu0 %v1329
  %v1331 = vpop.xlane.xlu0 %1330
  %v1332 = vsel %vm1289, %v1140, 0.0
  %1333 = vadd.xlane.f32.xlu0 %v1332
  %v1334 = vpop.xlane.xlu0 %1333
  %v1335 = vsel %vm1289, %v1143, 0.0
  %1336 = vadd.xlane.f32.xlu0 %v1335
  %v1337 = vpop.xlane.xlu0 %1336
  %v1338 = vsel %vm1289, %v1146, 0.0
  %1339 = vadd.xlane.f32.xlu0 %v1338
  %v1340 = vpop.xlane.xlu0 %1339
  %v1341 = vsel %vm1289, %v1149, 0.0
  %1342 = vadd.xlane.f32.xlu0 %v1341
  %v1343 = vpop.xlane.xlu0 %1342
  %v1344 = vsel %vm1289, %v1152, 0.0
  %1345 = vadd.xlane.f32.xlu0 %v1344
  %v1346 = vpop.xlane.xlu0 %1345
  %v1347 = vsel %vm1289, %v1155, 0.0
  %1348 = vadd.xlane.f32.xlu0 %v1347
  %v1349 = vpop.xlane.xlu0 %1348
  %v1350 = vsel %vm1289, %v1158, 0.0
  %1351 = vadd.xlane.f32.xlu0 %v1350
  %v1352 = vpop.xlane.xlu0 %1351
  %v1353 = vsel %vm1289, %v1161, 0.0
  %1354 = vadd.xlane.f32.xlu0 %v1353
  %v1355 = vpop.xlane.xlu0 %1354
  %v1356 = vsel %vm1289, %v1164, 0.0
  %1357 = vadd.xlane.f32.xlu0 %v1356
  %v1358 = vpop.xlane.xlu0 %1357
  %v1359 = vsel %vm1289, %v1167, 0.0
  %1360 = vadd.xlane.f32.xlu0 %v1359
  %v1361 = vpop.xlane.xlu0 %1360
  %v1362 = vsel %vm1289, %v1170, 0.0
  %1363 = vadd.xlane.f32.xlu0 %v1362
  %v1364 = vpop.xlane.xlu0 %1363
  %v1365 = vsel %vm1289, %v1173, 0.0
  %1366 = vadd.xlane.f32.xlu0 %v1365
  %v1367 = vpop.xlane.xlu0 %1366
  %v1368 = vsel %vm1289, %v1176, 0.0
  %1369 = vadd.xlane.f32.xlu0 %v1368
  %v1370 = vpop.xlane.xlu0 %1369
  %v1371 = vsel %vm1289, %v1179, 0.0
  %1372 = vadd.xlane.f32.xlu0 %v1371
  %v1373 = vpop.xlane.xlu0 %1372
  %v1374 = vsel %vm1289, %v1182, 0.0
  %1375 = vadd.xlane.f32.xlu0 %v1374
  %v1376 = vpop.xlane.xlu0 %1375
  %v1377 = vsel %vm1289, %v1185, 0.0
  %1378 = vadd.xlane.f32.xlu0 %v1377
  %v1379 = vpop.xlane.xlu0 %1378
  %v1380 = vsel %vm1289, %v1188, 0.0
  %1381 = vadd.xlane.f32.xlu0 %v1380
  %v1382 = vpop.xlane.xlu0 %1381
  %v1383 = vsel %vm1289, %v1191, 0.0
  %1384 = vadd.xlane.f32.xlu0 %v1383
  %v1385 = vpop.xlane.xlu0 %1384
  %v1386 = vsel %vm1289, %v1194, 0.0
  %1387 = vadd.xlane.f32.xlu0 %v1386
  %v1388 = vpop.xlane.xlu0 %1387
  %v1389 = vsel %vm1289, %v1197, 0.0
  %1390 = vadd.xlane.f32.xlu0 %v1389
  %v1391 = vpop.xlane.xlu0 %1390
  %v1392 = vsel %vm1289, %v1200, 0.0
  %1393 = vadd.xlane.f32.xlu0 %v1392
  %v1394 = vpop.xlane.xlu0 %1393
  %v1395 = vsel %vm1289, %v1203, 0.0
  %1396 = vadd.xlane.f32.xlu0 %v1395
  %v1397 = vpop.xlane.xlu0 %1396
  %v1398 = vsel %vm1289, %v1206, 0.0
  %1399 = vadd.xlane.f32.xlu0 %v1398
  %v1400 = vpop.xlane.xlu0 %1399
  %v1401 = vsel %vm1289, %v1209, 0.0
  %1402 = vadd.xlane.f32.xlu0 %v1401
  %v1403 = vpop.xlane.xlu0 %1402
  %v1404 = vsel %vm1289, %v1212, 0.0
  %1405 = vadd.xlane.f32.xlu0 %v1404
  %v1406 = vpop.xlane.xlu0 %1405
  %v1407 = vsel %vm1289, %v1215, 0.0
  %1408 = vadd.xlane.f32.xlu0 %v1407
  %v1409 = vpop.xlane.xlu0 %1408
  %v1410 = vsel %vm1289, %v1218, 0.0
  %1411 = vadd.xlane.f32.xlu0 %v1410
  %v1412 = vpop.xlane.xlu0 %1411
  %v1413 = vsel %vm1289, %v1221, 0.0
  %1414 = vadd.xlane.f32.xlu0 %v1413
  %v1415 = vpop.xlane.xlu0 %1414
  %v1416 = vsel %vm1289, %v1224, 0.0
  %1417 = vadd.xlane.f32.xlu0 %v1416
  %v1418 = vpop.xlane.xlu0 %1417
  %v1419 = vsel %vm1289, %v1227, 0.0
  %1420 = vadd.xlane.f32.xlu0 %v1419
  %v1421 = vpop.xlane.xlu0 %1420
  %v1422 = vsel %vm1289, %v1230, 0.0
  %1423 = vadd.xlane.f32.xlu0 %v1422
  %v1424 = vpop.xlane.xlu0 %1423
  %v1425 = vsel %vm1289, %v1233, 0.0
  %1426 = vadd.xlane.f32.xlu0 %v1425
  %v1427 = vpop.xlane.xlu0 %1426
  %v1428 = vsel %vm1289, %v1236, 0.0
  %1429 = vadd.xlane.f32.xlu0 %v1428
  %v1430 = vpop.xlane.xlu0 %1429
  %v1431 = vsel %vm1289, %v1239, 0.0
  %1432 = vadd.xlane.f32.xlu0 %v1431
  %v1433 = vpop.xlane.xlu0 %1432
  %v1434 = vsel %vm1289, %v1242, 0.0
  %1435 = vadd.xlane.f32.xlu0 %v1434
  %v1436 = vpop.xlane.xlu0 %1435
  %v1437 = vsel %vm1289, %v1245, 0.0
  %1438 = vadd.xlane.f32.xlu0 %v1437
  %v1439 = vpop.xlane.xlu0 %1438
  %v1440 = vsel %vm1289, %v1248, 0.0
  %1441 = vadd.xlane.f32.xlu0 %v1440
  %v1442 = vpop.xlane.xlu0 %1441
  %v1443 = vsel %vm1289, %v1251, 0.0
  %1444 = vadd.xlane.f32.xlu0 %v1443
  %v1445 = vpop.xlane.xlu0 %1444
  %v1446 = vsel %vm1289, %v1254, 0.0
  %1447 = vadd.xlane.f32.xlu0 %v1446
  %v1448 = vpop.xlane.xlu0 %1447
  %v1449 = vsel %vm1289, %v1257, 0.0
  %1450 = vadd.xlane.f32.xlu0 %v1449
  %v1451 = vpop.xlane.xlu0 %1450
  %v1452 = vsel %vm1289, %v1260, 0.0
  %1453 = vadd.xlane.f32.xlu0 %v1452
  %v1454 = vpop.xlane.xlu0 %1453
  %v1455 = vsel %vm1289, %v1263, 0.0
  %1456 = vadd.xlane.f32.xlu0 %v1455
  %v1457 = vpop.xlane.xlu0 %1456
  %v1458 = vsel %vm1289, %v1266, 0.0
  %1459 = vadd.xlane.f32.xlu0 %v1458
  %v1460 = vpop.xlane.xlu0 %1459
  %v1461 = vsel %vm1289, %v1269, 0.0
  %1462 = vadd.xlane.f32.xlu0 %v1461
  %v1463 = vpop.xlane.xlu0 %1462
  %v1464 = vsel %vm1289, %v1272, 0.0
  %1465 = vadd.xlane.f32.xlu0 %v1464
  %v1466 = vpop.xlane.xlu0 %1465
  %v1467 = vsel %vm1289, %v1275, 0.0
  %1468 = vadd.xlane.f32.xlu0 %v1467
  %v1469 = vpop.xlane.xlu0 %1468
  %v1470 = vsel %vm1289, %v1278, 0.0
  %1471 = vadd.xlane.f32.xlu0 %v1470
  %v1472 = vpop.xlane.xlu0 %1471
  %v1473 = vsel %vm1289, %v1281, 0.0
  %1474 = vadd.xlane.f32.xlu0 %v1473
  %v1475 = vpop.xlane.xlu0 %1474
  %v1476 = vsel %vm1289, %v1284, 0.0
  %1477 = vadd.xlane.f32.xlu0 %v1476
  %v1478 = vpop.xlane.xlu0 %1477
  %v1479 = vsel %vm1289, %v1287, 0.0
  %1480 = vadd.xlane.f32.xlu0 %v1479
  %v1481 = vpop.xlane.xlu0 %1480
  %v1482 = vrcp.pop 8.0
  %v1483 = vmul.f32 8.0, %v1482
  %v1484 = vsub.f32 1.0, %v1483
  %v1485 = vmul.f32 %v1482, %v1484
  %v1486 = vadd.f32 %v1482, %v1485
  %vm1487 = vweird.f32 %v1482
  %v1488 = vsel %vm1487, %v1482, %v1486
  %v1489 = vmul.f32 %v1292, %v1488
  %v1490 = vmul.f32 %v1295, %v1488
  %v1491 = vmul.f32 %v1298, %v1488
  %v1492 = vmul.f32 %v1301, %v1488
  %v1493 = vmul.f32 %v1304, %v1488
  %v1494 = vmul.f32 %v1307, %v1488
  %v1495 = vmul.f32 %v1310, %v1488
  %v1496 = vmul.f32 %v1313, %v1488
  %v1497 = vmul.f32 %v1316, %v1488
  %v1498 = vmul.f32 %v1319, %v1488
  %v1499 = vmul.f32 %v1322, %v1488
  %v1500 = vmul.f32 %v1325, %v1488
  %v1501 = vmul.f32 %v1328, %v1488
  %v1502 = vmul.f32 %v1331, %v1488
  %v1503 = vmul.f32 %v1334, %v1488
  %v1504 = vmul.f32 %v1337, %v1488
  %v1505 = vmul.f32 %v1340, %v1488
  %v1506 = vmul.f32 %v1343, %v1488
  %v1507 = vmul.f32 %v1346, %v1488
  %v1508 = vmul.f32 %v1349, %v1488
  %v1509 = vmul.f32 %v1352, %v1488
  %v1510 = vmul.f32 %v1355, %v1488
  %v1511 = vmul.f32 %v1358, %v1488
  %v1512 = vmul.f32 %v1361, %v1488
  %v1513 = vmul.f32 %v1364, %v1488
  %v1514 = vmul.f32 %v1367, %v1488
  %v1515 = vmul.f32 %v1370, %v1488
  %v1516 = vmul.f32 %v1373, %v1488
  %v1517 = vmul.f32 %v1376, %v1488
  %v1518 = vmul.f32 %v1379, %v1488
  %v1519 = vmul.f32 %v1382, %v1488
  %v1520 = vmul.f32 %v1385, %v1488
  %v1521 = vmul.f32 %v1388, %v1488
  %v1522 = vmul.f32 %v1391, %v1488
  %v1523 = vmul.f32 %v1394, %v1488
  %v1524 = vmul.f32 %v1397, %v1488
  %v1525 = vmul.f32 %v1400, %v1488
  %v1526 = vmul.f32 %v1403, %v1488
  %v1527 = vmul.f32 %v1406, %v1488
  %v1528 = vmul.f32 %v1409, %v1488
  %v1529 = vmul.f32 %v1412, %v1488
  %v1530 = vmul.f32 %v1415, %v1488
  %v1531 = vmul.f32 %v1418, %v1488
  %v1532 = vmul.f32 %v1421, %v1488
  %v1533 = vmul.f32 %v1424, %v1488
  %v1534 = vmul.f32 %v1427, %v1488
  %v1535 = vmul.f32 %v1430, %v1488
  %v1536 = vmul.f32 %v1433, %v1488
  %v1537 = vmul.f32 %v1436, %v1488
  %v1538 = vmul.f32 %v1439, %v1488
  %v1539 = vmul.f32 %v1442, %v1488
  %v1540 = vmul.f32 %v1445, %v1488
  %v1541 = vmul.f32 %v1448, %v1488
  %v1542 = vmul.f32 %v1451, %v1488
  %v1543 = vmul.f32 %v1454, %v1488
  %v1544 = vmul.f32 %v1457, %v1488
  %v1545 = vmul.f32 %v1460, %v1488
  %v1546 = vmul.f32 %v1463, %v1488
  %v1547 = vmul.f32 %v1466, %v1488
  %v1548 = vmul.f32 %v1469, %v1488
  %v1549 = vmul.f32 %v1472, %v1488
  %v1550 = vmul.f32 %v1475, %v1488
  %v1551 = vmul.f32 %v1478, %v1488
  %v1552 = vmul.f32 %v1481, %v1488
  %v1553 = vsub.f32 %v1098, %v1489
  %v1554 = vsub.f32 %v1101, %v1490
  %v1555 = vsub.f32 %v1104, %v1491
  %v1556 = vsub.f32 %v1107, %v1492
  %v1557 = vsub.f32 %v1110, %v1493
  %v1558 = vsub.f32 %v1113, %v1494
  %v1559 = vsub.f32 %v1116, %v1495
  %v1560 = vsub.f32 %v1119, %v1496
  %v1561 = vsub.f32 %v1122, %v1497
  %v1562 = vsub.f32 %v1125, %v1498
  %v1563 = vsub.f32 %v1128, %v1499
  %v1564 = vsub.f32 %v1131, %v1500
  %v1565 = vsub.f32 %v1134, %v1501
  %v1566 = vsub.f32 %v1137, %v1502
  %v1567 = vsub.f32 %v1140, %v1503
  %v1568 = vsub.f32 %v1143, %v1504
  %v1569 = vsub.f32 %v1146, %v1505
  %v1570 = vsub.f32 %v1149, %v1506
  %v1571 = vsub.f32 %v1152, %v1507
  %v1572 = vsub.f32 %v1155, %v1508
  %v1573 = vsub.f32 %v1158, %v1509
  %v1574 = vsub.f32 %v1161, %v1510
  %v1575 = vsub.f32 %v1164, %v1511
  %v1576 = vsub.f32 %v1167, %v1512
  %v1577 = vsub.f32 %v1170, %v1513
  %v1578 = vsub.f32 %v1173, %v1514
  %v1579 = vsub.f32 %v1176, %v1515
  %v1580 = vsub.f32 %v1179, %v1516
  %v1581 = vsub.f32 %v1182, %v1517
  %v1582 = vsub.f32 %v1185, %v1518
  %v1583 = vsub.f32 %v1188, %v1519
  %v1584 = vsub.f32 %v1191, %v1520
  %v1585 = vsub.f32 %v1194, %v1521
  %v1586 = vsub.f32 %v1197, %v1522
  %v1587 = vsub.f32 %v1200, %v1523
  %v1588 = vsub.f32 %v1203, %v1524
  %v1589 = vsub.f32 %v1206, %v1525
  %v1590 = vsub.f32 %v1209, %v1526
  %v1591 = vsub.f32 %v1212, %v1527
  %v1592 = vsub.f32 %v1215, %v1528
  %v1593 = vsub.f32 %v1218, %v1529
  %v1594 = vsub.f32 %v1221, %v1530
  %v1595 = vsub.f32 %v1224, %v1531
  %v1596 = vsub.f32 %v1227, %v1532
  %v1597 = vsub.f32 %v1230, %v1533
  %v1598 = vsub.f32 %v1233, %v1534
  %v1599 = vsub.f32 %v1236, %v1535
  %v1600 = vsub.f32 %v1239, %v1536
  %v1601 = vsub.f32 %v1242, %v1537
  %v1602 = vsub.f32 %v1245, %v1538
  %v1603 = vsub.f32 %v1248, %v1539
  %v1604 = vsub.f32 %v1251, %v1540
  %v1605 = vsub.f32 %v1254, %v1541
  %v1606 = vsub.f32 %v1257, %v1542
  %v1607 = vsub.f32 %v1260, %v1543
  %v1608 = vsub.f32 %v1263, %v1544
  %v1609 = vsub.f32 %v1266, %v1545
  %v1610 = vsub.f32 %v1269, %v1546
  %v1611 = vsub.f32 %v1272, %v1547
  %v1612 = vsub.f32 %v1275, %v1548
  %v1613 = vsub.f32 %v1278, %v1549
  %v1614 = vsub.f32 %v1281, %v1550
  %v1615 = vsub.f32 %v1284, %v1551
  %v1616 = vsub.f32 %v1287, %v1552
  %v1617 = vmul.f32 %v1553, %v1553
  %v1618 = vmul.f32 %v1554, %v1554
  %v1619 = vmul.f32 %v1555, %v1555
  %v1620 = vmul.f32 %v1556, %v1556
  %v1621 = vmul.f32 %v1557, %v1557
  %v1622 = vmul.f32 %v1558, %v1558
  %v1623 = vmul.f32 %v1559, %v1559
  %v1624 = vmul.f32 %v1560, %v1560
  %v1625 = vmul.f32 %v1561, %v1561
  %v1626 = vmul.f32 %v1562, %v1562
  %v1627 = vmul.f32 %v1563, %v1563
  %v1628 = vmul.f32 %v1564, %v1564
  %v1629 = vmul.f32 %v1565, %v1565
  %v1630 = vmul.f32 %v1566, %v1566
  %v1631 = vmul.f32 %v1567, %v1567
  %v1632 = vmul.f32 %v1568, %v1568
  %v1633 = vmul.f32 %v1569, %v1569
  %v1634 = vmul.f32 %v1570, %v1570
  %v1635 = vmul.f32 %v1571, %v1571
  %v1636 = vmul.f32 %v1572, %v1572
  %v1637 = vmul.f32 %v1573, %v1573
  %v1638 = vmul.f32 %v1574, %v1574
  %v1639 = vmul.f32 %v1575, %v1575
  %v1640 = vmul.f32 %v1576, %v1576
  %v1641 = vmul.f32 %v1577, %v1577
  %v1642 = vmul.f32 %v1578, %v1578
  %v1643 = vmul.f32 %v1579, %v1579
  %v1644 = vmul.f32 %v1580, %v1580
  %v1645 = vmul.f32 %v1581, %v1581
  %v1646 = vmul.f32 %v1582, %v1582
  %v1647 = vmul.f32 %v1583, %v1583
  %v1648 = vmul.f32 %v1584, %v1584
  %v1649 = vmul.f32 %v1585, %v1585
  %v1650 = vmul.f32 %v1586, %v1586
  %v1651 = vmul.f32 %v1587, %v1587
  %v1652 = vmul.f32 %v1588, %v1588
  %v1653 = vmul.f32 %v1589, %v1589
  %v1654 = vmul.f32 %v1590, %v1590
  %v1655 = vmul.f32 %v1591, %v1591
  %v1656 = vmul.f32 %v1592, %v1592
  %v1657 = vmul.f32 %v1593, %v1593
  %v1658 = vmul.f32 %v1594, %v1594
  %v1659 = vmul.f32 %v1595, %v1595
  %v1660 = vmul.f32 %v1596, %v1596
  %v1661 = vmul.f32 %v1597, %v1597
  %v1662 = vmul.f32 %v1598, %v1598
  %v1663 = vmul.f32 %v1599, %v1599
  %v1664 = vmul.f32 %v1600, %v1600
  %v1665 = vmul.f32 %v1601, %v1601
  %v1666 = vmul.f32 %v1602, %v1602
  %v1667 = vmul.f32 %v1603, %v1603
  %v1668 = vmul.f32 %v1604, %v1604
  %v1669 = vmul.f32 %v1605, %v1605
  %v1670 = vmul.f32 %v1606, %v1606
  %v1671 = vmul.f32 %v1607, %v1607
  %v1672 = vmul.f32 %v1608, %v1608
  %v1673 = vmul.f32 %v1609, %v1609
  %v1674 = vmul.f32 %v1610, %v1610
  %v1675 = vmul.f32 %v1611, %v1611
  %v1676 = vmul.f32 %v1612, %v1612
  %v1677 = vmul.f32 %v1613, %v1613
  %v1678 = vmul.f32 %v1614, %v1614
  %v1679 = vmul.f32 %v1615, %v1615
  %v1680 = vmul.f32 %v1616, %v1616
  %v1681 = vsel %vm1289, %v1617, 0.0
  %1682 = vadd.xlane.f32.xlu0 %v1681
  %v1683 = vpop.xlane.xlu0 %1682
  %v1684 = vsel %vm1289, %v1618, 0.0
  %1685 = vadd.xlane.f32.xlu0 %v1684
  %v1686 = vpop.xlane.xlu0 %1685
  %v1687 = vsel %vm1289, %v1619, 0.0
  %1688 = vadd.xlane.f32.xlu0 %v1687
  %v1689 = vpop.xlane.xlu0 %1688
  %v1690 = vsel %vm1289, %v1620, 0.0
  %1691 = vadd.xlane.f32.xlu0 %v1690
  %v1692 = vpop.xlane.xlu0 %1691
  %v1693 = vsel %vm1289, %v1621, 0.0
  %1694 = vadd.xlane.f32.xlu0 %v1693
  %v1695 = vpop.xlane.xlu0 %1694
  %v1696 = vsel %vm1289, %v1622, 0.0
  %1697 = vadd.xlane.f32.xlu0 %v1696
  %v1698 = vpop.xlane.xlu0 %1697
  %v1699 = vsel %vm1289, %v1623, 0.0
  %1700 = vadd.xlane.f32.xlu0 %v1699
  %v1701 = vpop.xlane.xlu0 %1700
  %v1702 = vsel %vm1289, %v1624, 0.0
  %1703 = vadd.xlane.f32.xlu0 %v1702
  %v1704 = vpop.xlane.xlu0 %1703
  %v1705 = vsel %vm1289, %v1625, 0.0
  %1706 = vadd.xlane.f32.xlu0 %v1705
  %v1707 = vpop.xlane.xlu0 %1706
  %v1708 = vsel %vm1289, %v1626, 0.0
  %1709 = vadd.xlane.f32.xlu0 %v1708
  %v1710 = vpop.xlane.xlu0 %1709
  %v1711 = vsel %vm1289, %v1627, 0.0
  %1712 = vadd.xlane.f32.xlu0 %v1711
  %v1713 = vpop.xlane.xlu0 %1712
  %v1714 = vsel %vm1289, %v1628, 0.0
  %1715 = vadd.xlane.f32.xlu0 %v1714
  %v1716 = vpop.xlane.xlu0 %1715
  %v1717 = vsel %vm1289, %v1629, 0.0
  %1718 = vadd.xlane.f32.xlu0 %v1717
  %v1719 = vpop.xlane.xlu0 %1718
  %v1720 = vsel %vm1289, %v1630, 0.0
  %1721 = vadd.xlane.f32.xlu0 %v1720
  %v1722 = vpop.xlane.xlu0 %1721
  %v1723 = vsel %vm1289, %v1631, 0.0
  %1724 = vadd.xlane.f32.xlu0 %v1723
  %v1725 = vpop.xlane.xlu0 %1724
  %v1726 = vsel %vm1289, %v1632, 0.0
  %1727 = vadd.xlane.f32.xlu0 %v1726
  %v1728 = vpop.xlane.xlu0 %1727
  %v1729 = vsel %vm1289, %v1633, 0.0
  %1730 = vadd.xlane.f32.xlu0 %v1729
  %v1731 = vpop.xlane.xlu0 %1730
  %v1732 = vsel %vm1289, %v1634, 0.0
  %1733 = vadd.xlane.f32.xlu0 %v1732
  %v1734 = vpop.xlane.xlu0 %1733
  %v1735 = vsel %vm1289, %v1635, 0.0
  %1736 = vadd.xlane.f32.xlu0 %v1735
  %v1737 = vpop.xlane.xlu0 %1736
  %v1738 = vsel %vm1289, %v1636, 0.0
  %1739 = vadd.xlane.f32.xlu0 %v1738
  %v1740 = vpop.xlane.xlu0 %1739
  %v1741 = vsel %vm1289, %v1637, 0.0
  %1742 = vadd.xlane.f32.xlu0 %v1741
  %v1743 = vpop.xlane.xlu0 %1742
  %v1744 = vsel %vm1289, %v1638, 0.0
  %1745 = vadd.xlane.f32.xlu0 %v1744
  %v1746 = vpop.xlane.xlu0 %1745
  %v1747 = vsel %vm1289, %v1639, 0.0
  %1748 = vadd.xlane.f32.xlu0 %v1747
  %v1749 = vpop.xlane.xlu0 %1748
  %v1750 = vsel %vm1289, %v1640, 0.0
  %1751 = vadd.xlane.f32.xlu0 %v1750
  %v1752 = vpop.xlane.xlu0 %1751
  %v1753 = vsel %vm1289, %v1641, 0.0
  %1754 = vadd.xlane.f32.xlu0 %v1753
  %v1755 = vpop.xlane.xlu0 %1754
  %v1756 = vsel %vm1289, %v1642, 0.0
  %1757 = vadd.xlane.f32.xlu0 %v1756
  %v1758 = vpop.xlane.xlu0 %1757
  %v1759 = vsel %vm1289, %v1643, 0.0
  %1760 = vadd.xlane.f32.xlu0 %v1759
  %v1761 = vpop.xlane.xlu0 %1760
  %v1762 = vsel %vm1289, %v1644, 0.0
  %1763 = vadd.xlane.f32.xlu0 %v1762
  %v1764 = vpop.xlane.xlu0 %1763
  %v1765 = vsel %vm1289, %v1645, 0.0
  %1766 = vadd.xlane.f32.xlu0 %v1765
  %v1767 = vpop.xlane.xlu0 %1766
  %v1768 = vsel %vm1289, %v1646, 0.0
  %1769 = vadd.xlane.f32.xlu0 %v1768
  %v1770 = vpop.xlane.xlu0 %1769
  %v1771 = vsel %vm1289, %v1647, 0.0
  %1772 = vadd.xlane.f32.xlu0 %v1771
  %v1773 = vpop.xlane.xlu0 %1772
  %v1774 = vsel %vm1289, %v1648, 0.0
  %1775 = vadd.xlane.f32.xlu0 %v1774
  %v1776 = vpop.xlane.xlu0 %1775
  %v1777 = vsel %vm1289, %v1649, 0.0
  %1778 = vadd.xlane.f32.xlu0 %v1777
  %v1779 = vpop.xlane.xlu0 %1778
  %v1780 = vsel %vm1289, %v1650, 0.0
  %1781 = vadd.xlane.f32.xlu0 %v1780
  %v1782 = vpop.xlane.xlu0 %1781
  %v1783 = vsel %vm1289, %v1651, 0.0
  %1784 = vadd.xlane.f32.xlu0 %v1783
  %v1785 = vpop.xlane.xlu0 %1784
  %v1786 = vsel %vm1289, %v1652, 0.0
  %1787 = vadd.xlane.f32.xlu0 %v1786
  %v1788 = vpop.xlane.xlu0 %1787
  %v1789 = vsel %vm1289, %v1653, 0.0
  %1790 = vadd.xlane.f32.xlu0 %v1789
  %v1791 = vpop.xlane.xlu0 %1790
  %v1792 = vsel %vm1289, %v1654, 0.0
  %1793 = vadd.xlane.f32.xlu0 %v1792
  %v1794 = vpop.xlane.xlu0 %1793
  %v1795 = vsel %vm1289, %v1655, 0.0
  %1796 = vadd.xlane.f32.xlu0 %v1795
  %v1797 = vpop.xlane.xlu0 %1796
  %v1798 = vsel %vm1289, %v1656, 0.0
  %1799 = vadd.xlane.f32.xlu0 %v1798
  %v1800 = vpop.xlane.xlu0 %1799
  %v1801 = vsel %vm1289, %v1657, 0.0
  %1802 = vadd.xlane.f32.xlu0 %v1801
  %v1803 = vpop.xlane.xlu0 %1802
  %v1804 = vsel %vm1289, %v1658, 0.0
  %1805 = vadd.xlane.f32.xlu0 %v1804
  %v1806 = vpop.xlane.xlu0 %1805
  %v1807 = vsel %vm1289, %v1659, 0.0
  %1808 = vadd.xlane.f32.xlu0 %v1807
  %v1809 = vpop.xlane.xlu0 %1808
  %v1810 = vsel %vm1289, %v1660, 0.0
  %1811 = vadd.xlane.f32.xlu0 %v1810
  %v1812 = vpop.xlane.xlu0 %1811
  %v1813 = vsel %vm1289, %v1661, 0.0
  %1814 = vadd.xlane.f32.xlu0 %v1813
  %v1815 = vpop.xlane.xlu0 %1814
  %v1816 = vsel %vm1289, %v1662, 0.0
  %1817 = vadd.xlane.f32.xlu0 %v1816
  %v1818 = vpop.xlane.xlu0 %1817
  %v1819 = vsel %vm1289, %v1663, 0.0
  %1820 = vadd.xlane.f32.xlu0 %v1819
  %v1821 = vpop.xlane.xlu0 %1820
  %v1822 = vsel %vm1289, %v1664, 0.0
  %1823 = vadd.xlane.f32.xlu0 %v1822
  %v1824 = vpop.xlane.xlu0 %1823
  %v1825 = vsel %vm1289, %v1665, 0.0
  %1826 = vadd.xlane.f32.xlu0 %v1825
  %v1827 = vpop.xlane.xlu0 %1826
  %v1828 = vsel %vm1289, %v1666, 0.0
  %1829 = vadd.xlane.f32.xlu0 %v1828
  %v1830 = vpop.xlane.xlu0 %1829
  %v1831 = vsel %vm1289, %v1667, 0.0
  %1832 = vadd.xlane.f32.xlu0 %v1831
  %v1833 = vpop.xlane.xlu0 %1832
  %v1834 = vsel %vm1289, %v1668, 0.0
  %1835 = vadd.xlane.f32.xlu0 %v1834
  %v1836 = vpop.xlane.xlu0 %1835
  %v1837 = vsel %vm1289, %v1669, 0.0
  %1838 = vadd.xlane.f32.xlu0 %v1837
  %v1839 = vpop.xlane.xlu0 %1838
  %v1840 = vsel %vm1289, %v1670, 0.0
  %1841 = vadd.xlane.f32.xlu0 %v1840
  %v1842 = vpop.xlane.xlu0 %1841
  %v1843 = vsel %vm1289, %v1671, 0.0
  %1844 = vadd.xlane.f32.xlu0 %v1843
  %v1845 = vpop.xlane.xlu0 %1844
  %v1846 = vsel %vm1289, %v1672, 0.0
  %1847 = vadd.xlane.f32.xlu0 %v1846
  %v1848 = vpop.xlane.xlu0 %1847
  %v1849 = vsel %vm1289, %v1673, 0.0
  %1850 = vadd.xlane.f32.xlu0 %v1849
  %v1851 = vpop.xlane.xlu0 %1850
  %v1852 = vsel %vm1289, %v1674, 0.0
  %1853 = vadd.xlane.f32.xlu0 %v1852
  %v1854 = vpop.xlane.xlu0 %1853
  %v1855 = vsel %vm1289, %v1675, 0.0
  %1856 = vadd.xlane.f32.xlu0 %v1855
  %v1857 = vpop.xlane.xlu0 %1856
  %v1858 = vsel %vm1289, %v1676, 0.0
  %1859 = vadd.xlane.f32.xlu0 %v1858
  %v1860 = vpop.xlane.xlu0 %1859
  %v1861 = vsel %vm1289, %v1677, 0.0
  %1862 = vadd.xlane.f32.xlu0 %v1861
  %v1863 = vpop.xlane.xlu0 %1862
  %v1864 = vsel %vm1289, %v1678, 0.0
  %1865 = vadd.xlane.f32.xlu0 %v1864
  %v1866 = vpop.xlane.xlu0 %1865
  %v1867 = vsel %vm1289, %v1679, 0.0
  %1868 = vadd.xlane.f32.xlu0 %v1867
  %v1869 = vpop.xlane.xlu0 %1868
  %v1870 = vsel %vm1289, %v1680, 0.0
  %1871 = vadd.xlane.f32.xlu0 %v1870
  %v1872 = vpop.xlane.xlu0 %1871
  %v1873 = vmul.f32 %v1683, %v1488
  %v1874 = vmul.f32 %v1686, %v1488
  %v1875 = vmul.f32 %v1689, %v1488
  %v1876 = vmul.f32 %v1692, %v1488
  %v1877 = vmul.f32 %v1695, %v1488
  %v1878 = vmul.f32 %v1698, %v1488
  %v1879 = vmul.f32 %v1701, %v1488
  %v1880 = vmul.f32 %v1704, %v1488
  %v1881 = vmul.f32 %v1707, %v1488
  %v1882 = vmul.f32 %v1710, %v1488
  %v1883 = vmul.f32 %v1713, %v1488
  %v1884 = vmul.f32 %v1716, %v1488
  %v1885 = vmul.f32 %v1719, %v1488
  %v1886 = vmul.f32 %v1722, %v1488
  %v1887 = vmul.f32 %v1725, %v1488
  %v1888 = vmul.f32 %v1728, %v1488
  %v1889 = vmul.f32 %v1731, %v1488
  %v1890 = vmul.f32 %v1734, %v1488
  %v1891 = vmul.f32 %v1737, %v1488
  %v1892 = vmul.f32 %v1740, %v1488
  %v1893 = vmul.f32 %v1743, %v1488
  %v1894 = vmul.f32 %v1746, %v1488
  %v1895 = vmul.f32 %v1749, %v1488
  %v1896 = vmul.f32 %v1752, %v1488
  %v1897 = vmul.f32 %v1755, %v1488
  %v1898 = vmul.f32 %v1758, %v1488
  %v1899 = vmul.f32 %v1761, %v1488
  %v1900 = vmul.f32 %v1764, %v1488
  %v1901 = vmul.f32 %v1767, %v1488
  %v1902 = vmul.f32 %v1770, %v1488
  %v1903 = vmul.f32 %v1773, %v1488
  %v1904 = vmul.f32 %v1776, %v1488
  %v1905 = vmul.f32 %v1779, %v1488
  %v1906 = vmul.f32 %v1782, %v1488
  %v1907 = vmul.f32 %v1785, %v1488
  %v1908 = vmul.f32 %v1788, %v1488
  %v1909 = vmul.f32 %v1791, %v1488
  %v1910 = vmul.f32 %v1794, %v1488
  %v1911 = vmul.f32 %v1797, %v1488
  %v1912 = vmul.f32 %v1800, %v1488
  %v1913 = vmul.f32 %v1803, %v1488
  %v1914 = vmul.f32 %v1806, %v1488
  %v1915 = vmul.f32 %v1809, %v1488
  %v1916 = vmul.f32 %v1812, %v1488
  %v1917 = vmul.f32 %v1815, %v1488
  %v1918 = vmul.f32 %v1818, %v1488
  %v1919 = vmul.f32 %v1821, %v1488
  %v1920 = vmul.f32 %v1824, %v1488
  %v1921 = vmul.f32 %v1827, %v1488
  %v1922 = vmul.f32 %v1830, %v1488
  %v1923 = vmul.f32 %v1833, %v1488
  %v1924 = vmul.f32 %v1836, %v1488
  %v1925 = vmul.f32 %v1839, %v1488
  %v1926 = vmul.f32 %v1842, %v1488
  %v1927 = vmul.f32 %v1845, %v1488
  %v1928 = vmul.f32 %v1848, %v1488
  %v1929 = vmul.f32 %v1851, %v1488
  %v1930 = vmul.f32 %v1854, %v1488
  %v1931 = vmul.f32 %v1857, %v1488
  %v1932 = vmul.f32 %v1860, %v1488
  %v1933 = vmul.f32 %v1863, %v1488
  %v1934 = vmul.f32 %v1866, %v1488
  %v1935 = vmul.f32 %v1869, %v1488
  %v1936 = vmul.f32 %v1872, %v1488
  %v1937 = vadd.f32 %v1873, 1e-05
  %v1938 = vadd.f32 %v1874, 1e-05
  %v1939 = vadd.f32 %v1875, 1e-05
  %v1940 = vadd.f32 %v1876, 1e-05
  %v1941 = vadd.f32 %v1877, 1e-05
  %v1942 = vadd.f32 %v1878, 1e-05
  %v1943 = vadd.f32 %v1879, 1e-05
  %v1944 = vadd.f32 %v1880, 1e-05
  %v1945 = vadd.f32 %v1881, 1e-05
  %v1946 = vadd.f32 %v1882, 1e-05
  %v1947 = vadd.f32 %v1883, 1e-05
  %v1948 = vadd.f32 %v1884, 1e-05
  %v1949 = vadd.f32 %v1885, 1e-05
  %v1950 = vadd.f32 %v1886, 1e-05
  %v1951 = vadd.f32 %v1887, 1e-05
  %v1952 = vadd.f32 %v1888, 1e-05
  %v1953 = vadd.f32 %v1889, 1e-05
  %v1954 = vadd.f32 %v1890, 1e-05
  %v1955 = vadd.f32 %v1891, 1e-05
  %v1956 = vadd.f32 %v1892, 1e-05
  %v1957 = vadd.f32 %v1893, 1e-05
  %v1958 = vadd.f32 %v1894, 1e-05
  %v1959 = vadd.f32 %v1895, 1e-05
  %v1960 = vadd.f32 %v1896, 1e-05
  %v1961 = vadd.f32 %v1897, 1e-05
  %v1962 = vadd.f32 %v1898, 1e-05
  %v1963 = vadd.f32 %v1899, 1e-05
  %v1964 = vadd.f32 %v1900, 1e-05
  %v1965 = vadd.f32 %v1901, 1e-05
  %v1966 = vadd.f32 %v1902, 1e-05
  %v1967 = vadd.f32 %v1903, 1e-05
  %v1968 = vadd.f32 %v1904, 1e-05
  %v1969 = vadd.f32 %v1905, 1e-05
  %v1970 = vadd.f32 %v1906, 1e-05
  %v1971 = vadd.f32 %v1907, 1e-05
  %v1972 = vadd.f32 %v1908, 1e-05
  %v1973 = vadd.f32 %v1909, 1e-05
  %v1974 = vadd.f32 %v1910, 1e-05
  %v1975 = vadd.f32 %v1911, 1e-05
  %v1976 = vadd.f32 %v1912, 1e-05
  %v1977 = vadd.f32 %v1913, 1e-05
  %v1978 = vadd.f32 %v1914, 1e-05
  %v1979 = vadd.f32 %v1915, 1e-05
  %v1980 = vadd.f32 %v1916, 1e-05
  %v1981 = vadd.f32 %v1917, 1e-05
  %v1982 = vadd.f32 %v1918, 1e-05
  %v1983 = vadd.f32 %v1919, 1e-05
  %v1984 = vadd.f32 %v1920, 1e-05
  %v1985 = vadd.f32 %v1921, 1e-05
  %v1986 = vadd.f32 %v1922, 1e-05
  %v1987 = vadd.f32 %v1923, 1e-05
  %v1988 = vadd.f32 %v1924, 1e-05
  %v1989 = vadd.f32 %v1925, 1e-05
  %v1990 = vadd.f32 %v1926, 1e-05
  %v1991 = vadd.f32 %v1927, 1e-05
  %v1992 = vadd.f32 %v1928, 1e-05
  %v1993 = vadd.f32 %v1929, 1e-05
  %v1994 = vadd.f32 %v1930, 1e-05
  %v1995 = vadd.f32 %v1931, 1e-05
  %v1996 = vadd.f32 %v1932, 1e-05
  %v1997 = vadd.f32 %v1933, 1e-05
  %v1998 = vadd.f32 %v1934, 1e-05
  %v1999 = vadd.f32 %v1935, 1e-05
  %v2000 = vadd.f32 %v1936, 1e-05
  %v2001 = vrsqrt.pop %v1937
  %v2002 = vmul.f32 %v2001, %v1937
  %v2003 = vmul.f32 %v2002, %v2001
  %v2004 = vmul.f32 0.5, %v2003
  %v2005 = vsub.f32 1.5, %v2004
  %v2006 = vmul.f32 %v2001, %v2005
  %vm2007 = vweird.f32 %v1937
  %vm2008 = vweird.f32 %v2001
  %vm2009 = vmor %vm2007, %vm2008
  %v2010 = vsel %vm2009, %v2001, %v2006
  %v2011 = vrsqrt.pop %v1938
  %v2012 = vmul.f32 %v2011, %v1938
  %v2013 = vmul.f32 %v2012, %v2011
  %v2014 = vmul.f32 0.5, %v2013
  %v2015 = vsub.f32 1.5, %v2014
  %v2016 = vmul.f32 %v2011, %v2015
  %vm2017 = vweird.f32 %v1938
  %vm2018 = vweird.f32 %v2011
  %vm2019 = vmor %vm2017, %vm2018
  %v2020 = vsel %vm2019, %v2011, %v2016
  %v2021 = vrsqrt.pop %v1939
  %v2022 = vmul.f32 %v2021, %v1939
  %v2023 = vmul.f32 %v2022, %v2021
  %v2024 = vmul.f32 0.5, %v2023
  %v2025 = vsub.f32 1.5, %v2024
  %v2026 = vmul.f32 %v2021, %v2025
  %vm2027 = vweird.f32 %v1939
  %vm2028 = vweird.f32 %v2021
  %vm2029 = vmor %vm2027, %vm2028
  %v2030 = vsel %vm2029, %v2021, %v2026
  %v2031 = vrsqrt.pop %v1940
  %v2032 = vmul.f32 %v2031, %v1940
  %v2033 = vmul.f32 %v2032, %v2031
  %v2034 = vmul.f32 0.5, %v2033
  %v2035 = vsub.f32 1.5, %v2034
  %v2036 = vmul.f32 %v2031, %v2035
  %vm2037 = vweird.f32 %v1940
  %vm2038 = vweird.f32 %v2031
  %vm2039 = vmor %vm2037, %vm2038
  %v2040 = vsel %vm2039, %v2031, %v2036
  %v2041 = vrsqrt.pop %v1941
  %v2042 = vmul.f32 %v2041, %v1941
  %v2043 = vmul.f32 %v2042, %v2041
  %v2044 = vmul.f32 0.5, %v2043
  %v2045 = vsub.f32 1.5, %v2044
  %v2046 = vmul.f32 %v2041, %v2045
  %vm2047 = vweird.f32 %v1941
  %vm2048 = vweird.f32 %v2041
  %vm2049 = vmor %vm2047, %vm2048
  %v2050 = vsel %vm2049, %v2041, %v2046
  %v2051 = vrsqrt.pop %v1942
  %v2052 = vmul.f32 %v2051, %v1942
  %v2053 = vmul.f32 %v2052, %v2051
  %v2054 = vmul.f32 0.5, %v2053
  %v2055 = vsub.f32 1.5, %v2054
  %v2056 = vmul.f32 %v2051, %v2055
  %vm2057 = vweird.f32 %v1942
  %vm2058 = vweird.f32 %v2051
  %vm2059 = vmor %vm2057, %vm2058
  %v2060 = vsel %vm2059, %v2051, %v2056
  %v2061 = vrsqrt.pop %v1943
  %v2062 = vmul.f32 %v2061, %v1943
  %v2063 = vmul.f32 %v2062, %v2061
  %v2064 = vmul.f32 0.5, %v2063
  %v2065 = vsub.f32 1.5, %v2064
  %v2066 = vmul.f32 %v2061, %v2065
  %vm2067 = vweird.f32 %v1943
  %vm2068 = vweird.f32 %v2061
  %vm2069 = vmor %vm2067, %vm2068
  %v2070 = vsel %vm2069, %v2061, %v2066
  %v2071 = vrsqrt.pop %v1944
  %v2072 = vmul.f32 %v2071, %v1944
  %v2073 = vmul.f32 %v2072, %v2071
  %v2074 = vmul.f32 0.5, %v2073
  %v2075 = vsub.f32 1.5, %v2074
  %v2076 = vmul.f32 %v2071, %v2075
  %vm2077 = vweird.f32 %v1944
  %vm2078 = vweird.f32 %v2071
  %vm2079 = vmor %vm2077, %vm2078
  %v2080 = vsel %vm2079, %v2071, %v2076
  %v2081 = vrsqrt.pop %v1945
  %v2082 = vmul.f32 %v2081, %v1945
  %v2083 = vmul.f32 %v2082, %v2081
  %v2084 = vmul.f32 0.5, %v2083
  %v2085 = vsub.f32 1.5, %v2084
  %v2086 = vmul.f32 %v2081, %v2085
  %vm2087 = vweird.f32 %v1945
  %vm2088 = vweird.f32 %v2081
  %vm2089 = vmor %vm2087, %vm2088
  %v2090 = vsel %vm2089, %v2081, %v2086
  %v2091 = vrsqrt.pop %v1946
  %v2092 = vmul.f32 %v2091, %v1946
  %v2093 = vmul.f32 %v2092, %v2091
  %v2094 = vmul.f32 0.5, %v2093
  %v2095 = vsub.f32 1.5, %v2094
  %v2096 = vmul.f32 %v2091, %v2095
  %vm2097 = vweird.f32 %v1946
  %vm2098 = vweird.f32 %v2091
  %vm2099 = vmor %vm2097, %vm2098
  %v2100 = vsel %vm2099, %v2091, %v2096
  %v2101 = vrsqrt.pop %v1947
  %v2102 = vmul.f32 %v2101, %v1947
  %v2103 = vmul.f32 %v2102, %v2101
  %v2104 = vmul.f32 0.5, %v2103
  %v2105 = vsub.f32 1.5, %v2104
  %v2106 = vmul.f32 %v2101, %v2105
  %vm2107 = vweird.f32 %v1947
  %vm2108 = vweird.f32 %v2101
  %vm2109 = vmor %vm2107, %vm2108
  %v2110 = vsel %vm2109, %v2101, %v2106
  %v2111 = vrsqrt.pop %v1948
  %v2112 = vmul.f32 %v2111, %v1948
  %v2113 = vmul.f32 %v2112, %v2111
  %v2114 = vmul.f32 0.5, %v2113
  %v2115 = vsub.f32 1.5, %v2114
  %v2116 = vmul.f32 %v2111, %v2115
  %vm2117 = vweird.f32 %v1948
  %vm2118 = vweird.f32 %v2111
  %vm2119 = vmor %vm2117, %vm2118
  %v2120 = vsel %vm2119, %v2111, %v2116
  %v2121 = vrsqrt.pop %v1949
  %v2122 = vmul.f32 %v2121, %v1949
  %v2123 = vmul.f32 %v2122, %v2121
  %v2124 = vmul.f32 0.5, %v2123
  %v2125 = vsub.f32 1.5, %v2124
  %v2126 = vmul.f32 %v2121, %v2125
  %vm2127 = vweird.f32 %v1949
  %vm2128 = vweird.f32 %v2121
  %vm2129 = vmor %vm2127, %vm2128
  %v2130 = vsel %vm2129, %v2121, %v2126
  %v2131 = vrsqrt.pop %v1950
  %v2132 = vmul.f32 %v2131, %v1950
  %v2133 = vmul.f32 %v2132, %v2131
  %v2134 = vmul.f32 0.5, %v2133
  %v2135 = vsub.f32 1.5, %v2134
  %v2136 = vmul.f32 %v2131, %v2135
  %vm2137 = vweird.f32 %v1950
  %vm2138 = vweird.f32 %v2131
  %vm2139 = vmor %vm2137, %vm2138
  %v2140 = vsel %vm2139, %v2131, %v2136
  %v2141 = vrsqrt.pop %v1951
  %v2142 = vmul.f32 %v2141, %v1951
  %v2143 = vmul.f32 %v2142, %v2141
  %v2144 = vmul.f32 0.5, %v2143
  %v2145 = vsub.f32 1.5, %v2144
  %v2146 = vmul.f32 %v2141, %v2145
  %vm2147 = vweird.f32 %v1951
  %vm2148 = vweird.f32 %v2141
  %vm2149 = vmor %vm2147, %vm2148
  %v2150 = vsel %vm2149, %v2141, %v2146
  %v2151 = vrsqrt.pop %v1952
  %v2152 = vmul.f32 %v2151, %v1952
  %v2153 = vmul.f32 %v2152, %v2151
  %v2154 = vmul.f32 0.5, %v2153
  %v2155 = vsub.f32 1.5, %v2154
  %v2156 = vmul.f32 %v2151, %v2155
  %vm2157 = vweird.f32 %v1952
  %vm2158 = vweird.f32 %v2151
  %vm2159 = vmor %vm2157, %vm2158
  %v2160 = vsel %vm2159, %v2151, %v2156
  %v2161 = vrsqrt.pop %v1953
  %v2162 = vmul.f32 %v2161, %v1953
  %v2163 = vmul.f32 %v2162, %v2161
  %v2164 = vmul.f32 0.5, %v2163
  %v2165 = vsub.f32 1.5, %v2164
  %v2166 = vmul.f32 %v2161, %v2165
  %vm2167 = vweird.f32 %v1953
  %vm2168 = vweird.f32 %v2161
  %vm2169 = vmor %vm2167, %vm2168
  %v2170 = vsel %vm2169, %v2161, %v2166
  %v2171 = vrsqrt.pop %v1954
  %v2172 = vmul.f32 %v2171, %v1954
  %v2173 = vmul.f32 %v2172, %v2171
  %v2174 = vmul.f32 0.5, %v2173
  %v2175 = vsub.f32 1.5, %v2174
  %v2176 = vmul.f32 %v2171, %v2175
  %vm2177 = vweird.f32 %v1954
  %vm2178 = vweird.f32 %v2171
  %vm2179 = vmor %vm2177, %vm2178
  %v2180 = vsel %vm2179, %v2171, %v2176
  %v2181 = vrsqrt.pop %v1955
  %v2182 = vmul.f32 %v2181, %v1955
  %v2183 = vmul.f32 %v2182, %v2181
  %v2184 = vmul.f32 0.5, %v2183
  %v2185 = vsub.f32 1.5, %v2184
  %v2186 = vmul.f32 %v2181, %v2185
  %vm2187 = vweird.f32 %v1955
  %vm2188 = vweird.f32 %v2181
  %vm2189 = vmor %vm2187, %vm2188
  %v2190 = vsel %vm2189, %v2181, %v2186
  %v2191 = vrsqrt.pop %v1956
  %v2192 = vmul.f32 %v2191, %v1956
  %v2193 = vmul.f32 %v2192, %v2191
  %v2194 = vmul.f32 0.5, %v2193
  %v2195 = vsub.f32 1.5, %v2194
  %v2196 = vmul.f32 %v2191, %v2195
  %vm2197 = vweird.f32 %v1956
  %vm2198 = vweird.f32 %v2191
  %vm2199 = vmor %vm2197, %vm2198
  %v2200 = vsel %vm2199, %v2191, %v2196
  %v2201 = vrsqrt.pop %v1957
  %v2202 = vmul.f32 %v2201, %v1957
  %v2203 = vmul.f32 %v2202, %v2201
  %v2204 = vmul.f32 0.5, %v2203
  %v2205 = vsub.f32 1.5, %v2204
  %v2206 = vmul.f32 %v2201, %v2205
  %vm2207 = vweird.f32 %v1957
  %vm2208 = vweird.f32 %v2201
  %vm2209 = vmor %vm2207, %vm2208
  %v2210 = vsel %vm2209, %v2201, %v2206
  %v2211 = vrsqrt.pop %v1958
  %v2212 = vmul.f32 %v2211, %v1958
  %v2213 = vmul.f32 %v2212, %v2211
  %v2214 = vmul.f32 0.5, %v2213
  %v2215 = vsub.f32 1.5, %v2214
  %v2216 = vmul.f32 %v2211, %v2215
  %vm2217 = vweird.f32 %v1958
  %vm2218 = vweird.f32 %v2211
  %vm2219 = vmor %vm2217, %vm2218
  %v2220 = vsel %vm2219, %v2211, %v2216
  %v2221 = vrsqrt.pop %v1959
  %v2222 = vmul.f32 %v2221, %v1959
  %v2223 = vmul.f32 %v2222, %v2221
  %v2224 = vmul.f32 0.5, %v2223
  %v2225 = vsub.f32 1.5, %v2224
  %v2226 = vmul.f32 %v2221, %v2225
  %vm2227 = vweird.f32 %v1959
  %vm2228 = vweird.f32 %v2221
  %vm2229 = vmor %vm2227, %vm2228
  %v2230 = vsel %vm2229, %v2221, %v2226
  %v2231 = vrsqrt.pop %v1960
  %v2232 = vmul.f32 %v2231, %v1960
  %v2233 = vmul.f32 %v2232, %v2231
  %v2234 = vmul.f32 0.5, %v2233
  %v2235 = vsub.f32 1.5, %v2234
  %v2236 = vmul.f32 %v2231, %v2235
  %vm2237 = vweird.f32 %v1960
  %vm2238 = vweird.f32 %v2231
  %vm2239 = vmor %vm2237, %vm2238
  %v2240 = vsel %vm2239, %v2231, %v2236
  %v2241 = vrsqrt.pop %v1961
  %v2242 = vmul.f32 %v2241, %v1961
  %v2243 = vmul.f32 %v2242, %v2241
  %v2244 = vmul.f32 0.5, %v2243
  %v2245 = vsub.f32 1.5, %v2244
  %v2246 = vmul.f32 %v2241, %v2245
  %vm2247 = vweird.f32 %v1961
  %vm2248 = vweird.f32 %v2241
  %vm2249 = vmor %vm2247, %vm2248
  %v2250 = vsel %vm2249, %v2241, %v2246
  %v2251 = vrsqrt.pop %v1962
  %v2252 = vmul.f32 %v2251, %v1962
  %v2253 = vmul.f32 %v2252, %v2251
  %v2254 = vmul.f32 0.5, %v2253
  %v2255 = vsub.f32 1.5, %v2254
  %v2256 = vmul.f32 %v2251, %v2255
  %vm2257 = vweird.f32 %v1962
  %vm2258 = vweird.f32 %v2251
  %vm2259 = vmor %vm2257, %vm2258
  %v2260 = vsel %vm2259, %v2251, %v2256
  %v2261 = vrsqrt.pop %v1963
  %v2262 = vmul.f32 %v2261, %v1963
  %v2263 = vmul.f32 %v2262, %v2261
  %v2264 = vmul.f32 0.5, %v2263
  %v2265 = vsub.f32 1.5, %v2264
  %v2266 = vmul.f32 %v2261, %v2265
  %vm2267 = vweird.f32 %v1963
  %vm2268 = vweird.f32 %v2261
  %vm2269 = vmor %vm2267, %vm2268
  %v2270 = vsel %vm2269, %v2261, %v2266
  %v2271 = vrsqrt.pop %v1964
  %v2272 = vmul.f32 %v2271, %v1964
  %v2273 = vmul.f32 %v2272, %v2271
  %v2274 = vmul.f32 0.5, %v2273
  %v2275 = vsub.f32 1.5, %v2274
  %v2276 = vmul.f32 %v2271, %v2275
  %vm2277 = vweird.f32 %v1964
  %vm2278 = vweird.f32 %v2271
  %vm2279 = vmor %vm2277, %vm2278
  %v2280 = vsel %vm2279, %v2271, %v2276
  %v2281 = vrsqrt.pop %v1965
  %v2282 = vmul.f32 %v2281, %v1965
  %v2283 = vmul.f32 %v2282, %v2281
  %v2284 = vmul.f32 0.5, %v2283
  %v2285 = vsub.f32 1.5, %v2284
  %v2286 = vmul.f32 %v2281, %v2285
  %vm2287 = vweird.f32 %v1965
  %vm2288 = vweird.f32 %v2281
  %vm2289 = vmor %vm2287, %vm2288
  %v2290 = vsel %vm2289, %v2281, %v2286
  %v2291 = vrsqrt.pop %v1966
  %v2292 = vmul.f32 %v2291, %v1966
  %v2293 = vmul.f32 %v2292, %v2291
  %v2294 = vmul.f32 0.5, %v2293
  %v2295 = vsub.f32 1.5, %v2294
  %v2296 = vmul.f32 %v2291, %v2295
  %vm2297 = vweird.f32 %v1966
  %vm2298 = vweird.f32 %v2291
  %vm2299 = vmor %vm2297, %vm2298
  %v2300 = vsel %vm2299, %v2291, %v2296
  %v2301 = vrsqrt.pop %v1967
  %v2302 = vmul.f32 %v2301, %v1967
  %v2303 = vmul.f32 %v2302, %v2301
  %v2304 = vmul.f32 0.5, %v2303
  %v2305 = vsub.f32 1.5, %v2304
  %v2306 = vmul.f32 %v2301, %v2305
  %vm2307 = vweird.f32 %v1967
  %vm2308 = vweird.f32 %v2301
  %vm2309 = vmor %vm2307, %vm2308
  %v2310 = vsel %vm2309, %v2301, %v2306
  %v2311 = vrsqrt.pop %v1968
  %v2312 = vmul.f32 %v2311, %v1968
  %v2313 = vmul.f32 %v2312, %v2311
  %v2314 = vmul.f32 0.5, %v2313
  %v2315 = vsub.f32 1.5, %v2314
  %v2316 = vmul.f32 %v2311, %v2315
  %vm2317 = vweird.f32 %v1968
  %vm2318 = vweird.f32 %v2311
  %vm2319 = vmor %vm2317, %vm2318
  %v2320 = vsel %vm2319, %v2311, %v2316
  %v2321 = vrsqrt.pop %v1969
  %v2322 = vmul.f32 %v2321, %v1969
  %v2323 = vmul.f32 %v2322, %v2321
  %v2324 = vmul.f32 0.5, %v2323
  %v2325 = vsub.f32 1.5, %v2324
  %v2326 = vmul.f32 %v2321, %v2325
  %vm2327 = vweird.f32 %v1969
  %vm2328 = vweird.f32 %v2321
  %vm2329 = vmor %vm2327, %vm2328
  %v2330 = vsel %vm2329, %v2321, %v2326
  %v2331 = vrsqrt.pop %v1970
  %v2332 = vmul.f32 %v2331, %v1970
  %v2333 = vmul.f32 %v2332, %v2331
  %v2334 = vmul.f32 0.5, %v2333
  %v2335 = vsub.f32 1.5, %v2334
  %v2336 = vmul.f32 %v2331, %v2335
  %vm2337 = vweird.f32 %v1970
  %vm2338 = vweird.f32 %v2331
  %vm2339 = vmor %vm2337, %vm2338
  %v2340 = vsel %vm2339, %v2331, %v2336
  %v2341 = vrsqrt.pop %v1971
  %v2342 = vmul.f32 %v2341, %v1971
  %v2343 = vmul.f32 %v2342, %v2341
  %v2344 = vmul.f32 0.5, %v2343
  %v2345 = vsub.f32 1.5, %v2344
  %v2346 = vmul.f32 %v2341, %v2345
  %vm2347 = vweird.f32 %v1971
  %vm2348 = vweird.f32 %v2341
  %vm2349 = vmor %vm2347, %vm2348
  %v2350 = vsel %vm2349, %v2341, %v2346
  %v2351 = vrsqrt.pop %v1972
  %v2352 = vmul.f32 %v2351, %v1972
  %v2353 = vmul.f32 %v2352, %v2351
  %v2354 = vmul.f32 0.5, %v2353
  %v2355 = vsub.f32 1.5, %v2354
  %v2356 = vmul.f32 %v2351, %v2355
  %vm2357 = vweird.f32 %v1972
  %vm2358 = vweird.f32 %v2351
  %vm2359 = vmor %vm2357, %vm2358
  %v2360 = vsel %vm2359, %v2351, %v2356
  %v2361 = vrsqrt.pop %v1973
  %v2362 = vmul.f32 %v2361, %v1973
  %v2363 = vmul.f32 %v2362, %v2361
  %v2364 = vmul.f32 0.5, %v2363
  %v2365 = vsub.f32 1.5, %v2364
  %v2366 = vmul.f32 %v2361, %v2365
  %vm2367 = vweird.f32 %v1973
  %vm2368 = vweird.f32 %v2361
  %vm2369 = vmor %vm2367, %vm2368
  %v2370 = vsel %vm2369, %v2361, %v2366
  %v2371 = vrsqrt.pop %v1974
  %v2372 = vmul.f32 %v2371, %v1974
  %v2373 = vmul.f32 %v2372, %v2371
  %v2374 = vmul.f32 0.5, %v2373
  %v2375 = vsub.f32 1.5, %v2374
  %v2376 = vmul.f32 %v2371, %v2375
  %vm2377 = vweird.f32 %v1974
  %vm2378 = vweird.f32 %v2371
  %vm2379 = vmor %vm2377, %vm2378
  %v2380 = vsel %vm2379, %v2371, %v2376
  %v2381 = vrsqrt.pop %v1975
  %v2382 = vmul.f32 %v2381, %v1975
  %v2383 = vmul.f32 %v2382, %v2381
  %v2384 = vmul.f32 0.5, %v2383
  %v2385 = vsub.f32 1.5, %v2384
  %v2386 = vmul.f32 %v2381, %v2385
  %vm2387 = vweird.f32 %v1975
  %vm2388 = vweird.f32 %v2381
  %vm2389 = vmor %vm2387, %vm2388
  %v2390 = vsel %vm2389, %v2381, %v2386
  %v2391 = vrsqrt.pop %v1976
  %v2392 = vmul.f32 %v2391, %v1976
  %v2393 = vmul.f32 %v2392, %v2391
  %v2394 = vmul.f32 0.5, %v2393
  %v2395 = vsub.f32 1.5, %v2394
  %v2396 = vmul.f32 %v2391, %v2395
  %vm2397 = vweird.f32 %v1976
  %vm2398 = vweird.f32 %v2391
  %vm2399 = vmor %vm2397, %vm2398
  %v2400 = vsel %vm2399, %v2391, %v2396
  %v2401 = vrsqrt.pop %v1977
  %v2402 = vmul.f32 %v2401, %v1977
  %v2403 = vmul.f32 %v2402, %v2401
  %v2404 = vmul.f32 0.5, %v2403
  %v2405 = vsub.f32 1.5, %v2404
  %v2406 = vmul.f32 %v2401, %v2405
  %vm2407 = vweird.f32 %v1977
  %vm2408 = vweird.f32 %v2401
  %vm2409 = vmor %vm2407, %vm2408
  %v2410 = vsel %vm2409, %v2401, %v2406
  %v2411 = vrsqrt.pop %v1978
  %v2412 = vmul.f32 %v2411, %v1978
  %v2413 = vmul.f32 %v2412, %v2411
  %v2414 = vmul.f32 0.5, %v2413
  %v2415 = vsub.f32 1.5, %v2414
  %v2416 = vmul.f32 %v2411, %v2415
  %vm2417 = vweird.f32 %v1978
  %vm2418 = vweird.f32 %v2411
  %vm2419 = vmor %vm2417, %vm2418
  %v2420 = vsel %vm2419, %v2411, %v2416
  %v2421 = vrsqrt.pop %v1979
  %v2422 = vmul.f32 %v2421, %v1979
  %v2423 = vmul.f32 %v2422, %v2421
  %v2424 = vmul.f32 0.5, %v2423
  %v2425 = vsub.f32 1.5, %v2424
  %v2426 = vmul.f32 %v2421, %v2425
  %vm2427 = vweird.f32 %v1979
  %vm2428 = vweird.f32 %v2421
  %vm2429 = vmor %vm2427, %vm2428
  %v2430 = vsel %vm2429, %v2421, %v2426
  %v2431 = vrsqrt.pop %v1980
  %v2432 = vmul.f32 %v2431, %v1980
  %v2433 = vmul.f32 %v2432, %v2431
  %v2434 = vmul.f32 0.5, %v2433
  %v2435 = vsub.f32 1.5, %v2434
  %v2436 = vmul.f32 %v2431, %v2435
  %vm2437 = vweird.f32 %v1980
  %vm2438 = vweird.f32 %v2431
  %vm2439 = vmor %vm2437, %vm2438
  %v2440 = vsel %vm2439, %v2431, %v2436
  %v2441 = vrsqrt.pop %v1981
  %v2442 = vmul.f32 %v2441, %v1981
  %v2443 = vmul.f32 %v2442, %v2441
  %v2444 = vmul.f32 0.5, %v2443
  %v2445 = vsub.f32 1.5, %v2444
  %v2446 = vmul.f32 %v2441, %v2445
  %vm2447 = vweird.f32 %v1981
  %vm2448 = vweird.f32 %v2441
  %vm2449 = vmor %vm2447, %vm2448
  %v2450 = vsel %vm2449, %v2441, %v2446
  %v2451 = vrsqrt.pop %v1982
  %v2452 = vmul.f32 %v2451, %v1982
  %v2453 = vmul.f32 %v2452, %v2451
  %v2454 = vmul.f32 0.5, %v2453
  %v2455 = vsub.f32 1.5, %v2454
  %v2456 = vmul.f32 %v2451, %v2455
  %vm2457 = vweird.f32 %v1982
  %vm2458 = vweird.f32 %v2451
  %vm2459 = vmor %vm2457, %vm2458
  %v2460 = vsel %vm2459, %v2451, %v2456
  %v2461 = vrsqrt.pop %v1983
  %v2462 = vmul.f32 %v2461, %v1983
  %v2463 = vmul.f32 %v2462, %v2461
  %v2464 = vmul.f32 0.5, %v2463
  %v2465 = vsub.f32 1.5, %v2464
  %v2466 = vmul.f32 %v2461, %v2465
  %vm2467 = vweird.f32 %v1983
  %vm2468 = vweird.f32 %v2461
  %vm2469 = vmor %vm2467, %vm2468
  %v2470 = vsel %vm2469, %v2461, %v2466
  %v2471 = vrsqrt.pop %v1984
  %v2472 = vmul.f32 %v2471, %v1984
  %v2473 = vmul.f32 %v2472, %v2471
  %v2474 = vmul.f32 0.5, %v2473
  %v2475 = vsub.f32 1.5, %v2474
  %v2476 = vmul.f32 %v2471, %v2475
  %vm2477 = vweird.f32 %v1984
  %vm2478 = vweird.f32 %v2471
  %vm2479 = vmor %vm2477, %vm2478
  %v2480 = vsel %vm2479, %v2471, %v2476
  %v2481 = vrsqrt.pop %v1985
  %v2482 = vmul.f32 %v2481, %v1985
  %v2483 = vmul.f32 %v2482, %v2481
  %v2484 = vmul.f32 0.5, %v2483
  %v2485 = vsub.f32 1.5, %v2484
  %v2486 = vmul.f32 %v2481, %v2485
  %vm2487 = vweird.f32 %v1985
  %vm2488 = vweird.f32 %v2481
  %vm2489 = vmor %vm2487, %vm2488
  %v2490 = vsel %vm2489, %v2481, %v2486
  %v2491 = vrsqrt.pop %v1986
  %v2492 = vmul.f32 %v2491, %v1986
  %v2493 = vmul.f32 %v2492, %v2491
  %v2494 = vmul.f32 0.5, %v2493
  %v2495 = vsub.f32 1.5, %v2494
  %v2496 = vmul.f32 %v2491, %v2495
  %vm2497 = vweird.f32 %v1986
  %vm2498 = vweird.f32 %v2491
  %vm2499 = vmor %vm2497, %vm2498
  %v2500 = vsel %vm2499, %v2491, %v2496
  %v2501 = vrsqrt.pop %v1987
  %v2502 = vmul.f32 %v2501, %v1987
  %v2503 = vmul.f32 %v2502, %v2501
  %v2504 = vmul.f32 0.5, %v2503
  %v2505 = vsub.f32 1.5, %v2504
  %v2506 = vmul.f32 %v2501, %v2505
  %vm2507 = vweird.f32 %v1987
  %vm2508 = vweird.f32 %v2501
  %vm2509 = vmor %vm2507, %vm2508
  %v2510 = vsel %vm2509, %v2501, %v2506
  %v2511 = vrsqrt.pop %v1988
  %v2512 = vmul.f32 %v2511, %v1988
  %v2513 = vmul.f32 %v2512, %v2511
  %v2514 = vmul.f32 0.5, %v2513
  %v2515 = vsub.f32 1.5, %v2514
  %v2516 = vmul.f32 %v2511, %v2515
  %vm2517 = vweird.f32 %v1988
  %vm2518 = vweird.f32 %v2511
  %vm2519 = vmor %vm2517, %vm2518
  %v2520 = vsel %vm2519, %v2511, %v2516
  %v2521 = vrsqrt.pop %v1989
  %v2522 = vmul.f32 %v2521, %v1989
  %v2523 = vmul.f32 %v2522, %v2521
  %v2524 = vmul.f32 0.5, %v2523
  %v2525 = vsub.f32 1.5, %v2524
  %v2526 = vmul.f32 %v2521, %v2525
  %vm2527 = vweird.f32 %v1989
  %vm2528 = vweird.f32 %v2521
  %vm2529 = vmor %vm2527, %vm2528
  %v2530 = vsel %vm2529, %v2521, %v2526
  %v2531 = vrsqrt.pop %v1990
  %v2532 = vmul.f32 %v2531, %v1990
  %v2533 = vmul.f32 %v2532, %v2531
  %v2534 = vmul.f32 0.5, %v2533
  %v2535 = vsub.f32 1.5, %v2534
  %v2536 = vmul.f32 %v2531, %v2535
  %vm2537 = vweird.f32 %v1990
  %vm2538 = vweird.f32 %v2531
  %vm2539 = vmor %vm2537, %vm2538
  %v2540 = vsel %vm2539, %v2531, %v2536
  %v2541 = vrsqrt.pop %v1991
  %v2542 = vmul.f32 %v2541, %v1991
  %v2543 = vmul.f32 %v2542, %v2541
  %v2544 = vmul.f32 0.5, %v2543
  %v2545 = vsub.f32 1.5, %v2544
  %v2546 = vmul.f32 %v2541, %v2545
  %vm2547 = vweird.f32 %v1991
  %vm2548 = vweird.f32 %v2541
  %vm2549 = vmor %vm2547, %vm2548
  %v2550 = vsel %vm2549, %v2541, %v2546
  %v2551 = vrsqrt.pop %v1992
  %v2552 = vmul.f32 %v2551, %v1992
  %v2553 = vmul.f32 %v2552, %v2551
  %v2554 = vmul.f32 0.5, %v2553
  %v2555 = vsub.f32 1.5, %v2554
  %v2556 = vmul.f32 %v2551, %v2555
  %vm2557 = vweird.f32 %v1992
  %vm2558 = vweird.f32 %v2551
  %vm2559 = vmor %vm2557, %vm2558
  %v2560 = vsel %vm2559, %v2551, %v2556
  %v2561 = vrsqrt.pop %v1993
  %v2562 = vmul.f32 %v2561, %v1993
  %v2563 = vmul.f32 %v2562, %v2561
  %v2564 = vmul.f32 0.5, %v2563
  %v2565 = vsub.f32 1.5, %v2564
  %v2566 = vmul.f32 %v2561, %v2565
  %vm2567 = vweird.f32 %v1993
  %vm2568 = vweird.f32 %v2561
  %vm2569 = vmor %vm2567, %vm2568
  %v2570 = vsel %vm2569, %v2561, %v2566
  %v2571 = vrsqrt.pop %v1994
  %v2572 = vmul.f32 %v2571, %v1994
  %v2573 = vmul.f32 %v2572, %v2571
  %v2574 = vmul.f32 0.5, %v2573
  %v2575 = vsub.f32 1.5, %v2574
  %v2576 = vmul.f32 %v2571, %v2575
  %vm2577 = vweird.f32 %v1994
  %vm2578 = vweird.f32 %v2571
  %vm2579 = vmor %vm2577, %vm2578
  %v2580 = vsel %vm2579, %v2571, %v2576
  %v2581 = vrsqrt.pop %v1995
  %v2582 = vmul.f32 %v2581, %v1995
  %v2583 = vmul.f32 %v2582, %v2581
  %v2584 = vmul.f32 0.5, %v2583
  %v2585 = vsub.f32 1.5, %v2584
  %v2586 = vmul.f32 %v2581, %v2585
  %vm2587 = vweird.f32 %v1995
  %vm2588 = vweird.f32 %v2581
  %vm2589 = vmor %vm2587, %vm2588
  %v2590 = vsel %vm2589, %v2581, %v2586
  %v2591 = vrsqrt.pop %v1996
  %v2592 = vmul.f32 %v2591, %v1996
  %v2593 = vmul.f32 %v2592, %v2591
  %v2594 = vmul.f32 0.5, %v2593
  %v2595 = vsub.f32 1.5, %v2594
  %v2596 = vmul.f32 %v2591, %v2595
  %vm2597 = vweird.f32 %v1996
  %vm2598 = vweird.f32 %v2591
  %vm2599 = vmor %vm2597, %vm2598
  %v2600 = vsel %vm2599, %v2591, %v2596
  %v2601 = vrsqrt.pop %v1997
  %v2602 = vmul.f32 %v2601, %v1997
  %v2603 = vmul.f32 %v2602, %v2601
  %v2604 = vmul.f32 0.5, %v2603
  %v2605 = vsub.f32 1.5, %v2604
  %v2606 = vmul.f32 %v2601, %v2605
  %vm2607 = vweird.f32 %v1997
  %vm2608 = vweird.f32 %v2601
  %vm2609 = vmor %vm2607, %vm2608
  %v2610 = vsel %vm2609, %v2601, %v2606
  %v2611 = vrsqrt.pop %v1998
  %v2612 = vmul.f32 %v2611, %v1998
  %v2613 = vmul.f32 %v2612, %v2611
  %v2614 = vmul.f32 0.5, %v2613
  %v2615 = vsub.f32 1.5, %v2614
  %v2616 = vmul.f32 %v2611, %v2615
  %vm2617 = vweird.f32 %v1998
  %vm2618 = vweird.f32 %v2611
  %vm2619 = vmor %vm2617, %vm2618
  %v2620 = vsel %vm2619, %v2611, %v2616
  %v2621 = vrsqrt.pop %v1999
  %v2622 = vmul.f32 %v2621, %v1999
  %v2623 = vmul.f32 %v2622, %v2621
  %v2624 = vmul.f32 0.5, %v2623
  %v2625 = vsub.f32 1.5, %v2624
  %v2626 = vmul.f32 %v2621, %v2625
  %vm2627 = vweird.f32 %v1999
  %vm2628 = vweird.f32 %v2621
  %vm2629 = vmor %vm2627, %vm2628
  %v2630 = vsel %vm2629, %v2621, %v2626
  %v2631 = vrsqrt.pop %v2000
  %v2632 = vmul.f32 %v2631, %v2000
  %v2633 = vmul.f32 %v2632, %v2631
  %v2634 = vmul.f32 0.5, %v2633
  %v2635 = vsub.f32 1.5, %v2634
  %v2636 = vmul.f32 %v2631, %v2635
  %vm2637 = vweird.f32 %v2000
  %vm2638 = vweird.f32 %v2631
  %vm2639 = vmor %vm2637, %vm2638
  %v2640 = vsel %vm2639, %v2631, %v2636
  %v2641 = vmul.f32 %v1553, %v2010
  %v2642 = vmul.f32 %v1554, %v2020
  %v2643 = vmul.f32 %v1555, %v2030
  %v2644 = vmul.f32 %v1556, %v2040
  %v2645 = vmul.f32 %v1557, %v2050
  %v2646 = vmul.f32 %v1558, %v2060
  %v2647 = vmul.f32 %v1559, %v2070
  %v2648 = vmul.f32 %v1560, %v2080
  %v2649 = vmul.f32 %v1561, %v2090
  %v2650 = vmul.f32 %v1562, %v2100
  %v2651 = vmul.f32 %v1563, %v2110
  %v2652 = vmul.f32 %v1564, %v2120
  %v2653 = vmul.f32 %v1565, %v2130
  %v2654 = vmul.f32 %v1566, %v2140
  %v2655 = vmul.f32 %v1567, %v2150
  %v2656 = vmul.f32 %v1568, %v2160
  %v2657 = vmul.f32 %v1569, %v2170
  %v2658 = vmul.f32 %v1570, %v2180
  %v2659 = vmul.f32 %v1571, %v2190
  %v2660 = vmul.f32 %v1572, %v2200
  %v2661 = vmul.f32 %v1573, %v2210
  %v2662 = vmul.f32 %v1574, %v2220
  %v2663 = vmul.f32 %v1575, %v2230
  %v2664 = vmul.f32 %v1576, %v2240
  %v2665 = vmul.f32 %v1577, %v2250
  %v2666 = vmul.f32 %v1578, %v2260
  %v2667 = vmul.f32 %v1579, %v2270
  %v2668 = vmul.f32 %v1580, %v2280
  %v2669 = vmul.f32 %v1581, %v2290
  %v2670 = vmul.f32 %v1582, %v2300
  %v2671 = vmul.f32 %v1583, %v2310
  %v2672 = vmul.f32 %v1584, %v2320
  %v2673 = vmul.f32 %v1585, %v2330
  %v2674 = vmul.f32 %v1586, %v2340
  %v2675 = vmul.f32 %v1587, %v2350
  %v2676 = vmul.f32 %v1588, %v2360
  %v2677 = vmul.f32 %v1589, %v2370
  %v2678 = vmul.f32 %v1590, %v2380
  %v2679 = vmul.f32 %v1591, %v2390
  %v2680 = vmul.f32 %v1592, %v2400
  %v2681 = vmul.f32 %v1593, %v2410
  %v2682 = vmul.f32 %v1594, %v2420
  %v2683 = vmul.f32 %v1595, %v2430
  %v2684 = vmul.f32 %v1596, %v2440
  %v2685 = vmul.f32 %v1597, %v2450
  %v2686 = vmul.f32 %v1598, %v2460
  %v2687 = vmul.f32 %v1599, %v2470
  %v2688 = vmul.f32 %v1600, %v2480
  %v2689 = vmul.f32 %v1601, %v2490
  %v2690 = vmul.f32 %v1602, %v2500
  %v2691 = vmul.f32 %v1603, %v2510
  %v2692 = vmul.f32 %v1604, %v2520
  %v2693 = vmul.f32 %v1605, %v2530
  %v2694 = vmul.f32 %v1606, %v2540
  %v2695 = vmul.f32 %v1607, %v2550
  %v2696 = vmul.f32 %v1608, %v2560
  %v2697 = vmul.f32 %v1609, %v2570
  %v2698 = vmul.f32 %v1610, %v2580
  %v2699 = vmul.f32 %v1611, %v2590
  %v2700 = vmul.f32 %v1612, %v2600
  %v2701 = vmul.f32 %v1613, %v2610
  %v2702 = vmul.f32 %v1614, %v2620
  %v2703 = vmul.f32 %v1615, %v2630
  %v2704 = vmul.f32 %v1616, %v2640
  %2706 = vset.pattern.permute.xlu0 0
  %2707 = vperm.xlu0 %2706, %v230
  %v2708 = vpop.permute.xlu0 %2707
  %2711 = vset.pattern.permute.xlu0 0
  %2712 = vperm.xlu0 %2711, %v231
  %v2713 = vpop.permute.xlu0 %2712
  %2716 = vset.pattern.permute.xlu0 0
  %2717 = vperm.xlu0 %2716, %v232
  %v2718 = vpop.permute.xlu0 %2717
  %2721 = vset.pattern.permute.xlu0 0
  %2722 = vperm.xlu0 %2721, %v233
  %v2723 = vpop.permute.xlu0 %2722
  %2726 = vset.pattern.permute.xlu0 0
  %2727 = vperm.xlu0 %2726, %v234
  %v2728 = vpop.permute.xlu0 %2727
  %2731 = vset.pattern.permute.xlu0 0
  %2732 = vperm.xlu0 %2731, %v235
  %v2733 = vpop.permute.xlu0 %2732
  %2736 = vset.pattern.permute.xlu0 0
  %2737 = vperm.xlu0 %2736, %v236
  %v2738 = vpop.permute.xlu0 %2737
  %2741 = vset.pattern.permute.xlu0 0
  %2742 = vperm.xlu0 %2741, %v237
  %v2743 = vpop.permute.xlu0 %2742
  %2746 = vset.pattern.permute.xlu0 0
  %2747 = vperm.xlu0 %2746, %v238
  %v2748 = vpop.permute.xlu0 %2747
  %2751 = vset.pattern.permute.xlu0 0
  %2752 = vperm.xlu0 %2751, %v239
  %v2753 = vpop.permute.xlu0 %2752
  %2756 = vset.pattern.permute.xlu0 0
  %2757 = vperm.xlu0 %2756, %v240
  %v2758 = vpop.permute.xlu0 %2757
  %2761 = vset.pattern.permute.xlu0 0
  %2762 = vperm.xlu0 %2761, %v241
  %v2763 = vpop.permute.xlu0 %2762
  %2766 = vset.pattern.permute.xlu0 0
  %2767 = vperm.xlu0 %2766, %v242
  %v2768 = vpop.permute.xlu0 %2767
  %2771 = vset.pattern.permute.xlu0 0
  %2772 = vperm.xlu0 %2771, %v243
  %v2773 = vpop.permute.xlu0 %2772
  %2776 = vset.pattern.permute.xlu0 0
  %2777 = vperm.xlu0 %2776, %v244
  %v2778 = vpop.permute.xlu0 %2777
  %2781 = vset.pattern.permute.xlu0 0
  %2782 = vperm.xlu0 %2781, %v245
  %v2783 = vpop.permute.xlu0 %2782
  %2786 = vset.pattern.permute.xlu0 0
  %2787 = vperm.xlu0 %2786, %v246
  %v2788 = vpop.permute.xlu0 %2787
  %2791 = vset.pattern.permute.xlu0 0
  %2792 = vperm.xlu0 %2791, %v247
  %v2793 = vpop.permute.xlu0 %2792
  %2796 = vset.pattern.permute.xlu0 0
  %2797 = vperm.xlu0 %2796, %v248
  %v2798 = vpop.permute.xlu0 %2797
  %2801 = vset.pattern.permute.xlu0 0
  %2802 = vperm.xlu0 %2801, %v249
  %v2803 = vpop.permute.xlu0 %2802
  %2806 = vset.pattern.permute.xlu0 0
  %2807 = vperm.xlu0 %2806, %v250
  %v2808 = vpop.permute.xlu0 %2807
  %2811 = vset.pattern.permute.xlu0 0
  %2812 = vperm.xlu0 %2811, %v251
  %v2813 = vpop.permute.xlu0 %2812
  %2816 = vset.pattern.permute.xlu0 0
  %2817 = vperm.xlu0 %2816, %v252
  %v2818 = vpop.permute.xlu0 %2817
  %2821 = vset.pattern.permute.xlu0 0
  %2822 = vperm.xlu0 %2821, %v253
  %v2823 = vpop.permute.xlu0 %2822
  %2826 = vset.pattern.permute.xlu0 0
  %2827 = vperm.xlu0 %2826, %v254
  %v2828 = vpop.permute.xlu0 %2827
  %2831 = vset.pattern.permute.xlu0 0
  %2832 = vperm.xlu0 %2831, %v255
  %v2833 = vpop.permute.xlu0 %2832
  %2836 = vset.pattern.permute.xlu0 0
  %2837 = vperm.xlu0 %2836, %v256
  %v2838 = vpop.permute.xlu0 %2837
  %2841 = vset.pattern.permute.xlu0 0
  %2842 = vperm.xlu0 %2841, %v257
  %v2843 = vpop.permute.xlu0 %2842
  %2846 = vset.pattern.permute.xlu0 0
  %2847 = vperm.xlu0 %2846, %v258
  %v2848 = vpop.permute.xlu0 %2847
  %2851 = vset.pattern.permute.xlu0 0
  %2852 = vperm.xlu0 %2851, %v259
  %v2853 = vpop.permute.xlu0 %2852
  %2856 = vset.pattern.permute.xlu0 0
  %2857 = vperm.xlu0 %2856, %v260
  %v2858 = vpop.permute.xlu0 %2857
  %2861 = vset.pattern.permute.xlu0 0
  %2862 = vperm.xlu0 %2861, %v261
  %v2863 = vpop.permute.xlu0 %2862
  %2866 = vset.pattern.permute.xlu0 0
  %2867 = vperm.xlu0 %2866, %v262
  %v2868 = vpop.permute.xlu0 %2867
  %2871 = vset.pattern.permute.xlu0 0
  %2872 = vperm.xlu0 %2871, %v263
  %v2873 = vpop.permute.xlu0 %2872
  %2876 = vset.pattern.permute.xlu0 0
  %2877 = vperm.xlu0 %2876, %v264
  %v2878 = vpop.permute.xlu0 %2877
  %2881 = vset.pattern.permute.xlu0 0
  %2882 = vperm.xlu0 %2881, %v265
  %v2883 = vpop.permute.xlu0 %2882
  %2886 = vset.pattern.permute.xlu0 0
  %2887 = vperm.xlu0 %2886, %v266
  %v2888 = vpop.permute.xlu0 %2887
  %2891 = vset.pattern.permute.xlu0 0
  %2892 = vperm.xlu0 %2891, %v267
  %v2893 = vpop.permute.xlu0 %2892
  %2896 = vset.pattern.permute.xlu0 0
  %2897 = vperm.xlu0 %2896, %v268
  %v2898 = vpop.permute.xlu0 %2897
  %2901 = vset.pattern.permute.xlu0 0
  %2902 = vperm.xlu0 %2901, %v269
  %v2903 = vpop.permute.xlu0 %2902
  %2906 = vset.pattern.permute.xlu0 0
  %2907 = vperm.xlu0 %2906, %v270
  %v2908 = vpop.permute.xlu0 %2907
  %2911 = vset.pattern.permute.xlu0 0
  %2912 = vperm.xlu0 %2911, %v271
  %v2913 = vpop.permute.xlu0 %2912
  %2916 = vset.pattern.permute.xlu0 0
  %2917 = vperm.xlu0 %2916, %v272
  %v2918 = vpop.permute.xlu0 %2917
  %2921 = vset.pattern.permute.xlu0 0
  %2922 = vperm.xlu0 %2921, %v273
  %v2923 = vpop.permute.xlu0 %2922
  %2926 = vset.pattern.permute.xlu0 0
  %2927 = vperm.xlu0 %2926, %v274
  %v2928 = vpop.permute.xlu0 %2927
  %2931 = vset.pattern.permute.xlu0 0
  %2932 = vperm.xlu0 %2931, %v275
  %v2933 = vpop.permute.xlu0 %2932
  %2936 = vset.pattern.permute.xlu0 0
  %2937 = vperm.xlu0 %2936, %v276
  %v2938 = vpop.permute.xlu0 %2937
  %2941 = vset.pattern.permute.xlu0 0
  %2942 = vperm.xlu0 %2941, %v277
  %v2943 = vpop.permute.xlu0 %2942
  %2946 = vset.pattern.permute.xlu0 0
  %2947 = vperm.xlu0 %2946, %v278
  %v2948 = vpop.permute.xlu0 %2947
  %2951 = vset.pattern.permute.xlu0 0
  %2952 = vperm.xlu0 %2951, %v279
  %v2953 = vpop.permute.xlu0 %2952
  %2956 = vset.pattern.permute.xlu0 0
  %2957 = vperm.xlu0 %2956, %v280
  %v2958 = vpop.permute.xlu0 %2957
  %2961 = vset.pattern.permute.xlu0 0
  %2962 = vperm.xlu0 %2961, %v281
  %v2963 = vpop.permute.xlu0 %2962
  %2966 = vset.pattern.permute.xlu0 0
  %2967 = vperm.xlu0 %2966, %v282
  %v2968 = vpop.permute.xlu0 %2967
  %2971 = vset.pattern.permute.xlu0 0
  %2972 = vperm.xlu0 %2971, %v283
  %v2973 = vpop.permute.xlu0 %2972
  %2976 = vset.pattern.permute.xlu0 0
  %2977 = vperm.xlu0 %2976, %v284
  %v2978 = vpop.permute.xlu0 %2977
  %2981 = vset.pattern.permute.xlu0 0
  %2982 = vperm.xlu0 %2981, %v285
  %v2983 = vpop.permute.xlu0 %2982
  %2986 = vset.pattern.permute.xlu0 0
  %2987 = vperm.xlu0 %2986, %v286
  %v2988 = vpop.permute.xlu0 %2987
  %2991 = vset.pattern.permute.xlu0 0
  %2992 = vperm.xlu0 %2991, %v287
  %v2993 = vpop.permute.xlu0 %2992
  %2996 = vset.pattern.permute.xlu0 0
  %2997 = vperm.xlu0 %2996, %v288
  %v2998 = vpop.permute.xlu0 %2997
  %3001 = vset.pattern.permute.xlu0 0
  %3002 = vperm.xlu0 %3001, %v289
  %v3003 = vpop.permute.xlu0 %3002
  %3006 = vset.pattern.permute.xlu0 0
  %3007 = vperm.xlu0 %3006, %v290
  %v3008 = vpop.permute.xlu0 %3007
  %3011 = vset.pattern.permute.xlu0 0
  %3012 = vperm.xlu0 %3011, %v291
  %v3013 = vpop.permute.xlu0 %3012
  %3016 = vset.pattern.permute.xlu0 0
  %3017 = vperm.xlu0 %3016, %v292
  %v3018 = vpop.permute.xlu0 %3017
  %3021 = vset.pattern.permute.xlu0 0
  %3022 = vperm.xlu0 %3021, %v293
  %v3023 = vpop.permute.xlu0 %3022
  %v3025 = vmul.f32 %v2641, %v2708
  %v3026 = vmul.f32 %v2642, %v2713
  %v3027 = vmul.f32 %v2643, %v2718
  %v3028 = vmul.f32 %v2644, %v2723
  %v3029 = vmul.f32 %v2645, %v2728
  %v3030 = vmul.f32 %v2646, %v2733
  %v3031 = vmul.f32 %v2647, %v2738
  %v3032 = vmul.f32 %v2648, %v2743
  %v3033 = vmul.f32 %v2649, %v2748
  %v3034 = vmul.f32 %v2650, %v2753
  %v3035 = vmul.f32 %v2651, %v2758
  %v3036 = vmul.f32 %v2652, %v2763
  %v3037 = vmul.f32 %v2653, %v2768
  %v3038 = vmul.f32 %v2654, %v2773
  %v3039 = vmul.f32 %v2655, %v2778
  %v3040 = vmul.f32 %v2656, %v2783
  %v3041 = vmul.f32 %v2657, %v2788
  %v3042 = vmul.f32 %v2658, %v2793
  %v3043 = vmul.f32 %v2659, %v2798
  %v3044 = vmul.f32 %v2660, %v2803
  %v3045 = vmul.f32 %v2661, %v2808
  %v3046 = vmul.f32 %v2662, %v2813
  %v3047 = vmul.f32 %v2663, %v2818
  %v3048 = vmul.f32 %v2664, %v2823
  %v3049 = vmul.f32 %v2665, %v2828
  %v3050 = vmul.f32 %v2666, %v2833
  %v3051 = vmul.f32 %v2667, %v2838
  %v3052 = vmul.f32 %v2668, %v2843
  %v3053 = vmul.f32 %v2669, %v2848
  %v3054 = vmul.f32 %v2670, %v2853
  %v3055 = vmul.f32 %v2671, %v2858
  %v3056 = vmul.f32 %v2672, %v2863
  %v3057 = vmul.f32 %v2673, %v2868
  %v3058 = vmul.f32 %v2674, %v2873
  %v3059 = vmul.f32 %v2675, %v2878
  %v3060 = vmul.f32 %v2676, %v2883
  %v3061 = vmul.f32 %v2677, %v2888
  %v3062 = vmul.f32 %v2678, %v2893
  %v3063 = vmul.f32 %v2679, %v2898
  %v3064 = vmul.f32 %v2680, %v2903
  %v3065 = vmul.f32 %v2681, %v2908
  %v3066 = vmul.f32 %v2682, %v2913
  %v3067 = vmul.f32 %v2683, %v2918
  %v3068 = vmul.f32 %v2684, %v2923
  %v3069 = vmul.f32 %v2685, %v2928
  %v3070 = vmul.f32 %v2686, %v2933
  %v3071 = vmul.f32 %v2687, %v2938
  %v3072 = vmul.f32 %v2688, %v2943
  %v3073 = vmul.f32 %v2689, %v2948
  %v3074 = vmul.f32 %v2690, %v2953
  %v3075 = vmul.f32 %v2691, %v2958
  %v3076 = vmul.f32 %v2692, %v2963
  %v3077 = vmul.f32 %v2693, %v2968
  %v3078 = vmul.f32 %v2694, %v2973
  %v3079 = vmul.f32 %v2695, %v2978
  %v3080 = vmul.f32 %v2696, %v2983
  %v3081 = vmul.f32 %v2697, %v2988
  %v3082 = vmul.f32 %v2698, %v2993
  %v3083 = vmul.f32 %v2699, %v2998
  %v3084 = vmul.f32 %v2700, %v3003
  %v3085 = vmul.f32 %v2701, %v3008
  %v3086 = vmul.f32 %v2702, %v3013
  %v3087 = vmul.f32 %v2703, %v3018
  %v3088 = vmul.f32 %v2704, %v3023
  %3090 = vset.pattern.permute.xlu0 0
  %3091 = vperm.xlu0 %3090, %v294
  %v3092 = vpop.permute.xlu0 %3091
  %3095 = vset.pattern.permute.xlu0 0
  %3096 = vperm.xlu0 %3095, %v295
  %v3097 = vpop.permute.xlu0 %3096
  %3100 = vset.pattern.permute.xlu0 0
  %3101 = vperm.xlu0 %3100, %v296
  %v3102 = vpop.permute.xlu0 %3101
  %3105 = vset.pattern.permute.xlu0 0
  %3106 = vperm.xlu0 %3105, %v297
  %v3107 = vpop.permute.xlu0 %3106
  %3110 = vset.pattern.permute.xlu0 0
  %3111 = vperm.xlu0 %3110, %v298
  %v3112 = vpop.permute.xlu0 %3111
  %3115 = vset.pattern.permute.xlu0 0
  %3116 = vperm.xlu0 %3115, %v299
  %v3117 = vpop.permute.xlu0 %3116
  %3120 = vset.pattern.permute.xlu0 0
  %3121 = vperm.xlu0 %3120, %v300
  %v3122 = vpop.permute.xlu0 %3121
  %3125 = vset.pattern.permute.xlu0 0
  %3126 = vperm.xlu0 %3125, %v301
  %v3127 = vpop.permute.xlu0 %3126
  %3130 = vset.pattern.permute.xlu0 0
  %3131 = vperm.xlu0 %3130, %v302
  %v3132 = vpop.permute.xlu0 %3131
  %3135 = vset.pattern.permute.xlu0 0
  %3136 = vperm.xlu0 %3135, %v303
  %v3137 = vpop.permute.xlu0 %3136
  %3140 = vset.pattern.permute.xlu0 0
  %3141 = vperm.xlu0 %3140, %v304
  %v3142 = vpop.permute.xlu0 %3141
  %3145 = vset.pattern.permute.xlu0 0
  %3146 = vperm.xlu0 %3145, %v305
  %v3147 = vpop.permute.xlu0 %3146
  %3150 = vset.pattern.permute.xlu0 0
  %3151 = vperm.xlu0 %3150, %v306
  %v3152 = vpop.permute.xlu0 %3151
  %3155 = vset.pattern.permute.xlu0 0
  %3156 = vperm.xlu0 %3155, %v307
  %v3157 = vpop.permute.xlu0 %3156
  %3160 = vset.pattern.permute.xlu0 0
  %3161 = vperm.xlu0 %3160, %v308
  %v3162 = vpop.permute.xlu0 %3161
  %3165 = vset.pattern.permute.xlu0 0
  %3166 = vperm.xlu0 %3165, %v309
  %v3167 = vpop.permute.xlu0 %3166
  %3170 = vset.pattern.permute.xlu0 0
  %3171 = vperm.xlu0 %3170, %v310
  %v3172 = vpop.permute.xlu0 %3171
  %3175 = vset.pattern.permute.xlu0 0
  %3176 = vperm.xlu0 %3175, %v311
  %v3177 = vpop.permute.xlu0 %3176
  %3180 = vset.pattern.permute.xlu0 0
  %3181 = vperm.xlu0 %3180, %v312
  %v3182 = vpop.permute.xlu0 %3181
  %3185 = vset.pattern.permute.xlu0 0
  %3186 = vperm.xlu0 %3185, %v313
  %v3187 = vpop.permute.xlu0 %3186
  %3190 = vset.pattern.permute.xlu0 0
  %3191 = vperm.xlu0 %3190, %v314
  %v3192 = vpop.permute.xlu0 %3191
  %3195 = vset.pattern.permute.xlu0 0
  %3196 = vperm.xlu0 %3195, %v315
  %v3197 = vpop.permute.xlu0 %3196
  %3200 = vset.pattern.permute.xlu0 0
  %3201 = vperm.xlu0 %3200, %v316
  %v3202 = vpop.permute.xlu0 %3201
  %3205 = vset.pattern.permute.xlu0 0
  %3206 = vperm.xlu0 %3205, %v317
  %v3207 = vpop.permute.xlu0 %3206
  %3210 = vset.pattern.permute.xlu0 0
  %3211 = vperm.xlu0 %3210, %v318
  %v3212 = vpop.permute.xlu0 %3211
  %3215 = vset.pattern.permute.xlu0 0
  %3216 = vperm.xlu0 %3215, %v319
  %v3217 = vpop.permute.xlu0 %3216
  %3220 = vset.pattern.permute.xlu0 0
  %3221 = vperm.xlu0 %3220, %v320
  %v3222 = vpop.permute.xlu0 %3221
  %3225 = vset.pattern.permute.xlu0 0
  %3226 = vperm.xlu0 %3225, %v321
  %v3227 = vpop.permute.xlu0 %3226
  %3230 = vset.pattern.permute.xlu0 0
  %3231 = vperm.xlu0 %3230, %v322
  %v3232 = vpop.permute.xlu0 %3231
  %3235 = vset.pattern.permute.xlu0 0
  %3236 = vperm.xlu0 %3235, %v323
  %v3237 = vpop.permute.xlu0 %3236
  %3240 = vset.pattern.permute.xlu0 0
  %3241 = vperm.xlu0 %3240, %v324
  %v3242 = vpop.permute.xlu0 %3241
  %3245 = vset.pattern.permute.xlu0 0
  %3246 = vperm.xlu0 %3245, %v325
  %v3247 = vpop.permute.xlu0 %3246
  %3250 = vset.pattern.permute.xlu0 0
  %3251 = vperm.xlu0 %3250, %v326
  %v3252 = vpop.permute.xlu0 %3251
  %3255 = vset.pattern.permute.xlu0 0
  %3256 = vperm.xlu0 %3255, %v327
  %v3257 = vpop.permute.xlu0 %3256
  %3260 = vset.pattern.permute.xlu0 0
  %3261 = vperm.xlu0 %3260, %v328
  %v3262 = vpop.permute.xlu0 %3261
  %3265 = vset.pattern.permute.xlu0 0
  %3266 = vperm.xlu0 %3265, %v329
  %v3267 = vpop.permute.xlu0 %3266
  %3270 = vset.pattern.permute.xlu0 0
  %3271 = vperm.xlu0 %3270, %v330
  %v3272 = vpop.permute.xlu0 %3271
  %3275 = vset.pattern.permute.xlu0 0
  %3276 = vperm.xlu0 %3275, %v331
  %v3277 = vpop.permute.xlu0 %3276
  %3280 = vset.pattern.permute.xlu0 0
  %3281 = vperm.xlu0 %3280, %v332
  %v3282 = vpop.permute.xlu0 %3281
  %3285 = vset.pattern.permute.xlu0 0
  %3286 = vperm.xlu0 %3285, %v333
  %v3287 = vpop.permute.xlu0 %3286
  %3290 = vset.pattern.permute.xlu0 0
  %3291 = vperm.xlu0 %3290, %v334
  %v3292 = vpop.permute.xlu0 %3291
  %3295 = vset.pattern.permute.xlu0 0
  %3296 = vperm.xlu0 %3295, %v335
  %v3297 = vpop.permute.xlu0 %3296
  %3300 = vset.pattern.permute.xlu0 0
  %3301 = vperm.xlu0 %3300, %v336
  %v3302 = vpop.permute.xlu0 %3301
  %3305 = vset.pattern.permute.xlu0 0
  %3306 = vperm.xlu0 %3305, %v337
  %v3307 = vpop.permute.xlu0 %3306
  %3310 = vset.pattern.permute.xlu0 0
  %3311 = vperm.xlu0 %3310, %v338
  %v3312 = vpop.permute.xlu0 %3311
  %3315 = vset.pattern.permute.xlu0 0
  %3316 = vperm.xlu0 %3315, %v339
  %v3317 = vpop.permute.xlu0 %3316
  %3320 = vset.pattern.permute.xlu0 0
  %3321 = vperm.xlu0 %3320, %v340
  %v3322 = vpop.permute.xlu0 %3321
  %3325 = vset.pattern.permute.xlu0 0
  %3326 = vperm.xlu0 %3325, %v341
  %v3327 = vpop.permute.xlu0 %3326
  %3330 = vset.pattern.permute.xlu0 0
  %3331 = vperm.xlu0 %3330, %v342
  %v3332 = vpop.permute.xlu0 %3331
  %3335 = vset.pattern.permute.xlu0 0
  %3336 = vperm.xlu0 %3335, %v343
  %v3337 = vpop.permute.xlu0 %3336
  %3340 = vset.pattern.permute.xlu0 0
  %3341 = vperm.xlu0 %3340, %v344
  %v3342 = vpop.permute.xlu0 %3341
  %3345 = vset.pattern.permute.xlu0 0
  %3346 = vperm.xlu0 %3345, %v345
  %v3347 = vpop.permute.xlu0 %3346
  %3350 = vset.pattern.permute.xlu0 0
  %3351 = vperm.xlu0 %3350, %v346
  %v3352 = vpop.permute.xlu0 %3351
  %3355 = vset.pattern.permute.xlu0 0
  %3356 = vperm.xlu0 %3355, %v347
  %v3357 = vpop.permute.xlu0 %3356
  %3360 = vset.pattern.permute.xlu0 0
  %3361 = vperm.xlu0 %3360, %v348
  %v3362 = vpop.permute.xlu0 %3361
  %3365 = vset.pattern.permute.xlu0 0
  %3366 = vperm.xlu0 %3365, %v349
  %v3367 = vpop.permute.xlu0 %3366
  %3370 = vset.pattern.permute.xlu0 0
  %3371 = vperm.xlu0 %3370, %v350
  %v3372 = vpop.permute.xlu0 %3371
  %3375 = vset.pattern.permute.xlu0 0
  %3376 = vperm.xlu0 %3375, %v351
  %v3377 = vpop.permute.xlu0 %3376
  %3380 = vset.pattern.permute.xlu0 0
  %3381 = vperm.xlu0 %3380, %v352
  %v3382 = vpop.permute.xlu0 %3381
  %3385 = vset.pattern.permute.xlu0 0
  %3386 = vperm.xlu0 %3385, %v353
  %v3387 = vpop.permute.xlu0 %3386
  %3390 = vset.pattern.permute.xlu0 0
  %3391 = vperm.xlu0 %3390, %v354
  %v3392 = vpop.permute.xlu0 %3391
  %3395 = vset.pattern.permute.xlu0 0
  %3396 = vperm.xlu0 %3395, %v355
  %v3397 = vpop.permute.xlu0 %3396
  %3400 = vset.pattern.permute.xlu0 0
  %3401 = vperm.xlu0 %3400, %v356
  %v3402 = vpop.permute.xlu0 %3401
  %3405 = vset.pattern.permute.xlu0 0
  %3406 = vperm.xlu0 %3405, %v357
  %v3407 = vpop.permute.xlu0 %3406
  %v3409 = vadd.f32 %v3025, %v3092
  %v3410 = vadd.f32 %v3026, %v3097
  %v3411 = vadd.f32 %v3027, %v3102
  %v3412 = vadd.f32 %v3028, %v3107
  %v3413 = vadd.f32 %v3029, %v3112
  %v3414 = vadd.f32 %v3030, %v3117
  %v3415 = vadd.f32 %v3031, %v3122
  %v3416 = vadd.f32 %v3032, %v3127
  %v3417 = vadd.f32 %v3033, %v3132
  %v3418 = vadd.f32 %v3034, %v3137
  %v3419 = vadd.f32 %v3035, %v3142
  %v3420 = vadd.f32 %v3036, %v3147
  %v3421 = vadd.f32 %v3037, %v3152
  %v3422 = vadd.f32 %v3038, %v3157
  %v3423 = vadd.f32 %v3039, %v3162
  %v3424 = vadd.f32 %v3040, %v3167
  %v3425 = vadd.f32 %v3041, %v3172
  %v3426 = vadd.f32 %v3042, %v3177
  %v3427 = vadd.f32 %v3043, %v3182
  %v3428 = vadd.f32 %v3044, %v3187
  %v3429 = vadd.f32 %v3045, %v3192
  %v3430 = vadd.f32 %v3046, %v3197
  %v3431 = vadd.f32 %v3047, %v3202
  %v3432 = vadd.f32 %v3048, %v3207
  %v3433 = vadd.f32 %v3049, %v3212
  %v3434 = vadd.f32 %v3050, %v3217
  %v3435 = vadd.f32 %v3051, %v3222
  %v3436 = vadd.f32 %v3052, %v3227
  %v3437 = vadd.f32 %v3053, %v3232
  %v3438 = vadd.f32 %v3054, %v3237
  %v3439 = vadd.f32 %v3055, %v3242
  %v3440 = vadd.f32 %v3056, %v3247
  %v3441 = vadd.f32 %v3057, %v3252
  %v3442 = vadd.f32 %v3058, %v3257
  %v3443 = vadd.f32 %v3059, %v3262
  %v3444 = vadd.f32 %v3060, %v3267
  %v3445 = vadd.f32 %v3061, %v3272
  %v3446 = vadd.f32 %v3062, %v3277
  %v3447 = vadd.f32 %v3063, %v3282
  %v3448 = vadd.f32 %v3064, %v3287
  %v3449 = vadd.f32 %v3065, %v3292
  %v3450 = vadd.f32 %v3066, %v3297
  %v3451 = vadd.f32 %v3067, %v3302
  %v3452 = vadd.f32 %v3068, %v3307
  %v3453 = vadd.f32 %v3069, %v3312
  %v3454 = vadd.f32 %v3070, %v3317
  %v3455 = vadd.f32 %v3071, %v3322
  %v3456 = vadd.f32 %v3072, %v3327
  %v3457 = vadd.f32 %v3073, %v3332
  %v3458 = vadd.f32 %v3074, %v3337
  %v3459 = vadd.f32 %v3075, %v3342
  %v3460 = vadd.f32 %v3076, %v3347
  %v3461 = vadd.f32 %v3077, %v3352
  %v3462 = vadd.f32 %v3078, %v3357
  %v3463 = vadd.f32 %v3079, %v3362
  %v3464 = vadd.f32 %v3080, %v3367
  %v3465 = vadd.f32 %v3081, %v3372
  %v3466 = vadd.f32 %v3082, %v3377
  %v3467 = vadd.f32 %v3083, %v3382
  %v3468 = vadd.f32 %v3084, %v3387
  %v3469 = vadd.f32 %v3085, %v3392
  %v3470 = vadd.f32 %v3086, %v3397
  %v3471 = vadd.f32 %v3087, %v3402
  %v3472 = vadd.f32 %v3088, %v3407
  %vm3473 = vcmp.gt.f32.partialorder %v3409, 0.0
  %vm3474 = vcmp.gt.f32.partialorder %v3410, 0.0
  %vm3475 = vcmp.gt.f32.partialorder %v3411, 0.0
  %vm3476 = vcmp.gt.f32.partialorder %v3412, 0.0
  %vm3477 = vcmp.gt.f32.partialorder %v3413, 0.0
  %vm3478 = vcmp.gt.f32.partialorder %v3414, 0.0
  %vm3479 = vcmp.gt.f32.partialorder %v3415, 0.0
  %vm3480 = vcmp.gt.f32.partialorder %v3416, 0.0
  %vm3481 = vcmp.gt.f32.partialorder %v3417, 0.0
  %vm3482 = vcmp.gt.f32.partialorder %v3418, 0.0
  %vm3483 = vcmp.gt.f32.partialorder %v3419, 0.0
  %vm3484 = vcmp.gt.f32.partialorder %v3420, 0.0
  %vm3485 = vcmp.gt.f32.partialorder %v3421, 0.0
  %vm3486 = vcmp.gt.f32.partialorder %v3422, 0.0
  %vm3487 = vcmp.gt.f32.partialorder %v3423, 0.0
  %vm3488 = vcmp.gt.f32.partialorder %v3424, 0.0
  %vm3489 = vcmp.gt.f32.partialorder %v3425, 0.0
  %vm3490 = vcmp.gt.f32.partialorder %v3426, 0.0
  %vm3491 = vcmp.gt.f32.partialorder %v3427, 0.0
  %vm3492 = vcmp.gt.f32.partialorder %v3428, 0.0
  %vm3493 = vcmp.gt.f32.partialorder %v3429, 0.0
  %vm3494 = vcmp.gt.f32.partialorder %v3430, 0.0
  %vm3495 = vcmp.gt.f32.partialorder %v3431, 0.0
  %vm3496 = vcmp.gt.f32.partialorder %v3432, 0.0
  %vm3497 = vcmp.gt.f32.partialorder %v3433, 0.0
  %vm3498 = vcmp.gt.f32.partialorder %v3434, 0.0
  %vm3499 = vcmp.gt.f32.partialorder %v3435, 0.0
  %vm3500 = vcmp.gt.f32.partialorder %v3436, 0.0
  %vm3501 = vcmp.gt.f32.partialorder %v3437, 0.0
  %vm3502 = vcmp.gt.f32.partialorder %v3438, 0.0
  %vm3503 = vcmp.gt.f32.partialorder %v3439, 0.0
  %vm3504 = vcmp.gt.f32.partialorder %v3440, 0.0
  %vm3505 = vcmp.gt.f32.partialorder %v3441, 0.0
  %vm3506 = vcmp.gt.f32.partialorder %v3442, 0.0
  %vm3507 = vcmp.gt.f32.partialorder %v3443, 0.0
  %vm3508 = vcmp.gt.f32.partialorder %v3444, 0.0
  %vm3509 = vcmp.gt.f32.partialorder %v3445, 0.0
  %vm3510 = vcmp.gt.f32.partialorder %v3446, 0.0
  %vm3511 = vcmp.gt.f32.partialorder %v3447, 0.0
  %vm3512 = vcmp.gt.f32.partialorder %v3448, 0.0
  %vm3513 = vcmp.gt.f32.partialorder %v3449, 0.0
  %vm3514 = vcmp.gt.f32.partialorder %v3450, 0.0
  %vm3515 = vcmp.gt.f32.partialorder %v3451, 0.0
  %vm3516 = vcmp.gt.f32.partialorder %v3452, 0.0
  %vm3517 = vcmp.gt.f32.partialorder %v3453, 0.0
  %vm3518 = vcmp.gt.f32.partialorder %v3454, 0.0
  %vm3519 = vcmp.gt.f32.partialorder %v3455, 0.0
  %vm3520 = vcmp.gt.f32.partialorder %v3456, 0.0
  %vm3521 = vcmp.gt.f32.partialorder %v3457, 0.0
  %vm3522 = vcmp.gt.f32.partialorder %v3458, 0.0
  %vm3523 = vcmp.gt.f32.partialorder %v3459, 0.0
  %vm3524 = vcmp.gt.f32.partialorder %v3460, 0.0
  %vm3525 = vcmp.gt.f32.partialorder %v3461, 0.0
  %vm3526 = vcmp.gt.f32.partialorder %v3462, 0.0
  %vm3527 = vcmp.gt.f32.partialorder %v3463, 0.0
  %vm3528 = vcmp.gt.f32.partialorder %v3464, 0.0
  %vm3529 = vcmp.gt.f32.partialorder %v3465, 0.0
  %vm3530 = vcmp.gt.f32.partialorder %v3466, 0.0
  %vm3531 = vcmp.gt.f32.partialorder %v3467, 0.0
  %vm3532 = vcmp.gt.f32.partialorder %v3468, 0.0
  %vm3533 = vcmp.gt.f32.partialorder %v3469, 0.0
  %vm3534 = vcmp.gt.f32.partialorder %v3470, 0.0
  %vm3535 = vcmp.gt.f32.partialorder %v3471, 0.0
  %vm3536 = vcmp.gt.f32.partialorder %v3472, 0.0
  %v3537 = vmul.f32 %v3409, 0.2
  %v3538 = vmul.f32 %v3410, 0.2
  %v3539 = vmul.f32 %v3411, 0.2
  %v3540 = vmul.f32 %v3412, 0.2
  %v3541 = vmul.f32 %v3413, 0.2
  %v3542 = vmul.f32 %v3414, 0.2
  %v3543 = vmul.f32 %v3415, 0.2
  %v3544 = vmul.f32 %v3416, 0.2
  %v3545 = vmul.f32 %v3417, 0.2
  %v3546 = vmul.f32 %v3418, 0.2
  %v3547 = vmul.f32 %v3419, 0.2
  %v3548 = vmul.f32 %v3420, 0.2
  %v3549 = vmul.f32 %v3421, 0.2
  %v3550 = vmul.f32 %v3422, 0.2
  %v3551 = vmul.f32 %v3423, 0.2
  %v3552 = vmul.f32 %v3424, 0.2
  %v3553 = vmul.f32 %v3425, 0.2
  %v3554 = vmul.f32 %v3426, 0.2
  %v3555 = vmul.f32 %v3427, 0.2
  %v3556 = vmul.f32 %v3428, 0.2
  %v3557 = vmul.f32 %v3429, 0.2
  %v3558 = vmul.f32 %v3430, 0.2
  %v3559 = vmul.f32 %v3431, 0.2
  %v3560 = vmul.f32 %v3432, 0.2
  %v3561 = vmul.f32 %v3433, 0.2
  %v3562 = vmul.f32 %v3434, 0.2
  %v3563 = vmul.f32 %v3435, 0.2
  %v3564 = vmul.f32 %v3436, 0.2
  %v3565 = vmul.f32 %v3437, 0.2
  %v3566 = vmul.f32 %v3438, 0.2
  %v3567 = vmul.f32 %v3439, 0.2
  %v3568 = vmul.f32 %v3440, 0.2
  %v3569 = vmul.f32 %v3441, 0.2
  %v3570 = vmul.f32 %v3442, 0.2
  %v3571 = vmul.f32 %v3443, 0.2
  %v3572 = vmul.f32 %v3444, 0.2
  %v3573 = vmul.f32 %v3445, 0.2
  %v3574 = vmul.f32 %v3446, 0.2
  %v3575 = vmul.f32 %v3447, 0.2
  %v3576 = vmul.f32 %v3448, 0.2
  %v3577 = vmul.f32 %v3449, 0.2
  %v3578 = vmul.f32 %v3450, 0.2
  %v3579 = vmul.f32 %v3451, 0.2
  %v3580 = vmul.f32 %v3452, 0.2
  %v3581 = vmul.f32 %v3453, 0.2
  %v3582 = vmul.f32 %v3454, 0.2
  %v3583 = vmul.f32 %v3455, 0.2
  %v3584 = vmul.f32 %v3456, 0.2
  %v3585 = vmul.f32 %v3457, 0.2
  %v3586 = vmul.f32 %v3458, 0.2
  %v3587 = vmul.f32 %v3459, 0.2
  %v3588 = vmul.f32 %v3460, 0.2
  %v3589 = vmul.f32 %v3461, 0.2
  %v3590 = vmul.f32 %v3462, 0.2
  %v3591 = vmul.f32 %v3463, 0.2
  %v3592 = vmul.f32 %v3464, 0.2
  %v3593 = vmul.f32 %v3465, 0.2
  %v3594 = vmul.f32 %v3466, 0.2
  %v3595 = vmul.f32 %v3467, 0.2
  %v3596 = vmul.f32 %v3468, 0.2
  %v3597 = vmul.f32 %v3469, 0.2
  %v3598 = vmul.f32 %v3470, 0.2
  %v3599 = vmul.f32 %v3471, 0.2
  %v3600 = vmul.f32 %v3472, 0.2
  %v3601 = vsel %vm3473, %v3409, %v3537
  %v3602 = vsel %vm3474, %v3410, %v3538
  %v3603 = vsel %vm3475, %v3411, %v3539
  %v3604 = vsel %vm3476, %v3412, %v3540
  %v3605 = vsel %vm3477, %v3413, %v3541
  %v3606 = vsel %vm3478, %v3414, %v3542
  %v3607 = vsel %vm3479, %v3415, %v3543
  %v3608 = vsel %vm3480, %v3416, %v3544
  %v3609 = vsel %vm3481, %v3417, %v3545
  %v3610 = vsel %vm3482, %v3418, %v3546
  %v3611 = vsel %vm3483, %v3419, %v3547
  %v3612 = vsel %vm3484, %v3420, %v3548
  %v3613 = vsel %vm3485, %v3421, %v3549
  %v3614 = vsel %vm3486, %v3422, %v3550
  %v3615 = vsel %vm3487, %v3423, %v3551
  %v3616 = vsel %vm3488, %v3424, %v3552
  %v3617 = vsel %vm3489, %v3425, %v3553
  %v3618 = vsel %vm3490, %v3426, %v3554
  %v3619 = vsel %vm3491, %v3427, %v3555
  %v3620 = vsel %vm3492, %v3428, %v3556
  %v3621 = vsel %vm3493, %v3429, %v3557
  %v3622 = vsel %vm3494, %v3430, %v3558
  %v3623 = vsel %vm3495, %v3431, %v3559
  %v3624 = vsel %vm3496, %v3432, %v3560
  %v3625 = vsel %vm3497, %v3433, %v3561
  %v3626 = vsel %vm3498, %v3434, %v3562
  %v3627 = vsel %vm3499, %v3435, %v3563
  %v3628 = vsel %vm3500, %v3436, %v3564
  %v3629 = vsel %vm3501, %v3437, %v3565
  %v3630 = vsel %vm3502, %v3438, %v3566
  %v3631 = vsel %vm3503, %v3439, %v3567
  %v3632 = vsel %vm3504, %v3440, %v3568
  %v3633 = vsel %vm3505, %v3441, %v3569
  %v3634 = vsel %vm3506, %v3442, %v3570
  %v3635 = vsel %vm3507, %v3443, %v3571
  %v3636 = vsel %vm3508, %v3444, %v3572
  %v3637 = vsel %vm3509, %v3445, %v3573
  %v3638 = vsel %vm3510, %v3446, %v3574
  %v3639 = vsel %vm3511, %v3447, %v3575
  %v3640 = vsel %vm3512, %v3448, %v3576
  %v3641 = vsel %vm3513, %v3449, %v3577
  %v3642 = vsel %vm3514, %v3450, %v3578
  %v3643 = vsel %vm3515, %v3451, %v3579
  %v3644 = vsel %vm3516, %v3452, %v3580
  %v3645 = vsel %vm3517, %v3453, %v3581
  %v3646 = vsel %vm3518, %v3454, %v3582
  %v3647 = vsel %vm3519, %v3455, %v3583
  %v3648 = vsel %vm3520, %v3456, %v3584
  %v3649 = vsel %vm3521, %v3457, %v3585
  %v3650 = vsel %vm3522, %v3458, %v3586
  %v3651 = vsel %vm3523, %v3459, %v3587
  %v3652 = vsel %vm3524, %v3460, %v3588
  %v3653 = vsel %vm3525, %v3461, %v3589
  %v3654 = vsel %vm3526, %v3462, %v3590
  %v3655 = vsel %vm3527, %v3463, %v3591
  %v3656 = vsel %vm3528, %v3464, %v3592
  %v3657 = vsel %vm3529, %v3465, %v3593
  %v3658 = vsel %vm3530, %v3466, %v3594
  %v3659 = vsel %vm3531, %v3467, %v3595
  %v3660 = vsel %vm3532, %v3468, %v3596
  %v3661 = vsel %vm3533, %v3469, %v3597
  %v3662 = vsel %vm3534, %v3470, %v3598
  %v3663 = vsel %vm3535, %v3471, %v3599
  %v3664 = vsel %vm3536, %v3472, %v3600
  %3665 = vst.msk [vmem:[%s5] sm:$0xff] %vm1289, %v3601
  %3666 = vst.msk [vmem:[%s5 + $0x8] sm:$0xff] %vm1289, %v3602
  %3667 = vst.msk [vmem:[%s5 + $0x10] sm:$0xff] %vm1289, %v3603
  %3668 = vst.msk [vmem:[%s5 + $0x18] sm:$0xff] %vm1289, %v3604
  %3669 = vst.msk [vmem:[%s5 + $0x20] sm:$0xff] %vm1289, %v3605
  %3670 = vst.msk [vmem:[%s5 + $0x28] sm:$0xff] %vm1289, %v3606
  %3671 = vst.msk [vmem:[%s5 + $0x30] sm:$0xff] %vm1289, %v3607
  %3672 = vst.msk [vmem:[%s5 + $0x38] sm:$0xff] %vm1289, %v3608
  %3673 = vst.msk [vmem:[%s5 + $0x40] sm:$0xff] %vm1289, %v3609
  %3674 = vst.msk [vmem:[%s5 + $0x48] sm:$0xff] %vm1289, %v3610
  %3675 = vst.msk [vmem:[%s5 + $0x50] sm:$0xff] %vm1289, %v3611
  %3676 = vst.msk [vmem:[%s5 + $0x58] sm:$0xff] %vm1289, %v3612
  %3677 = vst.msk [vmem:[%s5 + $0x60] sm:$0xff] %vm1289, %v3613
  %3678 = vst.msk [vmem:[%s5 + $0x68] sm:$0xff] %vm1289, %v3614
  %3679 = vst.msk [vmem:[%s5 + $0x70] sm:$0xff] %vm1289, %v3615
  %3680 = vst.msk [vmem:[%s5 + $0x78] sm:$0xff] %vm1289, %v3616
  %3681 = vst.msk [vmem:[%s5 + $0x80] sm:$0xff] %vm1289, %v3617
  %3682 = vst.msk [vmem:[%s5 + $0x88] sm:$0xff] %vm1289, %v3618
  %3683 = vst.msk [vmem:[%s5 + $0x90] sm:$0xff] %vm1289, %v3619
  %3684 = vst.msk [vmem:[%s5 + $0x98] sm:$0xff] %vm1289, %v3620
  %3685 = vst.msk [vmem:[%s5 + $0xa0] sm:$0xff] %vm1289, %v3621
  %3686 = vst.msk [vmem:[%s5 + $0xa8] sm:$0xff] %vm1289, %v3622
  %3687 = vst.msk [vmem:[%s5 + $0xb0] sm:$0xff] %vm1289, %v3623
  %3688 = vst.msk [vmem:[%s5 + $0xb8] sm:$0xff] %vm1289, %v3624
  %3689 = vst.msk [vmem:[%s5 + $0xc0] sm:$0xff] %vm1289, %v3625
  %3690 = vst.msk [vmem:[%s5 + $0xc8] sm:$0xff] %vm1289, %v3626
  %3691 = vst.msk [vmem:[%s5 + $0xd0] sm:$0xff] %vm1289, %v3627
  %3692 = vst.msk [vmem:[%s5 + $0xd8] sm:$0xff] %vm1289, %v3628
  %3693 = vst.msk [vmem:[%s5 + $0xe0] sm:$0xff] %vm1289, %v3629
  %3694 = vst.msk [vmem:[%s5 + $0xe8] sm:$0xff] %vm1289, %v3630
  %3695 = vst.msk [vmem:[%s5 + $0xf0] sm:$0xff] %vm1289, %v3631
  %3696 = vst.msk [vmem:[%s5 + $0xf8] sm:$0xff] %vm1289, %v3632
  %3697 = vst.msk [vmem:[%s5 + $0x100] sm:$0xff] %vm1289, %v3633
  %3698 = vst.msk [vmem:[%s5 + $0x108] sm:$0xff] %vm1289, %v3634
  %3699 = vst.msk [vmem:[%s5 + $0x110] sm:$0xff] %vm1289, %v3635
  %3700 = vst.msk [vmem:[%s5 + $0x118] sm:$0xff] %vm1289, %v3636
  %3701 = vst.msk [vmem:[%s5 + $0x120] sm:$0xff] %vm1289, %v3637
  %3702 = vst.msk [vmem:[%s5 + $0x128] sm:$0xff] %vm1289, %v3638
  %3703 = vst.msk [vmem:[%s5 + $0x130] sm:$0xff] %vm1289, %v3639
  %3704 = vst.msk [vmem:[%s5 + $0x138] sm:$0xff] %vm1289, %v3640
  %3705 = vst.msk [vmem:[%s5 + $0x140] sm:$0xff] %vm1289, %v3641
  %3706 = vst.msk [vmem:[%s5 + $0x148] sm:$0xff] %vm1289, %v3642
  %3707 = vst.msk [vmem:[%s5 + $0x150] sm:$0xff] %vm1289, %v3643
  %3708 = vst.msk [vmem:[%s5 + $0x158] sm:$0xff] %vm1289, %v3644
  %3709 = vst.msk [vmem:[%s5 + $0x160] sm:$0xff] %vm1289, %v3645
  %3710 = vst.msk [vmem:[%s5 + $0x168] sm:$0xff] %vm1289, %v3646
  %3711 = vst.msk [vmem:[%s5 + $0x170] sm:$0xff] %vm1289, %v3647
  %3712 = vst.msk [vmem:[%s5 + $0x178] sm:$0xff] %vm1289, %v3648
  %3713 = vst.msk [vmem:[%s5 + $0x180] sm:$0xff] %vm1289, %v3649
  %3714 = vst.msk [vmem:[%s5 + $0x188] sm:$0xff] %vm1289, %v3650
  %3715 = vst.msk [vmem:[%s5 + $0x190] sm:$0xff] %vm1289, %v3651
  %3716 = vst.msk [vmem:[%s5 + $0x198] sm:$0xff] %vm1289, %v3652
  %3717 = vst.msk [vmem:[%s5 + $0x1a0] sm:$0xff] %vm1289, %v3653
  %3718 = vst.msk [vmem:[%s5 + $0x1a8] sm:$0xff] %vm1289, %v3654
  %3719 = vst.msk [vmem:[%s5 + $0x1b0] sm:$0xff] %vm1289, %v3655
  %3720 = vst.msk [vmem:[%s5 + $0x1b8] sm:$0xff] %vm1289, %v3656
  %3721 = vst.msk [vmem:[%s5 + $0x1c0] sm:$0xff] %vm1289, %v3657
  %3722 = vst.msk [vmem:[%s5 + $0x1c8] sm:$0xff] %vm1289, %v3658
  %3723 = vst.msk [vmem:[%s5 + $0x1d0] sm:$0xff] %vm1289, %v3659
  %3724 = vst.msk [vmem:[%s5 + $0x1d8] sm:$0xff] %vm1289, %v3660
  %3725 = vst.msk [vmem:[%s5 + $0x1e0] sm:$0xff] %vm1289, %v3661
  %3726 = vst.msk [vmem:[%s5 + $0x1e8] sm:$0xff] %vm1289, %v3662
  %3727 = vst.msk [vmem:[%s5 + $0x1f0] sm:$0xff] %vm1289, %v3663
  %3728 = vst.msk [vmem:[%s5 + $0x1f8] sm:$0xff] %vm1289, %v3664
  // Predicated region
  $region22: #{generator_forward.12} parent=0 // pred_check
    _
  $region23: #{generator_forward.12} parent=0 // pred_check_branch
    %3730 = sbr.rel (0) target = $region25
  $region24: #{generator_forward.12} parent=0 // pred_region
    _
  $region25: #{generator_forward.12} parent=0 // pred_fallthru
    _
  // Predicated region
  $region26: #{generator_forward.12} parent=0 // pred_check
    _
  $region27: #{generator_forward.12} parent=0 // pred_check_branch
    %3732 = sbr.rel (0) target = $region29
  $region28: #{generator_forward.12} parent=0 // pred_region
    _
  $region29: #{generator_forward.12} parent=0 // pred_fallthru
    _

// kernel: generator_forward.15
$region0: #{generator_forward.15}
  #allocation0 [shape = 'u32[]', space=smem, size = 0x4, offset = 0x4, fixed_abs, tag = 'smem constant byte address 0x4 - core index']
  #allocation1 [shape = 'u32[72,128]{1,0:T(1,128)}', space=vmem, size = 0x9000, scoped, tag = 'internal scratch']
  %s0 = inlined_call_operand.vmem [shape: f32[8,256], index: 0, kind: input, shape index: {}]
  %s1 = inlined_call_operand.vmem [shape: f32[256,32], index: 1, kind: input, shape index: {}]
  %s2 = inlined_call_operand.vmem [shape: f32[8,1], index: 2, kind: input, shape index: {}]
  %s3 = inlined_call_operand.vmem [shape: f32[8,1], index: 3, kind: input, shape index: {}]
  %s4 = inlined_call_operand.vmem [shape: f32[8,1], index: 4, kind: input, shape index: {}]
  %s5 = inlined_call_operand.vmem [shape: f32[8,32], index: 5, kind: output, shape index: {}]
  %s6 = sld [smem:[#allocation0]]
  $region30: #{generator_forward.15} parent=0
    _
  %s8 = ssub.s32 1, %s6
  %s9 = scalar_select 0, %s8, %s6
  // Predicated region
  $region2: #{generator_forward.15} parent=0 // pred_check
    _
  $region3: #{generator_forward.15} parent=0 // pred_check_branch
    %11 = sbr.rel (0) target = $region5
  $region4: #{generator_forward.15} parent=0 // pred_region
    _
  $region5: #{generator_forward.15} parent=0 // pred_fallthru
    _
  // Predicated region
  $region6: #{generator_forward.15} parent=0 // pred_check
    _
  $region7: #{generator_forward.15} parent=0 // pred_check_branch
    %13 = sbr.rel (0) target = $region9
  $region8: #{generator_forward.15} parent=0 // pred_region
    _
  $region9: #{generator_forward.15} parent=0 // pred_fallthru
    _
  // Predicated region
  $region10: #{generator_forward.15} parent=0 // pred_check
    _
  $region11: #{generator_forward.15} parent=0 // pred_check_branch
    %15 = sbr.rel (0) target = $region13
  $region12: #{generator_forward.15} parent=0 // pred_region
    _
  $region13: #{generator_forward.15} parent=0 // pred_fallthru
    _
  // Predicated region
  $region14: #{generator_forward.15} parent=0 // pred_check
    _
  $region15: #{generator_forward.15} parent=0 // pred_check_branch
    %17 = sbr.rel (0) target = $region17
  $region16: #{generator_forward.15} parent=0 // pred_region
    _
  $region17: #{generator_forward.15} parent=0 // pred_fallthru
    _
  // Predicated region
  $region18: #{generator_forward.15} parent=0 // pred_check
    _
  $region19: #{generator_forward.15} parent=0 // pred_check_branch
    %19 = sbr.rel (0) target = $region21
  $region20: #{generator_forward.15} parent=0 // pred_region
    _
  $region21: #{generator_forward.15} parent=0 // pred_fallthru
    _
  %v20 = vld [vmem:[%s0] sm:$0xff]
  %v21 = vld [vmem:[%s0 + $0x8] sm:$0xff]
  %v22 = vld [vmem:[%s1] sm:$0xff]
  %v23 = vld [vmem:[%s1 + $0x8] sm:$0xff]
  %v24 = vld [vmem:[%s1 + $0x10] sm:$0xff]
  %v25 = vld [vmem:[%s1 + $0x18] sm:$0xff]
  %v26 = vld [vmem:[%s1 + $0x20] sm:$0xff]
  %v27 = vld [vmem:[%s1 + $0x28] sm:$0xff]
  %v28 = vld [vmem:[%s1 + $0x30] sm:$0xff]
  %v29 = vld [vmem:[%s1 + $0x38] sm:$0xff]
  %v30 = vld [vmem:[%s1 + $0x40] sm:$0xff]
  %v31 = vld [vmem:[%s1 + $0x48] sm:$0xff]
  %v32 = vld [vmem:[%s1 + $0x50] sm:$0xff]
  %v33 = vld [vmem:[%s1 + $0x58] sm:$0xff]
  %v34 = vld [vmem:[%s1 + $0x60] sm:$0xff]
  %v35 = vld [vmem:[%s1 + $0x68] sm:$0xff]
  %v36 = vld [vmem:[%s1 + $0x70] sm:$0xff]
  %v37 = vld [vmem:[%s1 + $0x78] sm:$0xff]
  %v38 = vld [vmem:[%s1 + $0x80] sm:$0xff]
  %v39 = vld [vmem:[%s1 + $0x88] sm:$0xff]
  %v40 = vld [vmem:[%s1 + $0x90] sm:$0xff]
  %v41 = vld [vmem:[%s1 + $0x98] sm:$0xff]
  %v42 = vld [vmem:[%s1 + $0xa0] sm:$0xff]
  %v43 = vld [vmem:[%s1 + $0xa8] sm:$0xff]
  %v44 = vld [vmem:[%s1 + $0xb0] sm:$0xff]
  %v45 = vld [vmem:[%s1 + $0xb8] sm:$0xff]
  %v46 = vld [vmem:[%s1 + $0xc0] sm:$0xff]
  %v47 = vld [vmem:[%s1 + $0xc8] sm:$0xff]
  %v48 = vld [vmem:[%s1 + $0xd0] sm:$0xff]
  %v49 = vld [vmem:[%s1 + $0xd8] sm:$0xff]
  %v50 = vld [vmem:[%s1 + $0xe0] sm:$0xff]
  %v51 = vld [vmem:[%s1 + $0xe8] sm:$0xff]
  %v52 = vld [vmem:[%s1 + $0xf0] sm:$0xff]
  %v53 = vld [vmem:[%s1 + $0xf8] sm:$0xff]
  %v54 = vld [vmem:[%s2] sm:$0xff]
  %v55 = vld [vmem:[%s3] sm:$0xff]
  %v56 = vld [vmem:[%s4] sm:$0xff]
  %58 = vset.pattern.permute.xlu0 0
  %59 = vperm.xlu0 %58, %v54
  %v60 = vpop.permute.xlu0 %59
  %62 = vmatpush.msra.mxu0 %v37
  %63 = vmatpush.msra.mxu0 %v36
  %64 = vmatpush.msra.mxu0 %v35
  %65 = vmatpush.msra.mxu0 %v34
  %66 = vmatpush.msra.mxu0 %v33
  %67 = vmatpush.msra.mxu0 %v32
  %68 = vmatpush.msra.mxu0 %v31
  %69 = vmatpush.msra.mxu0 %v30
  %70 = vmatpush.msra.mxu0 %v29
  %71 = vmatpush.msra.mxu0 %v28
  %72 = vmatpush.msra.mxu0 %v27
  %73 = vmatpush.msra.mxu0 %v26
  %74 = vmatpush.msra.mxu0 %v25
  %75 = vmatpush.msra.mxu0 %v24
  %76 = vmatpush.msra.mxu0 %v23
  %77 = vmatpush.msra.mxu0 %v22
  %78 = vmatmul.f32.gmra.mxu0 %v20
  %v79 = vpop.f32.mrf.mxu0
  %v80 = vadd.f32 %v60, %v79
  %81 = vdwg.mxu0
  %82 = vmatpush.msra.mxu0 %v53
  %83 = vmatpush.msra.mxu0 %v52
  %84 = vmatpush.msra.mxu0 %v51
  %85 = vmatpush.msra.mxu0 %v50
  %86 = vmatpush.msra.mxu0 %v49
  %87 = vmatpush.msra.mxu0 %v48
  %88 = vmatpush.msra.mxu0 %v47
  %89 = vmatpush.msra.mxu0 %v46
  %90 = vmatpush.msra.mxu0 %v45
  %91 = vmatpush.msra.mxu0 %v44
  %92 = vmatpush.msra.mxu0 %v43
  %93 = vmatpush.msra.mxu0 %v42
  %94 = vmatpush.msra.mxu0 %v41
  %95 = vmatpush.msra.mxu0 %v40
  %96 = vmatpush.msra.mxu0 %v39
  %97 = vmatpush.msra.mxu0 %v38
  %98 = vmatmul.f32.gmra.mxu0 %v21
  %v99 = vpop.f32.mrf.mxu0
  %v100 = vadd.f32 %v80, %v99
  %101 = vdwg.mxu0
  %vm102 = vcmask 261120
  %v103 = vsel %vm102, %v100, 0.0
  %104 = vadd.xlane.f32.xlu0 %v103
  %v105 = vpop.xlane.xlu0 %104
  %v106 = vrcp.pop 32.0
  %v107 = vmul.f32 32.0, %v106
  %v108 = vsub.f32 1.0, %v107
  %v109 = vmul.f32 %v106, %v108
  %v110 = vadd.f32 %v106, %v109
  %vm111 = vweird.f32 %v106
  %v112 = vsel %vm111, %v106, %v110
  %v113 = vmul.f32 %v105, %v112
  %v114 = vsub.f32 %v100, %v113
  %v115 = vmul.f32 %v114, %v114
  %v116 = vsel %vm102, %v115, 0.0
  %117 = vadd.xlane.f32.xlu0 %v116
  %v118 = vpop.xlane.xlu0 %117
  %v119 = vmul.f32 %v118, %v112
  %v120 = vadd.f32 %v119, 1e-05
  %v121 = vrsqrt.pop %v120
  %v122 = vmul.f32 %v121, %v120
  %v123 = vmul.f32 %v122, %v121
  %v124 = vmul.f32 0.5, %v123
  %v125 = vsub.f32 1.5, %v124
  %v126 = vmul.f32 %v121, %v125
  %vm127 = vweird.f32 %v120
  %vm128 = vweird.f32 %v121
  %vm129 = vmor %vm127, %vm128
  %v130 = vsel %vm129, %v121, %v126
  %v131 = vmul.f32 %v114, %v130
  %133 = vset.pattern.permute.xlu0 0
  %134 = vperm.xlu0 %133, %v55
  %v135 = vpop.permute.xlu0 %134
  %v137 = vmul.f32 %v131, %v135
  %139 = vset.pattern.permute.xlu0 0
  %140 = vperm.xlu0 %139, %v56
  %v141 = vpop.permute.xlu0 %140
  %v143 = vadd.f32 %v137, %v141
  %vm144 = vcmp.gt.f32.partialorder %v143, 0.0
  %v145 = vmul.f32 %v143, 0.2
  %v146 = vsel %vm144, %v143, %v145
  %147 = vst.msk [vmem:[%s5] sm:$0xff] %vm102, %v146
  // Predicated region
  $region22: #{generator_forward.15} parent=0 // pred_check
    _
  $region23: #{generator_forward.15} parent=0 // pred_check_branch
    %149 = sbr.rel (0) target = $region25
  $region24: #{generator_forward.15} parent=0 // pred_region
    _
  $region25: #{generator_forward.15} parent=0 // pred_fallthru
    _
  // Predicated region
  $region26: #{generator_forward.15} parent=0 // pred_check
    _
  $region27: #{generator_forward.15} parent=0 // pred_check_branch
    %151 = sbr.rel (0) target = $region29
  $region28: #{generator_forward.15} parent=0 // pred_region
    _
  $region29: #{generator_forward.15} parent=0 // pred_fallthru
    _

// kernel: generator_forward.16
$region0: #{generator_forward.16}
  #allocation0 [shape = 'u32[]', space=smem, size = 0x4, offset = 0x4, fixed_abs, tag = 'smem constant byte address 0x4 - core index']
  #allocation1 [shape = 'u32[72,128]{1,0:T(1,128)}', space=vmem, size = 0x9000, scoped, tag = 'internal scratch']
  %s0 = inlined_call_operand.vmem [shape: f32[4,128], index: 0, kind: input, shape index: {}]
  %s1 = inlined_call_operand.vmem [shape: f32[128,128], index: 1, kind: input, shape index: {}]
  %s2 = inlined_call_operand.vmem [shape: f32[4,1], index: 2, kind: input, shape index: {}]
  %s3 = inlined_call_operand.vmem [shape: f32[4,1], index: 3, kind: input, shape index: {}]
  %s4 = inlined_call_operand.vmem [shape: f32[4,1], index: 4, kind: input, shape index: {}]
  %s5 = inlined_call_operand.vmem [shape: f32[4,128], index: 5, kind: output, shape index: {}]
  %s6 = sld [smem:[#allocation0]]
  $region30: #{generator_forward.16} parent=0
    _
  %s8 = ssub.s32 1, %s6
  %s9 = scalar_select 0, %s8, %s6
  // Predicated region
  $region2: #{generator_forward.16} parent=0 // pred_check
    _
  $region3: #{generator_forward.16} parent=0 // pred_check_branch
    %11 = sbr.rel (0) target = $region5
  $region4: #{generator_forward.16} parent=0 // pred_region
    _
  $region5: #{generator_forward.16} parent=0 // pred_fallthru
    _
  // Predicated region
  $region6: #{generator_forward.16} parent=0 // pred_check
    _
  $region7: #{generator_forward.16} parent=0 // pred_check_branch
    %13 = sbr.rel (0) target = $region9
  $region8: #{generator_forward.16} parent=0 // pred_region
    _
  $region9: #{generator_forward.16} parent=0 // pred_fallthru
    _
  // Predicated region
  $region10: #{generator_forward.16} parent=0 // pred_check
    _
  $region11: #{generator_forward.16} parent=0 // pred_check_branch
    %15 = sbr.rel (0) target = $region13
  $region12: #{generator_forward.16} parent=0 // pred_region
    _
  $region13: #{generator_forward.16} parent=0 // pred_fallthru
    _
  // Predicated region
  $region14: #{generator_forward.16} parent=0 // pred_check
    _
  $region15: #{generator_forward.16} parent=0 // pred_check_branch
    %17 = sbr.rel (0) target = $region17
  $region16: #{generator_forward.16} parent=0 // pred_region
    _
  $region17: #{generator_forward.16} parent=0 // pred_fallthru
    _
  // Predicated region
  $region18: #{generator_forward.16} parent=0 // pred_check
    _
  $region19: #{generator_forward.16} parent=0 // pred_check_branch
    %19 = sbr.rel (0) target = $region21
  $region20: #{generator_forward.16} parent=0 // pred_region
    _
  $region21: #{generator_forward.16} parent=0 // pred_fallthru
    _
  %v20 = vld [vmem:[%s0] sm:$0xf]
  %v21 = vld [vmem:[%s1] sm:$0xff]
  %v22 = vld [vmem:[%s1 + $0x8] sm:$0xff]
  %v23 = vld [vmem:[%s1 + $0x10] sm:$0xff]
  %v24 = vld [vmem:[%s1 + $0x18] sm:$0xff]
  %v25 = vld [vmem:[%s1 + $0x20] sm:$0xff]
  %v26 = vld [vmem:[%s1 + $0x28] sm:$0xff]
  %v27 = vld [vmem:[%s1 + $0x30] sm:$0xff]
  %v28 = vld [vmem:[%s1 + $0x38] sm:$0xff]
  %v29 = vld [vmem:[%s1 + $0x40] sm:$0xff]
  %v30 = vld [vmem:[%s1 + $0x48] sm:$0xff]
  %v31 = vld [vmem:[%s1 + $0x50] sm:$0xff]
  %v32 = vld [vmem:[%s1 + $0x58] sm:$0xff]
  %v33 = vld [vmem:[%s1 + $0x60] sm:$0xff]
  %v34 = vld [vmem:[%s1 + $0x68] sm:$0xff]
  %v35 = vld [vmem:[%s1 + $0x70] sm:$0xff]
  %v36 = vld [vmem:[%s1 + $0x78] sm:$0xff]
  %v37 = vld [vmem:[%s2] sm:$0xf]
  %v38 = vld [vmem:[%s3] sm:$0xf]
  %v39 = vld [vmem:[%s4] sm:$0xf]
  %41 = vset.pattern.permute.xlu0 0
  %42 = vperm.xlu0 %41, %v37
  %v43 = vpop.permute.xlu0 %42
  %45 = vmatpush.msra.mxu0 %v36
  %46 = vmatpush.msra.mxu0 %v35
  %47 = vmatpush.msra.mxu0 %v34
  %48 = vmatpush.msra.mxu0 %v33
  %49 = vmatpush.msra.mxu0 %v32
  %50 = vmatpush.msra.mxu0 %v31
  %51 = vmatpush.msra.mxu0 %v30
  %52 = vmatpush.msra.mxu0 %v29
  %53 = vmatpush.msra.mxu0 %v28
  %54 = vmatpush.msra.mxu0 %v27
  %55 = vmatpush.msra.mxu0 %v26
  %56 = vmatpush.msra.mxu0 %v25
  %57 = vmatpush.msra.mxu0 %v24
  %58 = vmatpush.msra.mxu0 %v23
  %59 = vmatpush.msra.mxu0 %v22
  %60 = vmatpush.msra.mxu0 %v21
  %61 = vmatmul.f32.gmra.mxu0 %v20
  %v62 = vpop.f32.mrf.mxu0
  %v63 = vadd.f32 %v43, %v62
  %64 = vdwg.mxu0
  %vm65 = vcmask 1043456
  %v66 = vsel %vm65, %v63, 0.0
  %67 = vadd.xlane.f32.xlu0 %v66
  %v68 = vpop.xlane.xlu0 %67
  %v69 = vrcp.pop 128.0
  %v70 = vmul.f32 128.0, %v69
  %v71 = vsub.f32 1.0, %v70
  %v72 = vmul.f32 %v69, %v71
  %v73 = vadd.f32 %v69, %v72
  %vm74 = vweird.f32 %v69
  %v75 = vsel %vm74, %v69, %v73
  %v76 = vmul.f32 %v68, %v75
  %v77 = vsub.f32 %v63, %v76
  %v78 = vmul.f32 %v77, %v77
  %v79 = vsel %vm65, %v78, 0.0
  %80 = vadd.xlane.f32.xlu0 %v79
  %v81 = vpop.xlane.xlu0 %80
  %v82 = vmul.f32 %v81, %v75
  %v83 = vadd.f32 %v82, 1e-05
  %v84 = vrsqrt.pop %v83
  %v85 = vmul.f32 %v84, %v83
  %v86 = vmul.f32 %v85, %v84
  %v87 = vmul.f32 0.5, %v86
  %v88 = vsub.f32 1.5, %v87
  %v89 = vmul.f32 %v84, %v88
  %vm90 = vweird.f32 %v83
  %vm91 = vweird.f32 %v84
  %vm92 = vmor %vm90, %vm91
  %v93 = vsel %vm92, %v84, %v89
  %v94 = vmul.f32 %v77, %v93
  %96 = vset.pattern.permute.xlu0 0
  %97 = vperm.xlu0 %96, %v38
  %v98 = vpop.permute.xlu0 %97
  %v100 = vmul.f32 %v94, %v98
  %102 = vset.pattern.permute.xlu0 0
  %103 = vperm.xlu0 %102, %v39
  %v104 = vpop.permute.xlu0 %103
  %v106 = vadd.f32 %v100, %v104
  %vm107 = vcmp.gt.f32.partialorder %v106, 0.0
  %v108 = vmul.f32 %v106, 0.2
  %v109 = vsel %vm107, %v106, %v108
  %110 = vst [vmem:[%s5] sm:$0xf] %v109
  // Predicated region
  $region22: #{generator_forward.16} parent=0 // pred_check
    _
  $region23: #{generator_forward.16} parent=0 // pred_check_branch
    %112 = sbr.rel (0) target = $region25
  $region24: #{generator_forward.16} parent=0 // pred_region
    _
  $region25: #{generator_forward.16} parent=0 // pred_fallthru
    _
  // Predicated region
  $region26: #{generator_forward.16} parent=0 // pred_check
    _
  $region27: #{generator_forward.16} parent=0 // pred_check_branch
    %114 = sbr.rel (0) target = $region29
  $region28: #{generator_forward.16} parent=0 // pred_region
    _
  $region29: #{generator_forward.16} parent=0 // pred_fallthru
    _

// kernel: generator_forward.17
$region0: #{generator_forward.17}
  #allocation0 [shape = 'u32[]', space=smem, size = 0x4, offset = 0x4, fixed_abs, tag = 'smem constant byte address 0x4 - core index']
  #allocation1 [shape = 'u32[72,128]{1,0:T(1,128)}', space=vmem, size = 0x9000, scoped, tag = 'internal scratch']
  #allocation2 [shape = 'f32[1,1]{1,0:T(1,128)S(1)}', space=vmem, size = 0x200, scoped, tag = 'scoped memory for generator_forward.17']
  %s0 = inlined_call_operand.vmem [shape: f32[1,64], index: 0, kind: input, shape index: {}]
  %s1 = inlined_call_operand.vmem [shape: f32[64,512], index: 1, kind: input, shape index: {}]
  %s2 = inlined_call_operand.<no memory space> [shape: f32[1,1], index: 2, kind: input, shape index: {}]
  %s3 = inlined_call_operand.vmem [shape: f32[1,512], index: 3, kind: output, shape index: {}]
  %s4 = sld [smem:[#allocation0]]
  $region22: #{generator_forward.17} parent=0
    _
  %s6 = ssub.s32 1, %s4
  %s7 = scalar_select 0, %s6, %s4
  %v8 = vstv %s2
  %9 = vst [vmem:[#allocation2] sm:$0x1] %v8
  // Predicated region
  $region2: #{generator_forward.17} parent=0 // pred_check
    _
  $region3: #{generator_forward.17} parent=0 // pred_check_branch
    %11 = sbr.rel (0) target = $region5
  $region4: #{generator_forward.17} parent=0 // pred_region
    _
  $region5: #{generator_forward.17} parent=0 // pred_fallthru
    _
  // Predicated region
  $region6: #{generator_forward.17} parent=0 // pred_check
    _
  $region7: #{generator_forward.17} parent=0 // pred_check_branch
    %13 = sbr.rel (0) target = $region9
  $region8: #{generator_forward.17} parent=0 // pred_region
    _
  $region9: #{generator_forward.17} parent=0 // pred_fallthru
    _
  // Predicated region
  $region10: #{generator_forward.17} parent=0 // pred_check
    _
  $region11: #{generator_forward.17} parent=0 // pred_check_branch
    %15 = sbr.rel (0) target = $region13
  $region12: #{generator_forward.17} parent=0 // pred_region
    _
  $region13: #{generator_forward.17} parent=0 // pred_fallthru
    _
  %v16 = vld [vmem:[%s0] sm:$0x1]
  %v17 = vld [vmem:[%s1] sm:$0xff]
  %v18 = vld [vmem:[%s1 + $0x8] sm:$0xff]
  %v19 = vld [vmem:[%s1 + $0x10] sm:$0xff]
  %v20 = vld [vmem:[%s1 + $0x18] sm:$0xff]
  %v21 = vld [vmem:[%s1 + $0x20] sm:$0xff]
  %v22 = vld [vmem:[%s1 + $0x28] sm:$0xff]
  %v23 = vld [vmem:[%s1 + $0x30] sm:$0xff]
  %v24 = vld [vmem:[%s1 + $0x38] sm:$0xff]
  %v25 = vld [vmem:[%s1 + $0x40] sm:$0xff]
  %v26 = vld [vmem:[%s1 + $0x48] sm:$0xff]
  %v27 = vld [vmem:[%s1 + $0x50] sm:$0xff]
  %v28 = vld [vmem:[%s1 + $0x58] sm:$0xff]
  %v29 = vld [vmem:[%s1 + $0x60] sm:$0xff]
  %v30 = vld [vmem:[%s1 + $0x68] sm:$0xff]
  %v31 = vld [vmem:[%s1 + $0x70] sm:$0xff]
  %v32 = vld [vmem:[%s1 + $0x78] sm:$0xff]
  %v33 = vld [vmem:[%s1 + $0x80] sm:$0xff]
  %v34 = vld [vmem:[%s1 + $0x88] sm:$0xff]
  %v35 = vld [vmem:[%s1 + $0x90] sm:$0xff]
  %v36 = vld [vmem:[%s1 + $0x98] sm:$0xff]
  %v37 = vld [vmem:[%s1 + $0xa0] sm:$0xff]
  %v38 = vld [vmem:[%s1 + $0xa8] sm:$0xff]
  %v39 = vld [vmem:[%s1 + $0xb0] sm:$0xff]
  %v40 = vld [vmem:[%s1 + $0xb8] sm:$0xff]
  %v41 = vld [vmem:[%s1 + $0xc0] sm:$0xff]
  %v42 = vld [vmem:[%s1 + $0xc8] sm:$0xff]
  %v43 = vld [vmem:[%s1 + $0xd0] sm:$0xff]
  %v44 = vld [vmem:[%s1 + $0xd8] sm:$0xff]
  %v45 = vld [vmem:[%s1 + $0xe0] sm:$0xff]
  %v46 = vld [vmem:[%s1 + $0xe8] sm:$0xff]
  %v47 = vld [vmem:[%s1 + $0xf0] sm:$0xff]
  %v48 = vld [vmem:[%s1 + $0xf8] sm:$0xff]
  %v49 = vld [vmem:[#allocation2] sm:$0x1]
  %51 = vset.pattern.permute.xlu0 0
  %52 = vperm.xlu0 %51, %v49
  %v53 = vpop.permute.xlu0 %52
  %v55 = vperm.slane %v53, 0
  %vm56 = vcmask 523264
  %v58 = vsel %vm56, %v16, 0
  %60 = vmatpush.msra.mxu0 0.0
  %61 = vmatpush.msra.mxu0 0.0
  %62 = vmatpush.msra.mxu0 0.0
  %63 = vmatpush.msra.mxu0 0.0
  %64 = vmatpush.msra.mxu0 0.0
  %65 = vmatpush.msra.mxu0 0.0
  %66 = vmatpush.msra.mxu0 0.0
  %67 = vmatpush.msra.mxu0 0.0
  %68 = vmatpush.msra.mxu0 %v45
  %69 = vmatpush.msra.mxu0 %v41
  %70 = vmatpush.msra.mxu0 %v37
  %71 = vmatpush.msra.mxu0 %v33
  %72 = vmatpush.msra.mxu0 %v29
  %73 = vmatpush.msra.mxu0 %v25
  %74 = vmatpush.msra.mxu0 %v21
  %75 = vmatpush.msra.mxu0 %v17
  %76 = vmatmul.f32.gmra.mxu0 %v58
  %v77 = vpop.f32.mrf.mxu0
  %v78 = vadd.f32 %v55, %v77
  %79 = vdwg.mxu0
  %80 = vmatpush.msra.mxu0 0.0
  %81 = vmatpush.msra.mxu0 0.0
  %82 = vmatpush.msra.mxu0 0.0
  %83 = vmatpush.msra.mxu0 0.0
  %84 = vmatpush.msra.mxu0 0.0
  %85 = vmatpush.msra.mxu0 0.0
  %86 = vmatpush.msra.mxu0 0.0
  %87 = vmatpush.msra.mxu0 0.0
  %88 = vmatpush.msra.mxu0 %v46
  %89 = vmatpush.msra.mxu0 %v42
  %90 = vmatpush.msra.mxu0 %v38
  %91 = vmatpush.msra.mxu0 %v34
  %92 = vmatpush.msra.mxu0 %v30
  %93 = vmatpush.msra.mxu0 %v26
  %94 = vmatpush.msra.mxu0 %v22
  %95 = vmatpush.msra.mxu0 %v18
  %96 = vmatmul.f32.gmra.mxu0 %v58
  %v97 = vpop.f32.mrf.mxu0
  %v98 = vadd.f32 %v55, %v97
  %99 = vdwg.mxu0
  %100 = vmatpush.msra.mxu0 0.0
  %101 = vmatpush.msra.mxu0 0.0
  %102 = vmatpush.msra.mxu0 0.0
  %103 = vmatpush.msra.mxu0 0.0
  %104 = vmatpush.msra.mxu0 0.0
  %105 = vmatpush.msra.mxu0 0.0
  %106 = vmatpush.msra.mxu0 0.0
  %107 = vmatpush.msra.mxu0 0.0
  %108 = vmatpush.msra.mxu0 %v47
  %109 = vmatpush.msra.mxu0 %v43
  %110 = vmatpush.msra.mxu0 %v39
  %111 = vmatpush.msra.mxu0 %v35
  %112 = vmatpush.msra.mxu0 %v31
  %113 = vmatpush.msra.mxu0 %v27
  %114 = vmatpush.msra.mxu0 %v23
  %115 = vmatpush.msra.mxu0 %v19
  %116 = vmatmul.f32.gmra.mxu0 %v58
  %v117 = vpop.f32.mrf.mxu0
  %v118 = vadd.f32 %v55, %v117
  %119 = vdwg.mxu0
  %120 = vmatpush.msra.mxu0 0.0
  %121 = vmatpush.msra.mxu0 0.0
  %122 = vmatpush.msra.mxu0 0.0
  %123 = vmatpush.msra.mxu0 0.0
  %124 = vmatpush.msra.mxu0 0.0
  %125 = vmatpush.msra.mxu0 0.0
  %126 = vmatpush.msra.mxu0 0.0
  %127 = vmatpush.msra.mxu0 0.0
  %128 = vmatpush.msra.mxu0 %v48
  %129 = vmatpush.msra.mxu0 %v44
  %130 = vmatpush.msra.mxu0 %v40
  %131 = vmatpush.msra.mxu0 %v36
  %132 = vmatpush.msra.mxu0 %v32
  %133 = vmatpush.msra.mxu0 %v28
  %134 = vmatpush.msra.mxu0 %v24
  %135 = vmatpush.msra.mxu0 %v20
  %136 = vmatmul.f32.gmra.mxu0 %v58
  %v137 = vpop.f32.mrf.mxu0
  %v138 = vadd.f32 %v55, %v137
  %139 = vdwg.mxu0
  %v140 = vtanh.pop %v78
  %v141 = vtanh.pop %v98
  %v142 = vtanh.pop %v118
  %v143 = vtanh.pop %v138
  %v148 = vrot.slane %v141, 7
  %v149 = vrot.slane %v142, 6
  %v150 = vrot.slane %v143, 5
  %vm151 = vcmask 1040384
  %v152 = vsel %vm151, %v140, %v148
  %vm153 = vcmask 1042434
  %v154 = vsel %vm153, %v149, %v150
  %vm155 = vcmask 1041408
  %v156 = vsel %vm155, %v152, %v154
  %v158 = vlaneseq
  %vm159 = vcmp.ge.s32.totalorder %v158, 0
  %vm160 = vcmp.lt.s32.totalorder %v158, 512
  %vm161 = vmand %vm159, %vm160
  %162 = vst.msk [vmem:[%s3] sm:$0xf] %vm161, %v156
  // Predicated region
  $region14: #{generator_forward.17} parent=0 // pred_check
    _
  $region15: #{generator_forward.17} parent=0 // pred_check_branch
    %164 = sbr.rel (0) target = $region17
  $region16: #{generator_forward.17} parent=0 // pred_region
    _
  $region17: #{generator_forward.17} parent=0 // pred_fallthru
    _
  // Predicated region
  $region18: #{generator_forward.17} parent=0 // pred_check
    _
  $region19: #{generator_forward.17} parent=0 // pred_check_branch
    %166 = sbr.rel (0) target = $region21
  $region20: #{generator_forward.17} parent=0 // pred_region
    _
  $region21: #{generator_forward.17} parent=0 // pred_fallthru
    _

</llo_original>
